<compile_context>
chip_gen: v5e
topology: v5e:2x2
jax: 0.10.0
libtpu: 0.0.40
codegen_flags: <defaults>
</compile_context>

<pallas_src>
import math

import jax
import jax.numpy as jnp
from jax.experimental import pallas as pl
from jax.experimental.pallas import tpu as pltpu


def _elu(x):
    return jnp.where(x > 0.0, x, jnp.exp(jnp.minimum(x, 0.0)) - 1.0)


# ------------------------------- score kernel ------------------------------- #
def make_score_kernel(n_agents, lg, n_time):
    two_pi = 2.0 * math.pi

    def kernel(ago_ref, ego_ref, ext_ref, sg_ref, ssel_ref, wts_ref,
               w1t_ref, b1_ref, w2t_ref, b2_ref, w3t_ref, b3_ref, w4t_ref, b4_ref,
               out_ref):
        f32 = jnp.float32

        # agent rows: x, y, yaw, cos(yaw), sin(yaw), vx, vy          -> [1, RP] slabs
        a_x, a_y = ago_ref[0:1, :], ago_ref[1:2, :]
        a_yaw = ago_ref[2:3, :]
        cos_a, sin_a = ago_ref[3:4, :], ago_ref[4:5, :]
        a_vx, a_vy = ago_ref[5:6, :], ago_ref[6:7, :]

        # ego rows (tiled over agents): x, y, yaw, speed, cos, sin, accel, curvature, jerk
        e_x, e_y = ego_ref[0:1, :], ego_ref[1:2, :]
        e_yaw = ego_ref[2:3, :]
        e_sp = ego_ref[3:4, :]
        cos_e, sin_e = ego_ref[4:5, :], ego_ref[5:6, :]
        e_acc = ego_ref[6:7, :]
        e_curv = ego_ref[7:8, :]
        e_jerk = ego_ref[8:9, :]

        mask = ext_ref[5:6, :]                               # agent-present mask, [1, RP]

        # ---- relative geometry (angle identities on precomputed trig) ----
        cos_r = cos_a * cos_e + sin_a * sin_e                # cos(agent_yaw - ego_yaw)
        sin_r = sin_a * cos_e - cos_a * sin_e
        dyaw = a_yaw - e_yaw
        # TODO(synk): atan2(sin,cos) wraps to (-pi, pi]; floor-wrap gives [-pi, pi)
        # (differs only exactly at the boundary).
        rel_yaw = dyaw - two_pi * jnp.floor((dyaw + math.pi) / two_pi)

        dx = a_x - e_x
        dy = a_y - e_y
        rel_px = dx * cos_r
        rel_py = dy * sin_r
        rel_vx = (a_vx - e_sp * cos_e) * cos_r
        rel_vy = (a_vy - e_sp * sin_e) * sin_r

        # ---- interaction feature encoder: two dense MXU matmuls (features-major) ----
        attr = jnp.concatenate(
            [rel_px, rel_py, rel_yaw, rel_vx, rel_vy, ext_ref[0:5, :]], axis=0) * mask   # [10, RP]
        h1 = jnp.maximum(
            jnp.dot(w1t_ref[...], attr, preferred_element_type=f32) + b1_ref[...], 0.0)  # [64, RP]
        h2 = jnp.dot(w2t_ref[...], h1, preferred_element_type=f32) + b2_ref[...]         # [256, RP]

        # max over agents: N lane-aligned slices of width LG (128-aligned -> no shuffles)
        fmax = h2[:, 0:lg]
        for n in range(1, n_agents):
            fmax = jnp.maximum(fmax, h2[:, n * lg:(n + 1) * lg])                         # [256, LG]
        # mean over time + per-candidate gather (selection matrix is zero on pad lanes)
        fpool = jnp.dot(fmax, ssel_ref[...], preferred_element_type=f32)                 # [256, G]

        # ---- interaction feature decoder ----
        d1 = _elu(jnp.dot(w3t_ref[...], fpool, preferred_element_type=f32) + b3_ref[...])  # [64, G]
        d2 = jnp.dot(w4t_ref[...], d1, preferred_element_type=f32) + b4_ref[...]           # [4, G]
        inter = 1.0 / (1.0 + jnp.exp(-d2))                                                 # sigmoid

        # ---- hardcoded ego features + collision: one fused per-candidate reduction ----
        coll_e = jnp.exp(-0.2 * (dx * dx + dy * dy)) * mask                                # [1, RP]
        q5 = jnp.concatenate(
            [e_sp, jnp.abs(e_acc), jnp.abs(e_jerk), jnp.abs(e_sp * e_sp * e_curv), coll_e],
            axis=0)                                                                        # [5, RP]
        red = jnp.dot(q5, sg_ref[...], preferred_element_type=f32)                         # [5, G] means
        f_speed = -jnp.clip(red[0:1, :], 0.0, 15.0) / 15.0
        f_acc = jnp.clip(red[1:2, :], 0.0, 4.0) / 4.0
        f_jerk = jnp.clip(red[2:3, :], 0.0, 6.0) / 6.0
        f_lat = jnp.clip(red[3:4, :], 0.0, 5.0) / 5.0
        coll = red[4:5, :] * float(n_agents * n_time)                                      # sum, not mean

        # ---- score = -(features . weights) - 10 * collision (no scalar concat epilogue) ----
        w = wts_ref[...]                                                                   # [8, G]
        s_hard = (f_speed * w[0:1, :] + f_acc * w[1:2, :] +
                  f_jerk * w[2:3, :] + f_lat * w[3:4, :])                                  # [1, G]
        s_int = jnp.sum(inter * w[4:8, :], axis=0, keepdims=True)                          # [1, G]
        out_ref[...] = -(s_hard + s_int) - 10.0 * coll

    return kernel


# --------------------------------- params ----------------------------------- #
def init_params(key):
    def dense(k, fan_in, fan_out):
        kw, kb = jax.random.split(k)
        w = jax.random.normal(kw, (fan_in, fan_out), jnp.float32) / math.sqrt(fan_in)
        b = jax.random.normal(kb, (1, fan_out), jnp.float32) * 0.01
        return w, b

    keys = jax.random.split(key, 6)
    p = {}
    p["enc_w1"], p["enc_b1"] = dense(keys[0], 10, 64)     # interaction_feature_encoder
    p["enc_w2"], p["enc_b2"] = dense(keys[1], 64, 256)
    p["dec_w1"], p["dec_b1"] = dense(keys[2], 256, 64)    # interaction_feature_decoder
    p["dec_w2"], p["dec_b2"] = dense(keys[3], 64, 4)
    p["wts_w1"], p["wts_b1"] = dense(keys[4], 256, 64)    # weights_decoder
    p["wts_w2"], p["wts_b2"] = dense(keys[5], 64, 8)
    return p


# --------------------------------- wrapper ---------------------------------- #
def score_decoder_forward(ego_traj, ego_encoding, agents_traj, agents_states,
                          timesteps, params):
    f32 = jnp.float32
    B, M = ego_traj.shape[0], ego_traj.shape[1]
    N = agents_traj.shape[2]
    T = int(timesteps)
    G = B * M
    GT = G * T
    LG = ((GT + 127) // 128) * 128        # per-agent lane block, 128-aligned
    RP = N * LG

    # ---- weights decoder: variable_cost=False -> input is all-ones -> data independent,
    #      so compute it once in plain JAX instead of a dedicated Pallas launch. ----
    ones_enc = jnp.ones((1, ego_encoding.shape[-1]), f32)
    h = ones_enc @ params["wts_w1"] + params["wts_b1"]
    h = jnp.where(h > 0.0, h, jnp.exp(jnp.minimum(h, 0.0)) - 1.0)          # ELU
    z = h @ params["wts_w2"] + params["wts_b2"]
    w_row = jnp.maximum(z, 0.0) + jnp.log1p(jnp.exp(-jnp.abs(z)))          # softplus, [1, 8]
    weights = jnp.broadcast_to(w_row, (B, 8))
    wts_t = jnp.broadcast_to(jnp.reshape(w_row, (8, 1)), (8, G)).astype(f32)

    # ---- stage inputs into the kernel lane layout: lane = n*LG + g*T + t ----
    def flatten_rows(q):                   # q: [C, G, N, T] -> [C, RP]
        c = q.shape[0]
        q = jnp.transpose(q, (0, 2, 1, 3)).reshape(c, N, GT)
        q = jnp.pad(q, ((0, 0), (0, 0), (0, LG - GT)))
        return q.reshape(c, RP)

    ego_t = ego_traj[:, :, :T, :].astype(f32).reshape(G, T, 6)
    e_x, e_y, e_yaw = ego_t[..., 0], ego_t[..., 1], ego_t[..., 2]
    e_sp, e_acc, e_curv = ego_t[..., 3], ego_t[..., 4], ego_t[..., 5]
    jerk = jnp.diff(e_acc, axis=-1) / 0.1                                  # duplicate first diff
    e_jerk = jnp.concatenate([jerk[:, :1], jerk], axis=-1)

    ag_t = agents_traj[:, :, :, :T, :].astype(f32).reshape(G, N, T, 3)
    a_x, a_y, a_yaw = ag_t[..., 0], ag_t[..., 1], ag_t[..., 2]
    a_v = jnp.diff(ag_t[..., :2], axis=2) / 0.1
    a_v = jnp.concatenate([a_v[:, :, :1, :], a_v], axis=2)                 # duplicate first diff
    a_vx, a_vy = a_v[..., 0], a_v[..., 1]

    st = agents_states.astype(f32)                                         # [B, N, 11]
    mask_bn = (jnp.sum(st, axis=-1) != 0.0).astype(f32)                    # [B, N]
    mask_gn = jnp.broadcast_to(mask_bn[:, None, :], (B, M, N)).reshape(G, N)
    sf_gn = jnp.broadcast_to(st[:, None, :, 6:11], (B, M, N, 5)).reshape(G, N, 5)

    ago = flatten_rows(jnp.stack(
        [a_x, a_y, a_yaw, jnp.cos(a_yaw), jnp.sin(a_yaw), a_vx, a_vy], axis=0))      # [7, RP]
    ego_rows = jnp.stack(
        [e_x, e_y, e_yaw, e_sp, jnp.cos(e_yaw), jnp.sin(e_yaw), e_acc, e_curv, e_jerk],
        axis=0)                                                                      # [9, G, T]
    ego = flatten_rows(jnp.broadcast_to(ego_rows[:, :, None, :], (9, G, N, T)))      # [9, RP]
    ext_rows = jnp.concatenate([jnp.moveaxis(sf_gn, -1, 0), mask_gn[None]], axis=0)  # [6, G, N]
    ext = flatten_rows(jnp.broadcast_to(ext_rows[:, :, :, None], (6, G, N, T)))      # [6, RP]

    # per-candidate reduction matrices (valid-lane selectors; zero on padding lanes)
    blk = jnp.kron(jnp.eye(G, dtype=f32), jnp.ones((T, 1), f32))           # [G*T, G]
    blk = jnp.pad(blk, ((0, LG - GT), (0, 0)))                             # [LG, G]
    sg = jnp.tile(blk, (N, 1)) / float(N * T)                              # [RP, G]  per-g mean
    ssel = blk / float(T)                                                  # [LG, G]  mean over T

    kernel = make_score_kernel(N, LG, T)

    def full(shape):
        return pl.BlockSpec(shape, lambda i: (0,) * len(shape))

    scores_flat = pl.pallas_call(
        kernel,
        out_shape=jax.ShapeDtypeStruct((1, G), f32),
        grid=(1,),
        in_specs=[
            full((7, RP)), full((9, RP)), full((6, RP)),
            full((RP, G)), full((LG, G)), full((8, G)),
            full((64, 10)), full((64, 1)), full((256, 64)), full((256, 1)),
            full((64, 256)), full((64, 1)), full((4, 64)), full((4, 1)),
        ],
        out_specs=full((1, G)),
        compiler_params=pltpu.CompilerParams(dimension_semantics=("arbitrary",)),
    )(ago, ego, ext, sg, ssel, wts_t,
      params["enc_w1"].T, params["enc_b1"].T, params["enc_w2"].T, params["enc_b2"].T,
      params["dec_w1"].T, params["dec_b1"].T, params["dec_w2"].T, params["dec_b2"].T)

    scores = scores_flat.reshape(B, M)
    ego_mask = jnp.not_equal(ego_traj.sum(-1).sum(-1), 0.0)
    scores = jnp.where(ego_mask, scores, -jnp.inf)
    return scores, weights


if __name__ == "__main__":
    B, M, N, T = 2, 3, 8, 16
    timesteps = 16
    key = jax.random.PRNGKey(0)
    k1, k2, k3, k4, kp = jax.random.split(key, 5)

    ego_traj = jax.random.normal(k1, (B, M, T, 6), jnp.float32)
    ego_encoding = jax.random.normal(k2, (B, 256), jnp.float32)
    agents_traj = jax.random.normal(k3, (B, M, N, T, 3), jnp.float32)
    agents_states = jax.random.normal(k4, (B, N, 11), jnp.float32)
    # exercise the masks: one absent agent, one empty ego candidate trajectory
    agents_states = agents_states.at[:, -1, :].set(0.0)
    ego_traj = ego_traj.at[1, 2].set(0.0)

    params = init_params(kp)
    scores, weights = score_decoder_forward(
        ego_traj, ego_encoding, agents_traj, agents_states, timesteps, params)
    jax.block_until_ready((scores, weights))
    assert scores.shape == (B, M) and weights.shape == (B, 8)
    print("KERNEL_OK")
</pallas_src>

<mosaic_0001>
module attributes {stable_mosaic.version = 11 : i64} {
  func.func @kernel(%arg0: i32, %arg1: memref<7x1024xf32, #tpu.memory_space<vmem>>, %arg2: memref<9x1024xf32, #tpu.memory_space<vmem>>, %arg3: memref<6x1024xf32, #tpu.memory_space<vmem>>, %arg4: memref<1024x6xf32, #tpu.memory_space<vmem>>, %arg5: memref<128x6xf32, #tpu.memory_space<vmem>>, %arg6: memref<8x6xf32, #tpu.memory_space<vmem>>, %arg7: memref<64x10xf32, #tpu.memory_space<vmem>>, %arg8: memref<64x1xf32, #tpu.memory_space<vmem>>, %arg9: memref<256x64xf32, #tpu.memory_space<vmem>>, %arg10: memref<256x1xf32, #tpu.memory_space<vmem>>, %arg11: memref<64x256xf32, #tpu.memory_space<vmem>>, %arg12: memref<64x1xf32, #tpu.memory_space<vmem>>, %arg13: memref<4x64xf32, #tpu.memory_space<vmem>>, %arg14: memref<4x1xf32, #tpu.memory_space<vmem>>, %arg15: memref<1x6xf32, #tpu.memory_space<vmem>>) attributes {dimension_semantics = [#tpu.dimension_semantics<arbitrary>], iteration_bounds = array<i64: 1>, scalar_prefetch = 0 : i64, scratch_operands = 0 : i64, tpu.core_type = #tpu.core_type<tc>, window_params = [{pipeline_mode = #tpu.pipeline_mode<synchronous>, transform_indices = @transform_0, window_bounds = array<i64: 7, 1024>}, {pipeline_mode = #tpu.pipeline_mode<synchronous>, transform_indices = @transform_1, window_bounds = array<i64: 9, 1024>}, {pipeline_mode = #tpu.pipeline_mode<synchronous>, transform_indices = @transform_2, window_bounds = array<i64: 6, 1024>}, {pipeline_mode = #tpu.pipeline_mode<synchronous>, transform_indices = @transform_3, window_bounds = array<i64: 1024, 6>}, {pipeline_mode = #tpu.pipeline_mode<synchronous>, transform_indices = @transform_4, window_bounds = array<i64: 128, 6>}, {pipeline_mode = #tpu.pipeline_mode<synchronous>, transform_indices = @transform_5, window_bounds = array<i64: 8, 6>}, {pipeline_mode = #tpu.pipeline_mode<synchronous>, transform_indices = @transform_6, window_bounds = array<i64: 64, 10>}, {pipeline_mode = #tpu.pipeline_mode<synchronous>, transform_indices = @transform_7, window_bounds = array<i64: 64, 1>}, {pipeline_mode = #tpu.pipeline_mode<synchronous>, transform_indices = @transform_8, window_bounds = array<i64: 256, 64>}, {pipeline_mode = #tpu.pipeline_mode<synchronous>, transform_indices = @transform_9, window_bounds = array<i64: 256, 1>}, {pipeline_mode = #tpu.pipeline_mode<synchronous>, transform_indices = @transform_10, window_bounds = array<i64: 64, 256>}, {pipeline_mode = #tpu.pipeline_mode<synchronous>, transform_indices = @transform_11, window_bounds = array<i64: 64, 1>}, {pipeline_mode = #tpu.pipeline_mode<synchronous>, transform_indices = @transform_12, window_bounds = array<i64: 4, 64>}, {pipeline_mode = #tpu.pipeline_mode<synchronous>, transform_indices = @transform_13, window_bounds = array<i64: 4, 1>}, {pipeline_mode = #tpu.pipeline_mode<synchronous>, transform_indices = @transform_14, window_bounds = array<i64: 1, 6>}]} {
    %c0 = arith.constant 0 : index
    %c0_0 = arith.constant 0 : index
    %0 = vector.load %arg1[%c0, %c0_0] : memref<7x1024xf32, #tpu.memory_space<vmem>>, vector<1x1024xf32>
    %c1 = arith.constant 1 : index
    %c0_1 = arith.constant 0 : index
    %1 = vector.load %arg1[%c1, %c0_1] : memref<7x1024xf32, #tpu.memory_space<vmem>>, vector<1x1024xf32>
    %c2 = arith.constant 2 : index
    %c0_2 = arith.constant 0 : index
    %2 = vector.load %arg1[%c2, %c0_2] : memref<7x1024xf32, #tpu.memory_space<vmem>>, vector<1x1024xf32>
    %c3 = arith.constant 3 : index
    %c0_3 = arith.constant 0 : index
    %3 = vector.load %arg1[%c3, %c0_3] : memref<7x1024xf32, #tpu.memory_space<vmem>>, vector<1x1024xf32>
    %c4 = arith.constant 4 : index
    %c0_4 = arith.constant 0 : index
    %4 = vector.load %arg1[%c4, %c0_4] : memref<7x1024xf32, #tpu.memory_space<vmem>>, vector<1x1024xf32>
    %c5 = arith.constant 5 : index
    %c0_5 = arith.constant 0 : index
    %5 = vector.load %arg1[%c5, %c0_5] : memref<7x1024xf32, #tpu.memory_space<vmem>>, vector<1x1024xf32>
    %c6 = arith.constant 6 : index
    %c0_6 = arith.constant 0 : index
    %6 = vector.load %arg1[%c6, %c0_6] : memref<7x1024xf32, #tpu.memory_space<vmem>>, vector<1x1024xf32>
    %c0_7 = arith.constant 0 : index
    %c0_8 = arith.constant 0 : index
    %7 = vector.load %arg2[%c0_7, %c0_8] : memref<9x1024xf32, #tpu.memory_space<vmem>>, vector<1x1024xf32>
    %c1_9 = arith.constant 1 : index
    %c0_10 = arith.constant 0 : index
    %8 = vector.load %arg2[%c1_9, %c0_10] : memref<9x1024xf32, #tpu.memory_space<vmem>>, vector<1x1024xf32>
    %c2_11 = arith.constant 2 : index
    %c0_12 = arith.constant 0 : index
    %9 = vector.load %arg2[%c2_11, %c0_12] : memref<9x1024xf32, #tpu.memory_space<vmem>>, vector<1x1024xf32>
    %c3_13 = arith.constant 3 : index
    %c0_14 = arith.constant 0 : index
    %10 = vector.load %arg2[%c3_13, %c0_14] : memref<9x1024xf32, #tpu.memory_space<vmem>>, vector<1x1024xf32>
    %c4_15 = arith.constant 4 : index
    %c0_16 = arith.constant 0 : index
    %11 = vector.load %arg2[%c4_15, %c0_16] : memref<9x1024xf32, #tpu.memory_space<vmem>>, vector<1x1024xf32>
    %c5_17 = arith.constant 5 : index
    %c0_18 = arith.constant 0 : index
    %12 = vector.load %arg2[%c5_17, %c0_18] : memref<9x1024xf32, #tpu.memory_space<vmem>>, vector<1x1024xf32>
    %c6_19 = arith.constant 6 : index
    %c0_20 = arith.constant 0 : index
    %13 = vector.load %arg2[%c6_19, %c0_20] : memref<9x1024xf32, #tpu.memory_space<vmem>>, vector<1x1024xf32>
    %c7 = arith.constant 7 : index
    %c0_21 = arith.constant 0 : index
    %14 = vector.load %arg2[%c7, %c0_21] : memref<9x1024xf32, #tpu.memory_space<vmem>>, vector<1x1024xf32>
    %c8 = arith.constant 8 : index
    %c0_22 = arith.constant 0 : index
    %15 = vector.load %arg2[%c8, %c0_22] : memref<9x1024xf32, #tpu.memory_space<vmem>>, vector<1x1024xf32>
    %c5_23 = arith.constant 5 : index
    %c0_24 = arith.constant 0 : index
    %16 = vector.load %arg3[%c5_23, %c0_24] : memref<6x1024xf32, #tpu.memory_space<vmem>>, vector<1x1024xf32>
    %17 = arith.mulf %3, %11 : vector<1x1024xf32>
    %18 = arith.mulf %4, %12 : vector<1x1024xf32>
    %19 = arith.addf %17, %18 : vector<1x1024xf32>
    %20 = arith.mulf %4, %11 : vector<1x1024xf32>
    %21 = arith.mulf %3, %12 : vector<1x1024xf32>
    %22 = arith.subf %20, %21 : vector<1x1024xf32>
    %23 = arith.subf %2, %9 : vector<1x1024xf32>
    %cst = arith.constant 3.14159274 : f32
    %24 = vector.broadcast %cst : f32 to vector<1x1024xf32>
    %25 = arith.addf %23, %24 : vector<1x1024xf32>
    %cst_25 = arith.constant 6.28318548 : f32
    %26 = vector.broadcast %cst_25 : f32 to vector<1x1024xf32>
    %27 = arith.divf %25, %26 : vector<1x1024xf32>
    %28 = math.floor %27 : vector<1x1024xf32>
    %cst_26 = arith.constant 6.28318548 : f32
    %29 = vector.broadcast %cst_26 : f32 to vector<1x1024xf32>
    %30 = arith.mulf %29, %28 : vector<1x1024xf32>
    %31 = arith.subf %23, %30 : vector<1x1024xf32>
    %32 = arith.subf %0, %7 : vector<1x1024xf32>
    %33 = arith.subf %1, %8 : vector<1x1024xf32>
    %34 = arith.mulf %32, %19 : vector<1x1024xf32>
    %35 = arith.mulf %33, %22 : vector<1x1024xf32>
    %36 = arith.mulf %10, %11 : vector<1x1024xf32>
    %37 = arith.subf %5, %36 : vector<1x1024xf32>
    %38 = arith.mulf %37, %19 : vector<1x1024xf32>
    %39 = arith.mulf %10, %12 : vector<1x1024xf32>
    %40 = arith.subf %6, %39 : vector<1x1024xf32>
    %41 = arith.mulf %40, %22 : vector<1x1024xf32>
    %c0_27 = arith.constant 0 : index
    %c0_28 = arith.constant 0 : index
    %42 = vector.load %arg3[%c0_27, %c0_28] : memref<6x1024xf32, #tpu.memory_space<vmem>>, vector<5x1024xf32>
    %43 = tpu.concatenate %34, %35, %31, %38, %41, %42 in 0 : vector<1x1024xf32>, vector<1x1024xf32>, vector<1x1024xf32>, vector<1x1024xf32>, vector<1x1024xf32>, vector<5x1024xf32> -> vector<10x1024xf32>
    %44 = vector.broadcast %16 : vector<1x1024xf32> to vector<10x1024xf32>
    %45 = arith.mulf %43, %44 : vector<10x1024xf32>
    %c0_29 = arith.constant 0 : index
    %c0_30 = arith.constant 0 : index
    %46 = vector.load %arg7[%c0_29, %c0_30] : memref<64x10xf32, #tpu.memory_space<vmem>>, vector<64x10xf32>
    %cst_31 = arith.constant dense<0.000000e+00> : vector<64x1024xf32>
    %47 = tpu.matmul %46, %45, %cst_31 {dimension_numbers = #tpu.dot_dimension_numbers<[1], [0], [0], [1], [0, 0, 1, 1], [], []>} : vector<64x10xf32>, vector<10x1024xf32>, vector<64x1024xf32> -> vector<64x1024xf32>
    %c0_32 = arith.constant 0 : index
    %c0_33 = arith.constant 0 : index
    %48 = vector.load %arg8[%c0_32, %c0_33] : memref<64x1xf32, #tpu.memory_space<vmem>>, vector<64x1xf32>
    %49 = vector.broadcast %48 : vector<64x1xf32> to vector<64x1024xf32>
    %50 = arith.addf %47, %49 : vector<64x1024xf32>
    %cst_34 = arith.constant 0.000000e+00 : f32
    %51 = vector.broadcast %cst_34 : f32 to vector<64x1024xf32>
    %52 = arith.maximumf %50, %51 : vector<64x1024xf32>
    %c0_35 = arith.constant 0 : index
    %c0_36 = arith.constant 0 : index
    %53 = vector.load %arg9[%c0_35, %c0_36] : memref<256x64xf32, #tpu.memory_space<vmem>>, vector<256x64xf32>
    %cst_37 = arith.constant dense<0.000000e+00> : vector<256x1024xf32>
    %54 = tpu.matmul %53, %52, %cst_37 {dimension_numbers = #tpu.dot_dimension_numbers<[1], [0], [0], [1], [0, 0, 1, 1], [], []>} : vector<256x64xf32>, vector<64x1024xf32>, vector<256x1024xf32> -> vector<256x1024xf32>
    %c0_38 = arith.constant 0 : index
    %c0_39 = arith.constant 0 : index
    %55 = vector.load %arg10[%c0_38, %c0_39] : memref<256x1xf32, #tpu.memory_space<vmem>>, vector<256x1xf32>
    %56 = vector.broadcast %55 : vector<256x1xf32> to vector<256x1024xf32>
    %57 = arith.addf %54, %56 : vector<256x1024xf32>
    %58 = vector.extract_strided_slice %57 {offsets = [0, 0], sizes = [256, 128], strides = [1, 1]} : vector<256x1024xf32> to vector<256x128xf32>
    %59 = vector.extract_strided_slice %57 {offsets = [0, 128], sizes = [256, 128], strides = [1, 1]} : vector<256x1024xf32> to vector<256x128xf32>
    %60 = arith.maximumf %58, %59 : vector<256x128xf32>
    %61 = vector.extract_strided_slice %57 {offsets = [0, 256], sizes = [256, 128], strides = [1, 1]} : vector<256x1024xf32> to vector<256x128xf32>
    %62 = arith.maximumf %60, %61 : vector<256x128xf32>
    %63 = vector.extract_strided_slice %57 {offsets = [0, 384], sizes = [256, 128], strides = [1, 1]} : vector<256x1024xf32> to vector<256x128xf32>
    %64 = arith.maximumf %62, %63 : vector<256x128xf32>
    %65 = vector.extract_strided_slice %57 {offsets = [0, 512], sizes = [256, 128], strides = [1, 1]} : vector<256x1024xf32> to vector<256x128xf32>
    %66 = arith.maximumf %64, %65 : vector<256x128xf32>
    %67 = vector.extract_strided_slice %57 {offsets = [0, 640], sizes = [256, 128], strides = [1, 1]} : vector<256x1024xf32> to vector<256x128xf32>
    %68 = arith.maximumf %66, %67 : vector<256x128xf32>
    %69 = vector.extract_strided_slice %57 {offsets = [0, 768], sizes = [256, 128], strides = [1, 1]} : vector<256x1024xf32> to vector<256x128xf32>
    %70 = arith.maximumf %68, %69 : vector<256x128xf32>
    %71 = vector.extract_strided_slice %57 {offsets = [0, 896], sizes = [256, 128], strides = [1, 1]} : vector<256x1024xf32> to vector<256x128xf32>
    %72 = arith.maximumf %70, %71 : vector<256x128xf32>
    %c0_40 = arith.constant 0 : index
    %c0_41 = arith.constant 0 : index
    %73 = vector.load %arg5[%c0_40, %c0_41] : memref<128x6xf32, #tpu.memory_space<vmem>>, vector<128x6xf32>
    %cst_42 = arith.constant dense<0.000000e+00> : vector<256x6xf32>
    %74 = tpu.matmul %72, %73, %cst_42 {dimension_numbers = #tpu.dot_dimension_numbers<[1], [0], [0], [1], [0, 0, 1, 1], [], []>} : vector<256x128xf32>, vector<128x6xf32>, vector<256x6xf32> -> vector<256x6xf32>
    %c0_43 = arith.constant 0 : index
    %c0_44 = arith.constant 0 : index
    %75 = vector.load %arg11[%c0_43, %c0_44] : memref<64x256xf32, #tpu.memory_space<vmem>>, vector<64x256xf32>
    %cst_45 = arith.constant dense<0.000000e+00> : vector<64x6xf32>
    %76 = tpu.matmul %75, %74, %cst_45 {dimension_numbers = #tpu.dot_dimension_numbers<[1], [0], [0], [1], [0, 0, 1, 1], [], []>} : vector<64x256xf32>, vector<256x6xf32>, vector<64x6xf32> -> vector<64x6xf32>
    %c0_46 = arith.constant 0 : index
    %c0_47 = arith.constant 0 : index
    %77 = vector.load %arg12[%c0_46, %c0_47] : memref<64x1xf32, #tpu.memory_space<vmem>>, vector<64x1xf32>
    %78 = vector.broadcast %77 : vector<64x1xf32> to vector<64x6xf32>
    %79 = arith.addf %76, %78 : vector<64x6xf32>
    %cst_48 = arith.constant 0.000000e+00 : f32
    %80 = vector.broadcast %cst_48 : f32 to vector<64x6xf32>
    %81 = arith.cmpf ogt, %79, %80 : vector<64x6xf32>
    %cst_49 = arith.constant 0.000000e+00 : f32
    %82 = vector.broadcast %cst_49 : f32 to vector<64x6xf32>
    %83 = arith.minimumf %79, %82 : vector<64x6xf32>
    %84 = math.exp %83 : vector<64x6xf32>
    %cst_50 = arith.constant 1.000000e+00 : f32
    %85 = vector.broadcast %cst_50 : f32 to vector<64x6xf32>
    %86 = arith.subf %84, %85 : vector<64x6xf32>
    %87 = arith.select %81, %79, %86 : vector<64x6xi1>, vector<64x6xf32>
    %c0_51 = arith.constant 0 : index
    %c0_52 = arith.constant 0 : index
    %88 = vector.load %arg13[%c0_51, %c0_52] : memref<4x64xf32, #tpu.memory_space<vmem>>, vector<4x64xf32>
    %cst_53 = arith.constant dense<0.000000e+00> : vector<4x6xf32>
    %89 = tpu.matmul %88, %87, %cst_53 {dimension_numbers = #tpu.dot_dimension_numbers<[1], [0], [0], [1], [0, 0, 1, 1], [], []>} : vector<4x64xf32>, vector<64x6xf32>, vector<4x6xf32> -> vector<4x6xf32>
    %c0_54 = arith.constant 0 : index
    %c0_55 = arith.constant 0 : index
    %90 = vector.load %arg14[%c0_54, %c0_55] : memref<4x1xf32, #tpu.memory_space<vmem>>, vector<4x1xf32>
    %91 = vector.broadcast %90 : vector<4x1xf32> to vector<4x6xf32>
    %92 = arith.addf %89, %91 : vector<4x6xf32>
    %cst_56 = arith.constant 0.000000e+00 : f32
    %93 = vector.broadcast %cst_56 : f32 to vector<4x6xf32>
    %94 = arith.subf %93, %92 : vector<4x6xf32>
    %95 = math.exp %94 : vector<4x6xf32>
    %cst_57 = arith.constant 1.000000e+00 : f32
    %96 = vector.broadcast %cst_57 : f32 to vector<4x6xf32>
    %97 = arith.addf %96, %95 : vector<4x6xf32>
    %cst_58 = arith.constant 1.000000e+00 : f32
    %98 = vector.broadcast %cst_58 : f32 to vector<4x6xf32>
    %99 = arith.divf %98, %97 : vector<4x6xf32>
    %100 = arith.mulf %32, %32 : vector<1x1024xf32>
    %101 = arith.mulf %33, %33 : vector<1x1024xf32>
    %102 = arith.addf %100, %101 : vector<1x1024xf32>
    %cst_59 = arith.constant -2.000000e-01 : f32
    %103 = vector.broadcast %cst_59 : f32 to vector<1x1024xf32>
    %104 = arith.mulf %103, %102 : vector<1x1024xf32>
    %105 = math.exp %104 : vector<1x1024xf32>
    %106 = arith.mulf %105, %16 : vector<1x1024xf32>
    %107 = math.absf %13 : vector<1x1024xf32>
    %108 = math.absf %15 : vector<1x1024xf32>
    %109 = arith.mulf %10, %10 : vector<1x1024xf32>
    %110 = arith.mulf %109, %14 : vector<1x1024xf32>
    %111 = math.absf %110 : vector<1x1024xf32>
    %112 = tpu.concatenate %10, %107, %108, %111, %106 in 0 : vector<1x1024xf32>, vector<1x1024xf32>, vector<1x1024xf32>, vector<1x1024xf32>, vector<1x1024xf32> -> vector<5x1024xf32>
    %c0_60 = arith.constant 0 : index
    %c0_61 = arith.constant 0 : index
    %113 = vector.load %arg4[%c0_60, %c0_61] : memref<1024x6xf32, #tpu.memory_space<vmem>>, vector<1024x6xf32>
    %cst_62 = arith.constant dense<0.000000e+00> : vector<5x6xf32>
    %114 = tpu.matmul %112, %113, %cst_62 {dimension_numbers = #tpu.dot_dimension_numbers<[1], [0], [0], [1], [0, 0, 1, 1], [], []>} : vector<5x1024xf32>, vector<1024x6xf32>, vector<5x6xf32> -> vector<5x6xf32>
    %115 = vector.extract_strided_slice %114 {offsets = [0, 0], sizes = [1, 6], strides = [1, 1]} : vector<5x6xf32> to vector<1x6xf32>
    %cst_63 = arith.constant 0.000000e+00 : f32
    %cst_64 = arith.constant 1.500000e+01 : f32
    %116 = vector.broadcast %cst_63 : f32 to vector<1x6xf32>
    %117 = arith.maximumf %116, %115 : vector<1x6xf32>
    %118 = vector.broadcast %cst_64 : f32 to vector<1x6xf32>
    %119 = arith.minimumf %118, %117 : vector<1x6xf32>
    %cst_65 = arith.constant 0.000000e+00 : f32
    %120 = vector.broadcast %cst_65 : f32 to vector<1x6xf32>
    %121 = arith.subf %120, %119 : vector<1x6xf32>
    %cst_66 = arith.constant 1.500000e+01 : f32
    %122 = vector.broadcast %cst_66 : f32 to vector<1x6xf32>
    %123 = arith.divf %121, %122 : vector<1x6xf32>
    %124 = vector.extract_strided_slice %114 {offsets = [1, 0], sizes = [1, 6], strides = [1, 1]} : vector<5x6xf32> to vector<1x6xf32>
    %cst_67 = arith.constant 0.000000e+00 : f32
    %cst_68 = arith.constant 4.000000e+00 : f32
    %125 = vector.broadcast %cst_67 : f32 to vector<1x6xf32>
    %126 = arith.maximumf %125, %124 : vector<1x6xf32>
    %127 = vector.broadcast %cst_68 : f32 to vector<1x6xf32>
    %128 = arith.minimumf %127, %126 : vector<1x6xf32>
    %cst_69 = arith.constant 4.000000e+00 : f32
    %129 = vector.broadcast %cst_69 : f32 to vector<1x6xf32>
    %130 = arith.divf %128, %129 : vector<1x6xf32>
    %131 = vector.extract_strided_slice %114 {offsets = [2, 0], sizes = [1, 6], strides = [1, 1]} : vector<5x6xf32> to vector<1x6xf32>
    %cst_70 = arith.constant 0.000000e+00 : f32
    %cst_71 = arith.constant 6.000000e+00 : f32
    %132 = vector.broadcast %cst_70 : f32 to vector<1x6xf32>
    %133 = arith.maximumf %132, %131 : vector<1x6xf32>
    %134 = vector.broadcast %cst_71 : f32 to vector<1x6xf32>
    %135 = arith.minimumf %134, %133 : vector<1x6xf32>
    %cst_72 = arith.constant 6.000000e+00 : f32
    %136 = vector.broadcast %cst_72 : f32 to vector<1x6xf32>
    %137 = arith.divf %135, %136 : vector<1x6xf32>
    %138 = vector.extract_strided_slice %114 {offsets = [3, 0], sizes = [1, 6], strides = [1, 1]} : vector<5x6xf32> to vector<1x6xf32>
    %cst_73 = arith.constant 0.000000e+00 : f32
    %cst_74 = arith.constant 5.000000e+00 : f32
    %139 = vector.broadcast %cst_73 : f32 to vector<1x6xf32>
    %140 = arith.maximumf %139, %138 : vector<1x6xf32>
    %141 = vector.broadcast %cst_74 : f32 to vector<1x6xf32>
    %142 = arith.minimumf %141, %140 : vector<1x6xf32>
    %cst_75 = arith.constant 5.000000e+00 : f32
    %143 = vector.broadcast %cst_75 : f32 to vector<1x6xf32>
    %144 = arith.divf %142, %143 : vector<1x6xf32>
    %145 = vector.extract_strided_slice %114 {offsets = [4, 0], sizes = [1, 6], strides = [1, 1]} : vector<5x6xf32> to vector<1x6xf32>
    %cst_76 = arith.constant 1.280000e+02 : f32
    %146 = vector.broadcast %cst_76 : f32 to vector<1x6xf32>
    %147 = arith.mulf %145, %146 : vector<1x6xf32>
    %c0_77 = arith.constant 0 : index
    %c0_78 = arith.constant 0 : index
    %148 = vector.load %arg6[%c0_77, %c0_78] : memref<8x6xf32, #tpu.memory_space<vmem>>, vector<8x6xf32>
    %149 = vector.extract_strided_slice %148 {offsets = [0, 0], sizes = [1, 6], strides = [1, 1]} : vector<8x6xf32> to vector<1x6xf32>
    %150 = arith.mulf %123, %149 : vector<1x6xf32>
    %151 = vector.extract_strided_slice %148 {offsets = [1, 0], sizes = [1, 6], strides = [1, 1]} : vector<8x6xf32> to vector<1x6xf32>
    %152 = arith.mulf %130, %151 : vector<1x6xf32>
    %153 = arith.addf %150, %152 : vector<1x6xf32>
    %154 = vector.extract_strided_slice %148 {offsets = [2, 0], sizes = [1, 6], strides = [1, 1]} : vector<8x6xf32> to vector<1x6xf32>
    %155 = arith.mulf %137, %154 : vector<1x6xf32>
    %156 = arith.addf %153, %155 : vector<1x6xf32>
    %157 = vector.extract_strided_slice %148 {offsets = [3, 0], sizes = [1, 6], strides = [1, 1]} : vector<8x6xf32> to vector<1x6xf32>
    %158 = arith.mulf %144, %157 : vector<1x6xf32>
    %159 = arith.addf %156, %158 : vector<1x6xf32>
    %160 = vector.extract_strided_slice %148 {offsets = [4, 0], sizes = [4, 6], strides = [1, 1]} : vector<8x6xf32> to vector<4x6xf32>
    %161 = arith.mulf %99, %160 : vector<4x6xf32>
    %cst_79 = arith.constant dense<0.000000e+00> : vector<6xf32>
    %162 = vector.multi_reduction <add>, %161, %cst_79 [0] : vector<4x6xf32> to vector<6xf32>
    %163 = vector.shape_cast %162 : vector<6xf32> to vector<1x6xf32>
    %164 = arith.addf %159, %163 : vector<1x6xf32>
    %cst_80 = arith.constant 0.000000e+00 : f32
    %165 = vector.broadcast %cst_80 : f32 to vector<1x6xf32>
    %166 = arith.subf %165, %164 : vector<1x6xf32>
    %cst_81 = arith.constant 1.000000e+01 : f32
    %167 = vector.broadcast %cst_81 : f32 to vector<1x6xf32>
    %168 = arith.mulf %167, %147 : vector<1x6xf32>
    %169 = arith.subf %166, %168 : vector<1x6xf32>
    %c0_82 = arith.constant 0 : index
    %c0_83 = arith.constant 0 : index
    %170 = vector.load %arg15[%c0_82, %c0_83] : memref<1x6xf32, #tpu.memory_space<vmem>>, vector<1x6xf32>
    tpu.vector_store %arg15[%c0_82, %c0_83], %169 {strides = array<i32>} : memref<1x6xf32, #tpu.memory_space<vmem>>, vector<1x6xf32>,
    return
  }
  func.func @transform_0(%arg0: i32) -> (i32, i32) {
    %c0_i32 = arith.constant 0 : i32
    %c0_i32_0 = arith.constant 0 : i32
    %c0_i32_1 = arith.constant 0 : i32
    return %c0_i32, %c0_i32_0 : i32, i32
  }
  func.func @transform_1(%arg0: i32) -> (i32, i32) {
    %c0_i32 = arith.constant 0 : i32
    %c0_i32_0 = arith.constant 0 : i32
    %c0_i32_1 = arith.constant 0 : i32
    return %c0_i32, %c0_i32_0 : i32, i32
  }
  func.func @transform_2(%arg0: i32) -> (i32, i32) {
    %c0_i32 = arith.constant 0 : i32
    %c0_i32_0 = arith.constant 0 : i32
    %c0_i32_1 = arith.constant 0 : i32
    return %c0_i32, %c0_i32_0 : i32, i32
  }
  func.func @transform_3(%arg0: i32) -> (i32, i32) {
    %c0_i32 = arith.constant 0 : i32
    %c0_i32_0 = arith.constant 0 : i32
    %c0_i32_1 = arith.constant 0 : i32
    return %c0_i32, %c0_i32_0 : i32, i32
  }
  func.func @transform_4(%arg0: i32) -> (i32, i32) {
    %c0_i32 = arith.constant 0 : i32
    %c0_i32_0 = arith.constant 0 : i32
    %c0_i32_1 = arith.constant 0 : i32
    return %c0_i32, %c0_i32_0 : i32, i32
  }
  func.func @transform_5(%arg0: i32) -> (i32, i32) {
    %c0_i32 = arith.constant 0 : i32
    %c0_i32_0 = arith.constant 0 : i32
    %c0_i32_1 = arith.constant 0 : i32
    return %c0_i32, %c0_i32_0 : i32, i32
  }
  func.func @transform_6(%arg0: i32) -> (i32, i32) {
    %c0_i32 = arith.constant 0 : i32
    %c0_i32_0 = arith.constant 0 : i32
    %c0_i32_1 = arith.constant 0 : i32
    return %c0_i32, %c0_i32_0 : i32, i32
  }
  func.func @transform_7(%arg0: i32) -> (i32, i32) {
    %c0_i32 = arith.constant 0 : i32
    %c0_i32_0 = arith.constant 0 : i32
    %c0_i32_1 = arith.constant 0 : i32
    return %c0_i32, %c0_i32_0 : i32, i32
  }
  func.func @transform_8(%arg0: i32) -> (i32, i32) {
    %c0_i32 = arith.constant 0 : i32
    %c0_i32_0 = arith.constant 0 : i32
    %c0_i32_1 = arith.constant 0 : i32
    return %c0_i32, %c0_i32_0 : i32, i32
  }
  func.func @transform_9(%arg0: i32) -> (i32, i32) {
    %c0_i32 = arith.constant 0 : i32
    %c0_i32_0 = arith.constant 0 : i32
    %c0_i32_1 = arith.constant 0 : i32
    return %c0_i32, %c0_i32_0 : i32, i32
  }
  func.func @transform_10(%arg0: i32) -> (i32, i32) {
    %c0_i32 = arith.constant 0 : i32
    %c0_i32_0 = arith.constant 0 : i32
    %c0_i32_1 = arith.constant 0 : i32
    return %c0_i32, %c0_i32_0 : i32, i32
  }
  func.func @transform_11(%arg0: i32) -> (i32, i32) {
    %c0_i32 = arith.constant 0 : i32
    %c0_i32_0 = arith.constant 0 : i32
    %c0_i32_1 = arith.constant 0 : i32
    return %c0_i32, %c0_i32_0 : i32, i32
  }
  func.func @transform_12(%arg0: i32) -> (i32, i32) {
    %c0_i32 = arith.constant 0 : i32
    %c0_i32_0 = arith.constant 0 : i32
    %c0_i32_1 = arith.constant 0 : i32
    return %c0_i32, %c0_i32_0 : i32, i32
  }
  func.func @transform_13(%arg0: i32) -> (i32, i32) {
    %c0_i32 = arith.constant 0 : i32
    %c0_i32_0 = arith.constant 0 : i32
    %c0_i32_1 = arith.constant 0 : i32
    return %c0_i32, %c0_i32_0 : i32, i32
  }
  func.func @transform_14(%arg0: i32) -> (i32, i32) {
    %c0_i32 = arith.constant 0 : i32
    %c0_i32_0 = arith.constant 0 : i32
    %c0_i32_1 = arith.constant 0 : i32
    return %c0_i32, %c0_i32_0 : i32, i32
  }
}

</mosaic_0001>

<llo_original>
// kernel: tpu_custom_call.1
$region0: #{tpu_custom_call.1}
  #allocation0 [shape = 'u32[]', space=smem, size = 0x4, offset = 0x4, fixed_abs, tag = 'smem constant byte address 0x4 - core index']
  #allocation1 [shape = 'u32[72,128]{1,0:T(1,128)}', space=vmem, size = 0x9000, scoped, tag = 'internal scratch']
  %s0 = inlined_call_operand.vmem [shape: f32[7,1024], index: 0, kind: input, shape index: {}]
  %s1 = inlined_call_operand.vmem [shape: f32[9,1024], index: 1, kind: input, shape index: {}]
  %s2 = inlined_call_operand.vmem [shape: f32[6,1024], index: 2, kind: input, shape index: {}]
  %s3 = inlined_call_operand.vmem [shape: f32[1024,6], index: 3, kind: input, shape index: {}]
  %s4 = inlined_call_operand.vmem [shape: f32[128,6], index: 4, kind: input, shape index: {}]
  %s5 = inlined_call_operand.vmem [shape: f32[8,6], index: 5, kind: input, shape index: {}]
  %s6 = inlined_call_operand.vmem [shape: f32[64,10], index: 6, kind: input, shape index: {}]
  %s7 = inlined_call_operand.vmem [shape: f32[64,1], index: 7, kind: input, shape index: {}]
  %s8 = inlined_call_operand.vmem [shape: f32[256,64], index: 8, kind: input, shape index: {}]
  %s9 = inlined_call_operand.vmem [shape: f32[256,1], index: 9, kind: input, shape index: {}]
  %s10 = inlined_call_operand.vmem [shape: f32[64,256], index: 10, kind: input, shape index: {}]
  %s11 = inlined_call_operand.vmem [shape: f32[64,1], index: 11, kind: input, shape index: {}]
  %s12 = inlined_call_operand.vmem [shape: f32[4,64], index: 12, kind: input, shape index: {}]
  %s13 = inlined_call_operand.vmem [shape: f32[4,1], index: 13, kind: input, shape index: {}]
  %s14 = inlined_call_operand.hbm [shape: f32[1,6], index: 14, kind: output, shape index: {}]
  %s15 = sld [smem:[#allocation0]]
  $region66: #{tpu_custom_call.1} parent=0
    _
  %s17 = ssub.s32 1, %s15
  %s18 = scalar_select 0, %s17, %s15
  $region1: #{tpu_custom_call.1} parent=0
    #allocation2 [shape = 'u8[512]{0}', space=vmem, size = 0x400, scoped, tag = 'output window, operand 0, single buffered']
    #allocation3 [shape = 's32[1]{0}', space=sflag, size = 0x4, scoped, tag = 'scoped memory for tpu_custom_call.1']
    %19 = vsyncpa [#allocation3], 0
    // Predicated region
    $region2: #{tpu_custom_call.1} parent=1 // pred_check
      _
    $region3: #{tpu_custom_call.1} parent=1 // pred_check_branch
      %21 = sbr.rel (0) target = $region5
    $region4: #{tpu_custom_call.1} parent=1 // pred_region
      _
    $region5: #{tpu_custom_call.1} parent=1 // pred_fallthru
      _
    // Predicated region
    $region6: #{tpu_custom_call.1} parent=1 // pred_check
      _
    $region7: #{tpu_custom_call.1} parent=1 // pred_check_branch
      %23 = sbr.rel (0) target = $region9
    $region8: #{tpu_custom_call.1} parent=1 // pred_region
      _
    $region9: #{tpu_custom_call.1} parent=1 // pred_fallthru
      _
    // Predicated region
    $region10: #{tpu_custom_call.1} parent=1 // pred_check
      _
    $region11: #{tpu_custom_call.1} parent=1 // pred_check_branch
      %25 = sbr.rel (0) target = $region13
    $region12: #{tpu_custom_call.1} parent=1 // pred_region
      _
    $region13: #{tpu_custom_call.1} parent=1 // pred_fallthru
      _
    // Predicated region
    $region14: #{tpu_custom_call.1} parent=1 // pred_check
      _
    $region15: #{tpu_custom_call.1} parent=1 // pred_check_branch
      %27 = sbr.rel (0) target = $region17
    $region16: #{tpu_custom_call.1} parent=1 // pred_region
      _
    $region17: #{tpu_custom_call.1} parent=1 // pred_fallthru
      _
    // Predicated region
    $region18: #{tpu_custom_call.1} parent=1 // pred_check
      _
    $region19: #{tpu_custom_call.1} parent=1 // pred_check_branch
      %29 = sbr.rel (0) target = $region21
    $region20: #{tpu_custom_call.1} parent=1 // pred_region
      _
    $region21: #{tpu_custom_call.1} parent=1 // pred_fallthru
      _
    // Predicated region
    $region22: #{tpu_custom_call.1} parent=1 // pred_check
      _
    $region23: #{tpu_custom_call.1} parent=1 // pred_check_branch
      %31 = sbr.rel (0) target = $region25
    $region24: #{tpu_custom_call.1} parent=1 // pred_region
      _
    $region25: #{tpu_custom_call.1} parent=1 // pred_fallthru
      _
    // Predicated region
    $region26: #{tpu_custom_call.1} parent=1 // pred_check
      _
    $region27: #{tpu_custom_call.1} parent=1 // pred_check_branch
      %33 = sbr.rel (0) target = $region29
    $region28: #{tpu_custom_call.1} parent=1 // pred_region
      _
    $region29: #{tpu_custom_call.1} parent=1 // pred_fallthru
      _
    // Predicated region
    $region30: #{tpu_custom_call.1} parent=1 // pred_check
      _
    $region31: #{tpu_custom_call.1} parent=1 // pred_check_branch
      %35 = sbr.rel (0) target = $region33
    $region32: #{tpu_custom_call.1} parent=1 // pred_region
      _
    $region33: #{tpu_custom_call.1} parent=1 // pred_fallthru
      _
    // Predicated region
    $region34: #{tpu_custom_call.1} parent=1 // pred_check
      _
    $region35: #{tpu_custom_call.1} parent=1 // pred_check_branch
      %37 = sbr.rel (0) target = $region37
    $region36: #{tpu_custom_call.1} parent=1 // pred_region
      _
    $region37: #{tpu_custom_call.1} parent=1 // pred_fallthru
      _
    // Predicated region
    $region38: #{tpu_custom_call.1} parent=1 // pred_check
      _
    $region39: #{tpu_custom_call.1} parent=1 // pred_check_branch
      %39 = sbr.rel (0) target = $region41
    $region40: #{tpu_custom_call.1} parent=1 // pred_region
      _
    $region41: #{tpu_custom_call.1} parent=1 // pred_fallthru
      _
    // Predicated region
    $region42: #{tpu_custom_call.1} parent=1 // pred_check
      _
    $region43: #{tpu_custom_call.1} parent=1 // pred_check_branch
      %41 = sbr.rel (0) target = $region45
    $region44: #{tpu_custom_call.1} parent=1 // pred_region
      _
    $region45: #{tpu_custom_call.1} parent=1 // pred_fallthru
      _
    // Predicated region
    $region46: #{tpu_custom_call.1} parent=1 // pred_check
      _
    $region47: #{tpu_custom_call.1} parent=1 // pred_check_branch
      %43 = sbr.rel (0) target = $region49
    $region48: #{tpu_custom_call.1} parent=1 // pred_region
      _
    $region49: #{tpu_custom_call.1} parent=1 // pred_fallthru
      _
    // Predicated region
    $region50: #{tpu_custom_call.1} parent=1 // pred_check
      _
    $region51: #{tpu_custom_call.1} parent=1 // pred_check_branch
      %45 = sbr.rel (0) target = $region53
    $region52: #{tpu_custom_call.1} parent=1 // pred_region
      _
    $region53: #{tpu_custom_call.1} parent=1 // pred_fallthru
      _
    // Predicated region
    $region54: #{tpu_custom_call.1} parent=1 // pred_check
      _
    $region55: #{tpu_custom_call.1} parent=1 // pred_check_branch
      %47 = sbr.rel (0) target = $region57
    $region56: #{tpu_custom_call.1} parent=1 // pred_region
      _
    $region57: #{tpu_custom_call.1} parent=1 // pred_fallthru
      _
    %v48 = vld [vmem:[%s0] ss:$8 sm:$0xf]
    %v49 = vld [vmem:[%s0] ss:$8 sm:$0xf0]
    %v50 = vor.u32 %v48, %v49
    %s51 = scalar_lea.vmem %s0, 1
    %v52 = vld [vmem:[%s51] ss:$8 sm:$0xf]
    %v53 = vld [vmem:[%s51] ss:$8 sm:$0xf0]
    %v54 = vor.u32 %v52, %v53
    %s55 = scalar_lea.vmem %s0, 2
    %v56 = vld [vmem:[%s55] ss:$8 sm:$0xf]
    %v57 = vld [vmem:[%s55] ss:$8 sm:$0xf0]
    %v58 = vor.u32 %v56, %v57
    %s59 = scalar_lea.vmem %s0, 3
    %v60 = vld [vmem:[%s59] ss:$8 sm:$0xf]
    %v61 = vld [vmem:[%s59] ss:$8 sm:$0xf0]
    %v62 = vor.u32 %v60, %v61
    %s63 = scalar_lea.vmem %s0, 4
    %v64 = vld [vmem:[%s63] ss:$8 sm:$0xf]
    %v65 = vld [vmem:[%s63] ss:$8 sm:$0xf0]
    %v66 = vor.u32 %v64, %v65
    %s67 = scalar_lea.vmem %s0, 5
    %v68 = vld [vmem:[%s67] ss:$8 sm:$0xf]
    %v69 = vld [vmem:[%s67] ss:$8 sm:$0xf0]
    %v70 = vor.u32 %v68, %v69
    %s71 = scalar_lea.vmem %s0, 6
    %v72 = vld [vmem:[%s71] ss:$8 sm:$0xf]
    %v73 = vld [vmem:[%s71] ss:$8 sm:$0xf0]
    %v74 = vor.u32 %v72, %v73
    %v75 = vld [vmem:[%s1] ss:$8 sm:$0xf]
    %v76 = vld [vmem:[%s1] ss:$8 sm:$0xf0]
    %v77 = vor.u32 %v75, %v76
    %s78 = scalar_lea.vmem %s1, 1
    %v79 = vld [vmem:[%s78] ss:$8 sm:$0xf]
    %v80 = vld [vmem:[%s78] ss:$8 sm:$0xf0]
    %v81 = vor.u32 %v79, %v80
    %s82 = scalar_lea.vmem %s1, 2
    %v83 = vld [vmem:[%s82] ss:$8 sm:$0xf]
    %v84 = vld [vmem:[%s82] ss:$8 sm:$0xf0]
    %v85 = vor.u32 %v83, %v84
    %s86 = scalar_lea.vmem %s1, 3
    %v87 = vld [vmem:[%s86] ss:$8 sm:$0xf]
    %v88 = vld [vmem:[%s86] ss:$8 sm:$0xf0]
    %v89 = vor.u32 %v87, %v88
    %s90 = scalar_lea.vmem %s1, 4
    %v91 = vld [vmem:[%s90] ss:$8 sm:$0xf]
    %v92 = vld [vmem:[%s90] ss:$8 sm:$0xf0]
    %v93 = vor.u32 %v91, %v92
    %s94 = scalar_lea.vmem %s1, 5
    %v95 = vld [vmem:[%s94] ss:$8 sm:$0xf]
    %v96 = vld [vmem:[%s94] ss:$8 sm:$0xf0]
    %v97 = vor.u32 %v95, %v96
    %s98 = scalar_lea.vmem %s1, 6
    %v99 = vld [vmem:[%s98] ss:$8 sm:$0xf]
    %v100 = vld [vmem:[%s98] ss:$8 sm:$0xf0]
    %v101 = vor.u32 %v99, %v100
    %s102 = scalar_lea.vmem %s1, 7
    %v103 = vld [vmem:[%s102] ss:$8 sm:$0xf]
    %v104 = vld [vmem:[%s102] ss:$8 sm:$0xf0]
    %v105 = vor.u32 %v103, %v104
    %s106 = scalar_lea.vmem %s1, 64
    %v107 = vld [vmem:[%s106] ss:$8 sm:$0xf]
    %v108 = vld [vmem:[%s106] ss:$8 sm:$0xf0]
    %v109 = vor.u32 %v107, %v108
    %s110 = scalar_lea.vmem %s2, 5
    %v111 = vld [vmem:[%s110] ss:$8 sm:$0xf]
    %v112 = vld [vmem:[%s110] ss:$8 sm:$0xf0]
    %v113 = vor.u32 %v111, %v112
    %v114 = vmul.f32 %v62, %v93
    %v115 = vmul.f32 %v66, %v97
    %v116 = vadd.f32 %v114, %v115
    %v117 = vmul.f32 %v66, %v93
    %v118 = vmul.f32 %v62, %v97
    %v119 = vsub.f32 %v117, %v118
    %v120 = vsub.f32 %v58, %v85
    %v121 = vadd.f32 %v120, 3.1415927
    %v122 = vrcp.pop 6.2831855
    %v123 = vmul.f32 6.2831855, %v122
    %v124 = vsub.f32 1.0, %v123
    %v125 = vmul.f32 %v122, %v124
    %v126 = vadd.f32 %v122, %v125
    %vm127 = vweird.f32 %v122
    %v128 = vsel %vm127, %v122, %v126
    %v129 = vmul.f32 %v121, %v128
    %v130 = vfloor.f32 %v129
    %v131 = vmul.f32 %v130, 6.2831855
    %v132 = vsub.f32 %v120, %v131
    %v133 = vsub.f32 %v50, %v77
    %v134 = vsub.f32 %v54, %v81
    %v135 = vmul.f32 %v133, %v116
    %v136 = vmul.f32 %v134, %v119
    %v137 = vmul.f32 %v89, %v93
    %v138 = vsub.f32 %v70, %v137
    %v139 = vmul.f32 %v138, %v116
    %v140 = vmul.f32 %v89, %v97
    %v141 = vsub.f32 %v74, %v140
    %v142 = vmul.f32 %v141, %v119
    %v143 = vld [vmem:[%s2] sm:$0x1f]
    %v144 = vld [vmem:[%s2 + $0x8] sm:$0x1f]
    %v145 = vld [vmem:[%s2 + $0x10] sm:$0x1f]
    %v146 = vld [vmem:[%s2 + $0x18] sm:$0x1f]
    %v147 = vld [vmem:[%s2 + $0x20] sm:$0x1f]
    %v148 = vld [vmem:[%s2 + $0x28] sm:$0x1f]
    %v149 = vld [vmem:[%s2 + $0x30] sm:$0x1f]
    %v150 = vld [vmem:[%s2 + $0x38] sm:$0x1f]
    %v152 = vperm.slane %v135, 0
    %v153 = vperm.slane %v135, 1
    %v154 = vperm.slane %v135, 2
    %v155 = vperm.slane %v135, 3
    %v156 = vperm.slane %v135, 4
    %v157 = vperm.slane %v135, 5
    %v158 = vperm.slane %v135, 6
    %v159 = vperm.slane %v135, 7
    %v169 = vperm.slane %v136, 0
    %v170 = vperm.slane %v136, 1
    %v171 = vperm.slane %v136, 2
    %v172 = vperm.slane %v136, 3
    %v173 = vperm.slane %v136, 4
    %v174 = vperm.slane %v136, 5
    %v175 = vperm.slane %v136, 6
    %v176 = vperm.slane %v136, 7
    %v186 = vperm.slane %v132, 0
    %v187 = vperm.slane %v132, 1
    %v188 = vperm.slane %v132, 2
    %v189 = vperm.slane %v132, 3
    %v190 = vperm.slane %v132, 4
    %v191 = vperm.slane %v132, 5
    %v192 = vperm.slane %v132, 6
    %v193 = vperm.slane %v132, 7
    %v203 = vperm.slane %v139, 0
    %v204 = vperm.slane %v139, 1
    %v205 = vperm.slane %v139, 2
    %v206 = vperm.slane %v139, 3
    %v207 = vperm.slane %v139, 4
    %v208 = vperm.slane %v139, 5
    %v209 = vperm.slane %v139, 6
    %v210 = vperm.slane %v139, 7
    %v220 = vperm.slane %v142, 0
    %v221 = vperm.slane %v142, 1
    %v222 = vperm.slane %v142, 2
    %v223 = vperm.slane %v142, 3
    %v224 = vperm.slane %v142, 4
    %v225 = vperm.slane %v142, 5
    %v226 = vperm.slane %v142, 6
    %v227 = vperm.slane %v142, 7
    %v244 = vrot.slane %v143, 3
    %v245 = vrot.slane %v144, 3
    %v246 = vrot.slane %v145, 3
    %v247 = vrot.slane %v146, 3
    %v248 = vrot.slane %v147, 3
    %v249 = vrot.slane %v148, 3
    %v250 = vrot.slane %v149, 3
    %v251 = vrot.slane %v150, 3
    %vm260 = vcmask 1040384
    %v261 = vsel %vm260, %v152, %v169
    %v262 = vsel %vm260, %v153, %v170
    %v263 = vsel %vm260, %v154, %v171
    %v264 = vsel %vm260, %v155, %v172
    %v265 = vsel %vm260, %v156, %v173
    %v266 = vsel %vm260, %v157, %v174
    %v267 = vsel %vm260, %v158, %v175
    %v268 = vsel %vm260, %v159, %v176
    %vm269 = vcmask 1041408
    %v270 = vsel %vm269, %v261, %v186
    %v271 = vsel %vm269, %v262, %v187
    %v272 = vsel %vm269, %v263, %v188
    %v273 = vsel %vm269, %v264, %v189
    %v274 = vsel %vm269, %v265, %v190
    %v275 = vsel %vm269, %v266, %v191
    %v276 = vsel %vm269, %v267, %v192
    %v277 = vsel %vm269, %v268, %v193
    %vm278 = vcmask 1042432
    %v279 = vsel %vm278, %v270, %v203
    %v280 = vsel %vm278, %v271, %v204
    %v281 = vsel %vm278, %v272, %v205
    %v282 = vsel %vm278, %v273, %v206
    %v283 = vsel %vm278, %v274, %v207
    %v284 = vsel %vm278, %v275, %v208
    %v285 = vsel %vm278, %v276, %v209
    %v286 = vsel %vm278, %v277, %v210
    %vm287 = vcmask 1043456
    %v288 = vsel %vm287, %v279, %v220
    %v289 = vsel %vm287, %v280, %v221
    %v290 = vsel %vm287, %v281, %v222
    %v291 = vsel %vm287, %v282, %v223
    %v292 = vsel %vm287, %v283, %v224
    %v293 = vsel %vm287, %v284, %v225
    %v294 = vsel %vm287, %v285, %v226
    %v295 = vsel %vm287, %v286, %v227
    %vm296 = vcmask 1044480
    %v297 = vsel %vm296, %v288, %v244
    %v298 = vsel %vm296, %v289, %v245
    %v299 = vsel %vm296, %v290, %v246
    %v300 = vsel %vm296, %v291, %v247
    %v301 = vsel %vm296, %v292, %v248
    %v302 = vsel %vm296, %v293, %v249
    %v303 = vsel %vm296, %v294, %v250
    %v304 = vsel %vm296, %v295, %v251
    %v306 = vperm.slane %v113, 0
    %v307 = vperm.slane %v113, 1
    %v308 = vperm.slane %v113, 2
    %v309 = vperm.slane %v113, 3
    %v310 = vperm.slane %v113, 4
    %v311 = vperm.slane %v113, 5
    %v312 = vperm.slane %v113, 6
    %v313 = vperm.slane %v113, 7
    %v322 = vmul.f32 %v297, %v306
    %v323 = vmul.f32 %v298, %v307
    %v324 = vmul.f32 %v299, %v308
    %v325 = vmul.f32 %v300, %v309
    %v326 = vmul.f32 %v301, %v310
    %v327 = vmul.f32 %v302, %v311
    %v328 = vmul.f32 %v303, %v312
    %v329 = vmul.f32 %v304, %v313
    %v330 = vmul.f32 %v244, %v306
    %v331 = vmul.f32 %v245, %v307
    %v332 = vmul.f32 %v246, %v308
    %v333 = vmul.f32 %v247, %v309
    %v334 = vmul.f32 %v248, %v310
    %v335 = vmul.f32 %v249, %v311
    %v336 = vmul.f32 %v250, %v312
    %v337 = vmul.f32 %v251, %v313
    %v338 = vld [vmem:[%s6] sm:$0xff]
    %v339 = vld [vmem:[%s6 + $0x8] sm:$0xff]
    %v340 = vld [vmem:[%s6 + $0x10] sm:$0xff]
    %v341 = vld [vmem:[%s6 + $0x18] sm:$0xff]
    %v342 = vld [vmem:[%s6 + $0x20] sm:$0xff]
    %v343 = vld [vmem:[%s6 + $0x28] sm:$0xff]
    %v344 = vld [vmem:[%s6 + $0x30] sm:$0xff]
    %v345 = vld [vmem:[%s6 + $0x38] sm:$0xff]
    %v346 = vld [vmem:[%s7] sm:$0xff]
    %v347 = vld [vmem:[%s7 + $0x8] sm:$0xff]
    %v348 = vld [vmem:[%s7 + $0x10] sm:$0xff]
    %v349 = vld [vmem:[%s7 + $0x18] sm:$0xff]
    %v350 = vld [vmem:[%s7 + $0x20] sm:$0xff]
    %v351 = vld [vmem:[%s7 + $0x28] sm:$0xff]
    %v352 = vld [vmem:[%s7 + $0x30] sm:$0xff]
    %v353 = vld [vmem:[%s7 + $0x38] sm:$0xff]
    %355 = vset.pattern.permute.xlu0 0
    %356 = vperm.xlu0 %355, %v346
    %v357 = vpop.permute.xlu0 %356
    %360 = vset.pattern.permute.xlu0 0
    %361 = vperm.xlu0 %360, %v347
    %v362 = vpop.permute.xlu0 %361
    %365 = vset.pattern.permute.xlu0 0
    %366 = vperm.xlu0 %365, %v348
    %v367 = vpop.permute.xlu0 %366
    %370 = vset.pattern.permute.xlu0 0
    %371 = vperm.xlu0 %370, %v349
    %v372 = vpop.permute.xlu0 %371
    %375 = vset.pattern.permute.xlu0 0
    %376 = vperm.xlu0 %375, %v350
    %v377 = vpop.permute.xlu0 %376
    %380 = vset.pattern.permute.xlu0 0
    %381 = vperm.xlu0 %380, %v351
    %v382 = vpop.permute.xlu0 %381
    %385 = vset.pattern.permute.xlu0 0
    %386 = vperm.xlu0 %385, %v352
    %v387 = vpop.permute.xlu0 %386
    %390 = vset.pattern.permute.xlu0 0
    %391 = vperm.xlu0 %390, %v353
    %v392 = vpop.permute.xlu0 %391
    %vm394 = vcmask 80896
    %v396 = vsel %vm394, %v338, 0
    %v399 = vsel %vm394, %v339, 0
    %v402 = vsel %vm394, %v340, 0
    %v405 = vsel %vm394, %v341, 0
    %v408 = vsel %vm394, %v342, 0
    %v411 = vsel %vm394, %v343, 0
    %v414 = vsel %vm394, %v344, 0
    %v417 = vsel %vm394, %v345, 0
    %v420 = vsel %vm269, %v330, 0
    %v423 = vsel %vm269, %v331, 0
    %v426 = vsel %vm269, %v332, 0
    %v429 = vsel %vm269, %v333, 0
    %v432 = vsel %vm269, %v334, 0
    %v435 = vsel %vm269, %v335, 0
    %v438 = vsel %vm269, %v336, 0
    %v441 = vsel %vm269, %v337, 0
    %443 = vmatpush.msra.mxu0 0.0
    %444 = vmatpush.msra.mxu0 0.0
    %445 = vmatpush.msra.mxu0 0.0
    %446 = vmatpush.msra.mxu0 0.0
    %447 = vmatpush.msra.mxu0 0.0
    %448 = vmatpush.msra.mxu0 0.0
    %449 = vmatpush.msra.mxu0 0.0
    %450 = vmatpush.msra.mxu0 0.0
    %451 = vmatpush.msra.mxu0 0.0
    %452 = vmatpush.msra.mxu0 0.0
    %453 = vmatpush.msra.mxu0 0.0
    %454 = vmatpush.msra.mxu0 0.0
    %455 = vmatpush.msra.mxu0 0.0
    %456 = vmatpush.msra.mxu0 0.0
    %457 = vmatpush.msra.mxu0 %v420
    %458 = vmatpush.msra.mxu0 %v322
    %459 = vmatmul.f32.gmra.mxu0 %v396
    %v460 = vpop.f32.mrf.mxu0
    %v461 = vadd.f32 %v357, %v460
    %462 = vmatmul.f32.gmra.mxu0 %v399
    %v463 = vpop.f32.mrf.mxu0
    %v464 = vadd.f32 %v362, %v463
    %465 = vmatmul.f32.gmra.mxu0 %v402
    %v466 = vpop.f32.mrf.mxu0
    %v467 = vadd.f32 %v367, %v466
    %468 = vmatmul.f32.gmra.mxu0 %v405
    %v469 = vpop.f32.mrf.mxu0
    %v470 = vadd.f32 %v372, %v469
    %471 = vmatmul.f32.gmra.mxu0 %v408
    %v472 = vpop.f32.mrf.mxu0
    %v473 = vadd.f32 %v377, %v472
    %474 = vmatmul.f32.gmra.mxu0 %v411
    %v475 = vpop.f32.mrf.mxu0
    %v476 = vadd.f32 %v382, %v475
    %477 = vmatmul.f32.gmra.mxu0 %v414
    %v478 = vpop.f32.mrf.mxu0
    %v479 = vadd.f32 %v387, %v478
    %480 = vmatmul.f32.gmra.mxu0 %v417
    %v481 = vpop.f32.mrf.mxu0
    %v482 = vadd.f32 %v392, %v481
    %483 = vdwg.mxu0
    %484 = vmatpush.msra.mxu0 0.0
    %485 = vmatpush.msra.mxu0 0.0
    %486 = vmatpush.msra.mxu0 0.0
    %487 = vmatpush.msra.mxu0 0.0
    %488 = vmatpush.msra.mxu0 0.0
    %489 = vmatpush.msra.mxu0 0.0
    %490 = vmatpush.msra.mxu0 0.0
    %491 = vmatpush.msra.mxu0 0.0
    %492 = vmatpush.msra.mxu0 0.0
    %493 = vmatpush.msra.mxu0 0.0
    %494 = vmatpush.msra.mxu0 0.0
    %495 = vmatpush.msra.mxu0 0.0
    %496 = vmatpush.msra.mxu0 0.0
    %497 = vmatpush.msra.mxu0 0.0
    %498 = vmatpush.msra.mxu0 %v423
    %499 = vmatpush.msra.mxu0 %v323
    %500 = vmatmul.f32.gmra.mxu0 %v396
    %v501 = vpop.f32.mrf.mxu0
    %v502 = vadd.f32 %v357, %v501
    %503 = vmatmul.f32.gmra.mxu0 %v399
    %v504 = vpop.f32.mrf.mxu0
    %v505 = vadd.f32 %v362, %v504
    %506 = vmatmul.f32.gmra.mxu0 %v402
    %v507 = vpop.f32.mrf.mxu0
    %v508 = vadd.f32 %v367, %v507
    %509 = vmatmul.f32.gmra.mxu0 %v405
    %v510 = vpop.f32.mrf.mxu0
    %v511 = vadd.f32 %v372, %v510
    %512 = vmatmul.f32.gmra.mxu0 %v408
    %v513 = vpop.f32.mrf.mxu0
    %v514 = vadd.f32 %v377, %v513
    %515 = vmatmul.f32.gmra.mxu0 %v411
    %v516 = vpop.f32.mrf.mxu0
    %v517 = vadd.f32 %v382, %v516
    %518 = vmatmul.f32.gmra.mxu0 %v414
    %v519 = vpop.f32.mrf.mxu0
    %v520 = vadd.f32 %v387, %v519
    %521 = vmatmul.f32.gmra.mxu0 %v417
    %v522 = vpop.f32.mrf.mxu0
    %v523 = vadd.f32 %v392, %v522
    %524 = vdwg.mxu0
    %525 = vmatpush.msra.mxu0 0.0
    %526 = vmatpush.msra.mxu0 0.0
    %527 = vmatpush.msra.mxu0 0.0
    %528 = vmatpush.msra.mxu0 0.0
    %529 = vmatpush.msra.mxu0 0.0
    %530 = vmatpush.msra.mxu0 0.0
    %531 = vmatpush.msra.mxu0 0.0
    %532 = vmatpush.msra.mxu0 0.0
    %533 = vmatpush.msra.mxu0 0.0
    %534 = vmatpush.msra.mxu0 0.0
    %535 = vmatpush.msra.mxu0 0.0
    %536 = vmatpush.msra.mxu0 0.0
    %537 = vmatpush.msra.mxu0 0.0
    %538 = vmatpush.msra.mxu0 0.0
    %539 = vmatpush.msra.mxu0 %v426
    %540 = vmatpush.msra.mxu0 %v324
    %541 = vmatmul.f32.gmra.mxu0 %v396
    %v542 = vpop.f32.mrf.mxu0
    %v543 = vadd.f32 %v357, %v542
    %544 = vmatmul.f32.gmra.mxu0 %v399
    %v545 = vpop.f32.mrf.mxu0
    %v546 = vadd.f32 %v362, %v545
    %547 = vmatmul.f32.gmra.mxu0 %v402
    %v548 = vpop.f32.mrf.mxu0
    %v549 = vadd.f32 %v367, %v548
    %550 = vmatmul.f32.gmra.mxu0 %v405
    %v551 = vpop.f32.mrf.mxu0
    %v552 = vadd.f32 %v372, %v551
    %553 = vmatmul.f32.gmra.mxu0 %v408
    %v554 = vpop.f32.mrf.mxu0
    %v555 = vadd.f32 %v377, %v554
    %556 = vmatmul.f32.gmra.mxu0 %v411
    %v557 = vpop.f32.mrf.mxu0
    %v558 = vadd.f32 %v382, %v557
    %559 = vmatmul.f32.gmra.mxu0 %v414
    %v560 = vpop.f32.mrf.mxu0
    %v561 = vadd.f32 %v387, %v560
    %562 = vmatmul.f32.gmra.mxu0 %v417
    %v563 = vpop.f32.mrf.mxu0
    %v564 = vadd.f32 %v392, %v563
    %565 = vdwg.mxu0
    %566 = vmatpush.msra.mxu0 0.0
    %567 = vmatpush.msra.mxu0 0.0
    %568 = vmatpush.msra.mxu0 0.0
    %569 = vmatpush.msra.mxu0 0.0
    %570 = vmatpush.msra.mxu0 0.0
    %571 = vmatpush.msra.mxu0 0.0
    %572 = vmatpush.msra.mxu0 0.0
    %573 = vmatpush.msra.mxu0 0.0
    %574 = vmatpush.msra.mxu0 0.0
    %575 = vmatpush.msra.mxu0 0.0
    %576 = vmatpush.msra.mxu0 0.0
    %577 = vmatpush.msra.mxu0 0.0
    %578 = vmatpush.msra.mxu0 0.0
    %579 = vmatpush.msra.mxu0 0.0
    %580 = vmatpush.msra.mxu0 %v429
    %581 = vmatpush.msra.mxu0 %v325
    %582 = vmatmul.f32.gmra.mxu0 %v396
    %v583 = vpop.f32.mrf.mxu0
    %v584 = vadd.f32 %v357, %v583
    %585 = vmatmul.f32.gmra.mxu0 %v399
    %v586 = vpop.f32.mrf.mxu0
    %v587 = vadd.f32 %v362, %v586
    %588 = vmatmul.f32.gmra.mxu0 %v402
    %v589 = vpop.f32.mrf.mxu0
    %v590 = vadd.f32 %v367, %v589
    %591 = vmatmul.f32.gmra.mxu0 %v405
    %v592 = vpop.f32.mrf.mxu0
    %v593 = vadd.f32 %v372, %v592
    %594 = vmatmul.f32.gmra.mxu0 %v408
    %v595 = vpop.f32.mrf.mxu0
    %v596 = vadd.f32 %v377, %v595
    %597 = vmatmul.f32.gmra.mxu0 %v411
    %v598 = vpop.f32.mrf.mxu0
    %v599 = vadd.f32 %v382, %v598
    %600 = vmatmul.f32.gmra.mxu0 %v414
    %v601 = vpop.f32.mrf.mxu0
    %v602 = vadd.f32 %v387, %v601
    %603 = vmatmul.f32.gmra.mxu0 %v417
    %v604 = vpop.f32.mrf.mxu0
    %v605 = vadd.f32 %v392, %v604
    %606 = vdwg.mxu0
    %607 = vmatpush.msra.mxu0 0.0
    %608 = vmatpush.msra.mxu0 0.0
    %609 = vmatpush.msra.mxu0 0.0
    %610 = vmatpush.msra.mxu0 0.0
    %611 = vmatpush.msra.mxu0 0.0
    %612 = vmatpush.msra.mxu0 0.0
    %613 = vmatpush.msra.mxu0 0.0
    %614 = vmatpush.msra.mxu0 0.0
    %615 = vmatpush.msra.mxu0 0.0
    %616 = vmatpush.msra.mxu0 0.0
    %617 = vmatpush.msra.mxu0 0.0
    %618 = vmatpush.msra.mxu0 0.0
    %619 = vmatpush.msra.mxu0 0.0
    %620 = vmatpush.msra.mxu0 0.0
    %621 = vmatpush.msra.mxu0 %v432
    %622 = vmatpush.msra.mxu0 %v326
    %623 = vmatmul.f32.gmra.mxu0 %v396
    %v624 = vpop.f32.mrf.mxu0
    %v625 = vadd.f32 %v357, %v624
    %626 = vmatmul.f32.gmra.mxu0 %v399
    %v627 = vpop.f32.mrf.mxu0
    %v628 = vadd.f32 %v362, %v627
    %629 = vmatmul.f32.gmra.mxu0 %v402
    %v630 = vpop.f32.mrf.mxu0
    %v631 = vadd.f32 %v367, %v630
    %632 = vmatmul.f32.gmra.mxu0 %v405
    %v633 = vpop.f32.mrf.mxu0
    %v634 = vadd.f32 %v372, %v633
    %635 = vmatmul.f32.gmra.mxu0 %v408
    %v636 = vpop.f32.mrf.mxu0
    %v637 = vadd.f32 %v377, %v636
    %638 = vmatmul.f32.gmra.mxu0 %v411
    %v639 = vpop.f32.mrf.mxu0
    %v640 = vadd.f32 %v382, %v639
    %641 = vmatmul.f32.gmra.mxu0 %v414
    %v642 = vpop.f32.mrf.mxu0
    %v643 = vadd.f32 %v387, %v642
    %644 = vmatmul.f32.gmra.mxu0 %v417
    %v645 = vpop.f32.mrf.mxu0
    %v646 = vadd.f32 %v392, %v645
    %647 = vdwg.mxu0
    %648 = vmatpush.msra.mxu0 0.0
    %649 = vmatpush.msra.mxu0 0.0
    %650 = vmatpush.msra.mxu0 0.0
    %651 = vmatpush.msra.mxu0 0.0
    %652 = vmatpush.msra.mxu0 0.0
    %653 = vmatpush.msra.mxu0 0.0
    %654 = vmatpush.msra.mxu0 0.0
    %655 = vmatpush.msra.mxu0 0.0
    %656 = vmatpush.msra.mxu0 0.0
    %657 = vmatpush.msra.mxu0 0.0
    %658 = vmatpush.msra.mxu0 0.0
    %659 = vmatpush.msra.mxu0 0.0
    %660 = vmatpush.msra.mxu0 0.0
    %661 = vmatpush.msra.mxu0 0.0
    %662 = vmatpush.msra.mxu0 %v435
    %663 = vmatpush.msra.mxu0 %v327
    %664 = vmatmul.f32.gmra.mxu0 %v396
    %v665 = vpop.f32.mrf.mxu0
    %v666 = vadd.f32 %v357, %v665
    %667 = vmatmul.f32.gmra.mxu0 %v399
    %v668 = vpop.f32.mrf.mxu0
    %v669 = vadd.f32 %v362, %v668
    %670 = vmatmul.f32.gmra.mxu0 %v402
    %v671 = vpop.f32.mrf.mxu0
    %v672 = vadd.f32 %v367, %v671
    %673 = vmatmul.f32.gmra.mxu0 %v405
    %v674 = vpop.f32.mrf.mxu0
    %v675 = vadd.f32 %v372, %v674
    %676 = vmatmul.f32.gmra.mxu0 %v408
    %v677 = vpop.f32.mrf.mxu0
    %v678 = vadd.f32 %v377, %v677
    %679 = vmatmul.f32.gmra.mxu0 %v411
    %v680 = vpop.f32.mrf.mxu0
    %v681 = vadd.f32 %v382, %v680
    %682 = vmatmul.f32.gmra.mxu0 %v414
    %v683 = vpop.f32.mrf.mxu0
    %v684 = vadd.f32 %v387, %v683
    %685 = vmatmul.f32.gmra.mxu0 %v417
    %v686 = vpop.f32.mrf.mxu0
    %v687 = vadd.f32 %v392, %v686
    %688 = vdwg.mxu0
    %689 = vmatpush.msra.mxu0 0.0
    %690 = vmatpush.msra.mxu0 0.0
    %691 = vmatpush.msra.mxu0 0.0
    %692 = vmatpush.msra.mxu0 0.0
    %693 = vmatpush.msra.mxu0 0.0
    %694 = vmatpush.msra.mxu0 0.0
    %695 = vmatpush.msra.mxu0 0.0
    %696 = vmatpush.msra.mxu0 0.0
    %697 = vmatpush.msra.mxu0 0.0
    %698 = vmatpush.msra.mxu0 0.0
    %699 = vmatpush.msra.mxu0 0.0
    %700 = vmatpush.msra.mxu0 0.0
    %701 = vmatpush.msra.mxu0 0.0
    %702 = vmatpush.msra.mxu0 0.0
    %703 = vmatpush.msra.mxu0 %v438
    %704 = vmatpush.msra.mxu0 %v328
    %705 = vmatmul.f32.gmra.mxu0 %v396
    %v706 = vpop.f32.mrf.mxu0
    %v707 = vadd.f32 %v357, %v706
    %708 = vmatmul.f32.gmra.mxu0 %v399
    %v709 = vpop.f32.mrf.mxu0
    %v710 = vadd.f32 %v362, %v709
    %711 = vmatmul.f32.gmra.mxu0 %v402
    %v712 = vpop.f32.mrf.mxu0
    %v713 = vadd.f32 %v367, %v712
    %714 = vmatmul.f32.gmra.mxu0 %v405
    %v715 = vpop.f32.mrf.mxu0
    %v716 = vadd.f32 %v372, %v715
    %717 = vmatmul.f32.gmra.mxu0 %v408
    %v718 = vpop.f32.mrf.mxu0
    %v719 = vadd.f32 %v377, %v718
    %720 = vmatmul.f32.gmra.mxu0 %v411
    %v721 = vpop.f32.mrf.mxu0
    %v722 = vadd.f32 %v382, %v721
    %723 = vmatmul.f32.gmra.mxu0 %v414
    %v724 = vpop.f32.mrf.mxu0
    %v725 = vadd.f32 %v387, %v724
    %726 = vmatmul.f32.gmra.mxu0 %v417
    %v727 = vpop.f32.mrf.mxu0
    %v728 = vadd.f32 %v392, %v727
    %729 = vdwg.mxu0
    %730 = vmatpush.msra.mxu0 0.0
    %731 = vmatpush.msra.mxu0 0.0
    %732 = vmatpush.msra.mxu0 0.0
    %733 = vmatpush.msra.mxu0 0.0
    %734 = vmatpush.msra.mxu0 0.0
    %735 = vmatpush.msra.mxu0 0.0
    %736 = vmatpush.msra.mxu0 0.0
    %737 = vmatpush.msra.mxu0 0.0
    %738 = vmatpush.msra.mxu0 0.0
    %739 = vmatpush.msra.mxu0 0.0
    %740 = vmatpush.msra.mxu0 0.0
    %741 = vmatpush.msra.mxu0 0.0
    %742 = vmatpush.msra.mxu0 0.0
    %743 = vmatpush.msra.mxu0 0.0
    %744 = vmatpush.msra.mxu0 %v441
    %745 = vmatpush.msra.mxu0 %v329
    %746 = vmatmul.f32.gmra.mxu0 %v396
    %v747 = vpop.f32.mrf.mxu0
    %v748 = vadd.f32 %v357, %v747
    %749 = vmatmul.f32.gmra.mxu0 %v399
    %v750 = vpop.f32.mrf.mxu0
    %v751 = vadd.f32 %v362, %v750
    %752 = vmatmul.f32.gmra.mxu0 %v402
    %v753 = vpop.f32.mrf.mxu0
    %v754 = vadd.f32 %v367, %v753
    %755 = vmatmul.f32.gmra.mxu0 %v405
    %v756 = vpop.f32.mrf.mxu0
    %v757 = vadd.f32 %v372, %v756
    %758 = vmatmul.f32.gmra.mxu0 %v408
    %v759 = vpop.f32.mrf.mxu0
    %v760 = vadd.f32 %v377, %v759
    %761 = vmatmul.f32.gmra.mxu0 %v411
    %v762 = vpop.f32.mrf.mxu0
    %v763 = vadd.f32 %v382, %v762
    %764 = vmatmul.f32.gmra.mxu0 %v414
    %v765 = vpop.f32.mrf.mxu0
    %v766 = vadd.f32 %v387, %v765
    %767 = vmatmul.f32.gmra.mxu0 %v417
    %v768 = vpop.f32.mrf.mxu0
    %v769 = vadd.f32 %v392, %v768
    %770 = vdwg.mxu0
    %v771 = vmax.f32 %v461, 0.0
    %v772 = vmax.f32 %v502, 0.0
    %v773 = vmax.f32 %v543, 0.0
    %v774 = vmax.f32 %v584, 0.0
    %v775 = vmax.f32 %v625, 0.0
    %v776 = vmax.f32 %v666, 0.0
    %v777 = vmax.f32 %v707, 0.0
    %v778 = vmax.f32 %v748, 0.0
    %v779 = vmax.f32 %v464, 0.0
    %v780 = vmax.f32 %v505, 0.0
    %v781 = vmax.f32 %v546, 0.0
    %v782 = vmax.f32 %v587, 0.0
    %v783 = vmax.f32 %v628, 0.0
    %v784 = vmax.f32 %v669, 0.0
    %v785 = vmax.f32 %v710, 0.0
    %v786 = vmax.f32 %v751, 0.0
    %v787 = vmax.f32 %v467, 0.0
    %v788 = vmax.f32 %v508, 0.0
    %v789 = vmax.f32 %v549, 0.0
    %v790 = vmax.f32 %v590, 0.0
    %v791 = vmax.f32 %v631, 0.0
    %v792 = vmax.f32 %v672, 0.0
    %v793 = vmax.f32 %v713, 0.0
    %v794 = vmax.f32 %v754, 0.0
    %v795 = vmax.f32 %v470, 0.0
    %v796 = vmax.f32 %v511, 0.0
    %v797 = vmax.f32 %v552, 0.0
    %v798 = vmax.f32 %v593, 0.0
    %v799 = vmax.f32 %v634, 0.0
    %v800 = vmax.f32 %v675, 0.0
    %v801 = vmax.f32 %v716, 0.0
    %v802 = vmax.f32 %v757, 0.0
    %v803 = vmax.f32 %v473, 0.0
    %v804 = vmax.f32 %v514, 0.0
    %v805 = vmax.f32 %v555, 0.0
    %v806 = vmax.f32 %v596, 0.0
    %v807 = vmax.f32 %v637, 0.0
    %v808 = vmax.f32 %v678, 0.0
    %v809 = vmax.f32 %v719, 0.0
    %v810 = vmax.f32 %v760, 0.0
    %v811 = vmax.f32 %v476, 0.0
    %v812 = vmax.f32 %v517, 0.0
    %v813 = vmax.f32 %v558, 0.0
    %v814 = vmax.f32 %v599, 0.0
    %v815 = vmax.f32 %v640, 0.0
    %v816 = vmax.f32 %v681, 0.0
    %v817 = vmax.f32 %v722, 0.0
    %v818 = vmax.f32 %v763, 0.0
    %v819 = vmax.f32 %v479, 0.0
    %v820 = vmax.f32 %v520, 0.0
    %v821 = vmax.f32 %v561, 0.0
    %v822 = vmax.f32 %v602, 0.0
    %v823 = vmax.f32 %v643, 0.0
    %v824 = vmax.f32 %v684, 0.0
    %v825 = vmax.f32 %v725, 0.0
    %v826 = vmax.f32 %v766, 0.0
    %v827 = vmax.f32 %v482, 0.0
    %v828 = vmax.f32 %v523, 0.0
    %v829 = vmax.f32 %v564, 0.0
    %v830 = vmax.f32 %v605, 0.0
    %v831 = vmax.f32 %v646, 0.0
    %v832 = vmax.f32 %v687, 0.0
    %v833 = vmax.f32 %v728, 0.0
    %v834 = vmax.f32 %v769, 0.0
    %v835 = vld [vmem:[%s8] sm:$0xff]
    %v836 = vld [vmem:[%s8 + $0x8] sm:$0xff]
    %v837 = vld [vmem:[%s8 + $0x10] sm:$0xff]
    %v838 = vld [vmem:[%s8 + $0x18] sm:$0xff]
    %v839 = vld [vmem:[%s8 + $0x20] sm:$0xff]
    %v840 = vld [vmem:[%s8 + $0x28] sm:$0xff]
    %v841 = vld [vmem:[%s8 + $0x30] sm:$0xff]
    %v842 = vld [vmem:[%s8 + $0x38] sm:$0xff]
    %v843 = vld [vmem:[%s8 + $0x40] sm:$0xff]
    %v844 = vld [vmem:[%s8 + $0x48] sm:$0xff]
    %v845 = vld [vmem:[%s8 + $0x50] sm:$0xff]
    %v846 = vld [vmem:[%s8 + $0x58] sm:$0xff]
    %v847 = vld [vmem:[%s8 + $0x60] sm:$0xff]
    %v848 = vld [vmem:[%s8 + $0x68] sm:$0xff]
    %v849 = vld [vmem:[%s8 + $0x70] sm:$0xff]
    %v850 = vld [vmem:[%s8 + $0x78] sm:$0xff]
    %v851 = vld [vmem:[%s8 + $0x80] sm:$0xff]
    %v852 = vld [vmem:[%s8 + $0x88] sm:$0xff]
    %v853 = vld [vmem:[%s8 + $0x90] sm:$0xff]
    %v854 = vld [vmem:[%s8 + $0x98] sm:$0xff]
    %v855 = vld [vmem:[%s8 + $0xa0] sm:$0xff]
    %v856 = vld [vmem:[%s8 + $0xa8] sm:$0xff]
    %v857 = vld [vmem:[%s8 + $0xb0] sm:$0xff]
    %v858 = vld [vmem:[%s8 + $0xb8] sm:$0xff]
    %v859 = vld [vmem:[%s8 + $0xc0] sm:$0xff]
    %v860 = vld [vmem:[%s8 + $0xc8] sm:$0xff]
    %v861 = vld [vmem:[%s8 + $0xd0] sm:$0xff]
    %v862 = vld [vmem:[%s8 + $0xd8] sm:$0xff]
    %v863 = vld [vmem:[%s8 + $0xe0] sm:$0xff]
    %v864 = vld [vmem:[%s8 + $0xe8] sm:$0xff]
    %v865 = vld [vmem:[%s8 + $0xf0] sm:$0xff]
    %v866 = vld [vmem:[%s8 + $0xf8] sm:$0xff]
    %v867 = vld [vmem:[%s9] sm:$0xff]
    %v868 = vld [vmem:[%s9 + $0x8] sm:$0xff]
    %v869 = vld [vmem:[%s9 + $0x10] sm:$0xff]
    %v870 = vld [vmem:[%s9 + $0x18] sm:$0xff]
    %v871 = vld [vmem:[%s9 + $0x20] sm:$0xff]
    %v872 = vld [vmem:[%s9 + $0x28] sm:$0xff]
    %v873 = vld [vmem:[%s9 + $0x30] sm:$0xff]
    %v874 = vld [vmem:[%s9 + $0x38] sm:$0xff]
    %v875 = vld [vmem:[%s9 + $0x40] sm:$0xff]
    %v876 = vld [vmem:[%s9 + $0x48] sm:$0xff]
    %v877 = vld [vmem:[%s9 + $0x50] sm:$0xff]
    %v878 = vld [vmem:[%s9 + $0x58] sm:$0xff]
    %v879 = vld [vmem:[%s9 + $0x60] sm:$0xff]
    %v880 = vld [vmem:[%s9 + $0x68] sm:$0xff]
    %v881 = vld [vmem:[%s9 + $0x70] sm:$0xff]
    %v882 = vld [vmem:[%s9 + $0x78] sm:$0xff]
    %v883 = vld [vmem:[%s9 + $0x80] sm:$0xff]
    %v884 = vld [vmem:[%s9 + $0x88] sm:$0xff]
    %v885 = vld [vmem:[%s9 + $0x90] sm:$0xff]
    %v886 = vld [vmem:[%s9 + $0x98] sm:$0xff]
    %v887 = vld [vmem:[%s9 + $0xa0] sm:$0xff]
    %v888 = vld [vmem:[%s9 + $0xa8] sm:$0xff]
    %v889 = vld [vmem:[%s9 + $0xb0] sm:$0xff]
    %v890 = vld [vmem:[%s9 + $0xb8] sm:$0xff]
    %v891 = vld [vmem:[%s9 + $0xc0] sm:$0xff]
    %v892 = vld [vmem:[%s9 + $0xc8] sm:$0xff]
    %v893 = vld [vmem:[%s9 + $0xd0] sm:$0xff]
    %v894 = vld [vmem:[%s9 + $0xd8] sm:$0xff]
    %v895 = vld [vmem:[%s9 + $0xe0] sm:$0xff]
    %v896 = vld [vmem:[%s9 + $0xe8] sm:$0xff]
    %v897 = vld [vmem:[%s9 + $0xf0] sm:$0xff]
    %v898 = vld [vmem:[%s9 + $0xf8] sm:$0xff]
    %900 = vset.pattern.permute.xlu0 0
    %901 = vperm.xlu0 %900, %v867
    %v902 = vpop.permute.xlu0 %901
    %905 = vset.pattern.permute.xlu0 0
    %906 = vperm.xlu0 %905, %v868
    %v907 = vpop.permute.xlu0 %906
    %910 = vset.pattern.permute.xlu0 0
    %911 = vperm.xlu0 %910, %v869
    %v912 = vpop.permute.xlu0 %911
    %915 = vset.pattern.permute.xlu0 0
    %916 = vperm.xlu0 %915, %v870
    %v917 = vpop.permute.xlu0 %916
    %920 = vset.pattern.permute.xlu0 0
    %921 = vperm.xlu0 %920, %v871
    %v922 = vpop.permute.xlu0 %921
    %925 = vset.pattern.permute.xlu0 0
    %926 = vperm.xlu0 %925, %v872
    %v927 = vpop.permute.xlu0 %926
    %930 = vset.pattern.permute.xlu0 0
    %931 = vperm.xlu0 %930, %v873
    %v932 = vpop.permute.xlu0 %931
    %935 = vset.pattern.permute.xlu0 0
    %936 = vperm.xlu0 %935, %v874
    %v937 = vpop.permute.xlu0 %936
    %940 = vset.pattern.permute.xlu0 0
    %941 = vperm.xlu0 %940, %v875
    %v942 = vpop.permute.xlu0 %941
    %945 = vset.pattern.permute.xlu0 0
    %946 = vperm.xlu0 %945, %v876
    %v947 = vpop.permute.xlu0 %946
    %950 = vset.pattern.permute.xlu0 0
    %951 = vperm.xlu0 %950, %v877
    %v952 = vpop.permute.xlu0 %951
    %955 = vset.pattern.permute.xlu0 0
    %956 = vperm.xlu0 %955, %v878
    %v957 = vpop.permute.xlu0 %956
    %960 = vset.pattern.permute.xlu0 0
    %961 = vperm.xlu0 %960, %v879
    %v962 = vpop.permute.xlu0 %961
    %965 = vset.pattern.permute.xlu0 0
    %966 = vperm.xlu0 %965, %v880
    %v967 = vpop.permute.xlu0 %966
    %970 = vset.pattern.permute.xlu0 0
    %971 = vperm.xlu0 %970, %v881
    %v972 = vpop.permute.xlu0 %971
    %975 = vset.pattern.permute.xlu0 0
    %976 = vperm.xlu0 %975, %v882
    %v977 = vpop.permute.xlu0 %976
    %980 = vset.pattern.permute.xlu0 0
    %981 = vperm.xlu0 %980, %v883
    %v982 = vpop.permute.xlu0 %981
    %985 = vset.pattern.permute.xlu0 0
    %986 = vperm.xlu0 %985, %v884
    %v987 = vpop.permute.xlu0 %986
    %990 = vset.pattern.permute.xlu0 0
    %991 = vperm.xlu0 %990, %v885
    %v992 = vpop.permute.xlu0 %991
    %995 = vset.pattern.permute.xlu0 0
    %996 = vperm.xlu0 %995, %v886
    %v997 = vpop.permute.xlu0 %996
    %1000 = vset.pattern.permute.xlu0 0
    %1001 = vperm.xlu0 %1000, %v887
    %v1002 = vpop.permute.xlu0 %1001
    %1005 = vset.pattern.permute.xlu0 0
    %1006 = vperm.xlu0 %1005, %v888
    %v1007 = vpop.permute.xlu0 %1006
    %1010 = vset.pattern.permute.xlu0 0
    %1011 = vperm.xlu0 %1010, %v889
    %v1012 = vpop.permute.xlu0 %1011
    %1015 = vset.pattern.permute.xlu0 0
    %1016 = vperm.xlu0 %1015, %v890
    %v1017 = vpop.permute.xlu0 %1016
    %1020 = vset.pattern.permute.xlu0 0
    %1021 = vperm.xlu0 %1020, %v891
    %v1022 = vpop.permute.xlu0 %1021
    %1025 = vset.pattern.permute.xlu0 0
    %1026 = vperm.xlu0 %1025, %v892
    %v1027 = vpop.permute.xlu0 %1026
    %1030 = vset.pattern.permute.xlu0 0
    %1031 = vperm.xlu0 %1030, %v893
    %v1032 = vpop.permute.xlu0 %1031
    %1035 = vset.pattern.permute.xlu0 0
    %1036 = vperm.xlu0 %1035, %v894
    %v1037 = vpop.permute.xlu0 %1036
    %1040 = vset.pattern.permute.xlu0 0
    %1041 = vperm.xlu0 %1040, %v895
    %v1042 = vpop.permute.xlu0 %1041
    %1045 = vset.pattern.permute.xlu0 0
    %1046 = vperm.xlu0 %1045, %v896
    %v1047 = vpop.permute.xlu0 %1046
    %1050 = vset.pattern.permute.xlu0 0
    %1051 = vperm.xlu0 %1050, %v897
    %v1052 = vpop.permute.xlu0 %1051
    %1055 = vset.pattern.permute.xlu0 0
    %1056 = vperm.xlu0 %1055, %v898
    %v1057 = vpop.permute.xlu0 %1056
    %vm1059 = vcmask 523264
    %v1061 = vsel %vm1059, %v835, 0
    %v1064 = vsel %vm1059, %v836, 0
    %v1067 = vsel %vm1059, %v837, 0
    %v1070 = vsel %vm1059, %v838, 0
    %v1073 = vsel %vm1059, %v839, 0
    %v1076 = vsel %vm1059, %v840, 0
    %v1079 = vsel %vm1059, %v841, 0
    %v1082 = vsel %vm1059, %v842, 0
    %v1085 = vsel %vm1059, %v843, 0
    %v1088 = vsel %vm1059, %v844, 0
    %v1091 = vsel %vm1059, %v845, 0
    %v1094 = vsel %vm1059, %v846, 0
    %v1097 = vsel %vm1059, %v847, 0
    %v1100 = vsel %vm1059, %v848, 0
    %v1103 = vsel %vm1059, %v849, 0
    %v1106 = vsel %vm1059, %v850, 0
    %v1109 = vsel %vm1059, %v851, 0
    %v1112 = vsel %vm1059, %v852, 0
    %v1115 = vsel %vm1059, %v853, 0
    %v1118 = vsel %vm1059, %v854, 0
    %v1121 = vsel %vm1059, %v855, 0
    %v1124 = vsel %vm1059, %v856, 0
    %v1127 = vsel %vm1059, %v857, 0
    %v1130 = vsel %vm1059, %v858, 0
    %v1133 = vsel %vm1059, %v859, 0
    %v1136 = vsel %vm1059, %v860, 0
    %v1139 = vsel %vm1059, %v861, 0
    %v1142 = vsel %vm1059, %v862, 0
    %v1145 = vsel %vm1059, %v863, 0
    %v1148 = vsel %vm1059, %v864, 0
    %v1151 = vsel %vm1059, %v865, 0
    %v1154 = vsel %vm1059, %v866, 0
    %1156 = vmatpush.msra.mxu0 0.0
    %1157 = vmatpush.msra.mxu0 0.0
    %1158 = vmatpush.msra.mxu0 0.0
    %1159 = vmatpush.msra.mxu0 0.0
    %1160 = vmatpush.msra.mxu0 0.0
    %1161 = vmatpush.msra.mxu0 0.0
    %1162 = vmatpush.msra.mxu0 0.0
    %1163 = vmatpush.msra.mxu0 0.0
    %1164 = vmatpush.msra.mxu0 %v827
    %1165 = vmatpush.msra.mxu0 %v819
    %1166 = vmatpush.msra.mxu0 %v811
    %1167 = vmatpush.msra.mxu0 %v803
    %1168 = vmatpush.msra.mxu0 %v795
    %1169 = vmatpush.msra.mxu0 %v787
    %1170 = vmatpush.msra.mxu0 %v779
    %1171 = vmatpush.msra.mxu0 %v771
    %1172 = vmatmul.f32.gmra.mxu0 %v1061
    %v1173 = vpop.f32.mrf.mxu0
    %v1174 = vadd.f32 %v902, %v1173
    %1175 = vmatmul.f32.gmra.mxu0 %v1064
    %v1176 = vpop.f32.mrf.mxu0
    %v1177 = vadd.f32 %v907, %v1176
    %1178 = vmatmul.f32.gmra.mxu0 %v1067
    %v1179 = vpop.f32.mrf.mxu0
    %v1180 = vadd.f32 %v912, %v1179
    %1181 = vmatmul.f32.gmra.mxu0 %v1070
    %v1182 = vpop.f32.mrf.mxu0
    %v1183 = vadd.f32 %v917, %v1182
    %1184 = vmatmul.f32.gmra.mxu0 %v1073
    %v1185 = vpop.f32.mrf.mxu0
    %v1186 = vadd.f32 %v922, %v1185
    %1187 = vmatmul.f32.gmra.mxu0 %v1076
    %v1188 = vpop.f32.mrf.mxu0
    %v1189 = vadd.f32 %v927, %v1188
    %1190 = vmatmul.f32.gmra.mxu0 %v1079
    %v1191 = vpop.f32.mrf.mxu0
    %v1192 = vadd.f32 %v932, %v1191
    %1193 = vmatmul.f32.gmra.mxu0 %v1082
    %v1194 = vpop.f32.mrf.mxu0
    %v1195 = vadd.f32 %v937, %v1194
    %1196 = vmatmul.f32.gmra.mxu0 %v1085
    %v1197 = vpop.f32.mrf.mxu0
    %v1198 = vadd.f32 %v942, %v1197
    %1199 = vmatmul.f32.gmra.mxu0 %v1088
    %v1200 = vpop.f32.mrf.mxu0
    %v1201 = vadd.f32 %v947, %v1200
    %1202 = vmatmul.f32.gmra.mxu0 %v1091
    %v1203 = vpop.f32.mrf.mxu0
    %v1204 = vadd.f32 %v952, %v1203
    %1205 = vmatmul.f32.gmra.mxu0 %v1094
    %v1206 = vpop.f32.mrf.mxu0
    %v1207 = vadd.f32 %v957, %v1206
    %1208 = vmatmul.f32.gmra.mxu0 %v1097
    %v1209 = vpop.f32.mrf.mxu0
    %v1210 = vadd.f32 %v962, %v1209
    %1211 = vmatmul.f32.gmra.mxu0 %v1100
    %v1212 = vpop.f32.mrf.mxu0
    %v1213 = vadd.f32 %v967, %v1212
    %1214 = vmatmul.f32.gmra.mxu0 %v1103
    %v1215 = vpop.f32.mrf.mxu0
    %v1216 = vadd.f32 %v972, %v1215
    %1217 = vmatmul.f32.gmra.mxu0 %v1106
    %v1218 = vpop.f32.mrf.mxu0
    %v1219 = vadd.f32 %v977, %v1218
    %1220 = vmatmul.f32.gmra.mxu0 %v1109
    %v1221 = vpop.f32.mrf.mxu0
    %v1222 = vadd.f32 %v982, %v1221
    %1223 = vmatmul.f32.gmra.mxu0 %v1112
    %v1224 = vpop.f32.mrf.mxu0
    %v1225 = vadd.f32 %v987, %v1224
    %1226 = vmatmul.f32.gmra.mxu0 %v1115
    %v1227 = vpop.f32.mrf.mxu0
    %v1228 = vadd.f32 %v992, %v1227
    %1229 = vmatmul.f32.gmra.mxu0 %v1118
    %v1230 = vpop.f32.mrf.mxu0
    %v1231 = vadd.f32 %v997, %v1230
    %1232 = vmatmul.f32.gmra.mxu0 %v1121
    %v1233 = vpop.f32.mrf.mxu0
    %v1234 = vadd.f32 %v1002, %v1233
    %1235 = vmatmul.f32.gmra.mxu0 %v1124
    %v1236 = vpop.f32.mrf.mxu0
    %v1237 = vadd.f32 %v1007, %v1236
    %1238 = vmatmul.f32.gmra.mxu0 %v1127
    %v1239 = vpop.f32.mrf.mxu0
    %v1240 = vadd.f32 %v1012, %v1239
    %1241 = vmatmul.f32.gmra.mxu0 %v1130
    %v1242 = vpop.f32.mrf.mxu0
    %v1243 = vadd.f32 %v1017, %v1242
    %1244 = vmatmul.f32.gmra.mxu0 %v1133
    %v1245 = vpop.f32.mrf.mxu0
    %v1246 = vadd.f32 %v1022, %v1245
    %1247 = vmatmul.f32.gmra.mxu0 %v1136
    %v1248 = vpop.f32.mrf.mxu0
    %v1249 = vadd.f32 %v1027, %v1248
    %1250 = vmatmul.f32.gmra.mxu0 %v1139
    %v1251 = vpop.f32.mrf.mxu0
    %v1252 = vadd.f32 %v1032, %v1251
    %1253 = vmatmul.f32.gmra.mxu0 %v1142
    %v1254 = vpop.f32.mrf.mxu0
    %v1255 = vadd.f32 %v1037, %v1254
    %1256 = vmatmul.f32.gmra.mxu0 %v1145
    %v1257 = vpop.f32.mrf.mxu0
    %v1258 = vadd.f32 %v1042, %v1257
    %1259 = vmatmul.f32.gmra.mxu0 %v1148
    %v1260 = vpop.f32.mrf.mxu0
    %v1261 = vadd.f32 %v1047, %v1260
    %1262 = vmatmul.f32.gmra.mxu0 %v1151
    %v1263 = vpop.f32.mrf.mxu0
    %v1264 = vadd.f32 %v1052, %v1263
    %1265 = vmatmul.f32.gmra.mxu0 %v1154
    %v1266 = vpop.f32.mrf.mxu0
    %v1267 = vadd.f32 %v1057, %v1266
    %1268 = vdwg.mxu0
    %1269 = vmatpush.msra.mxu0 0.0
    %1270 = vmatpush.msra.mxu0 0.0
    %1271 = vmatpush.msra.mxu0 0.0
    %1272 = vmatpush.msra.mxu0 0.0
    %1273 = vmatpush.msra.mxu0 0.0
    %1274 = vmatpush.msra.mxu0 0.0
    %1275 = vmatpush.msra.mxu0 0.0
    %1276 = vmatpush.msra.mxu0 0.0
    %1277 = vmatpush.msra.mxu0 %v828
    %1278 = vmatpush.msra.mxu0 %v820
    %1279 = vmatpush.msra.mxu0 %v812
    %1280 = vmatpush.msra.mxu0 %v804
    %1281 = vmatpush.msra.mxu0 %v796
    %1282 = vmatpush.msra.mxu0 %v788
    %1283 = vmatpush.msra.mxu0 %v780
    %1284 = vmatpush.msra.mxu0 %v772
    %1285 = vmatmul.f32.gmra.mxu0 %v1061
    %v1286 = vpop.f32.mrf.mxu0
    %v1287 = vadd.f32 %v902, %v1286
    %1288 = vmatmul.f32.gmra.mxu0 %v1064
    %v1289 = vpop.f32.mrf.mxu0
    %v1290 = vadd.f32 %v907, %v1289
    %1291 = vmatmul.f32.gmra.mxu0 %v1067
    %v1292 = vpop.f32.mrf.mxu0
    %v1293 = vadd.f32 %v912, %v1292
    %1294 = vmatmul.f32.gmra.mxu0 %v1070
    %v1295 = vpop.f32.mrf.mxu0
    %v1296 = vadd.f32 %v917, %v1295
    %1297 = vmatmul.f32.gmra.mxu0 %v1073
    %v1298 = vpop.f32.mrf.mxu0
    %v1299 = vadd.f32 %v922, %v1298
    %1300 = vmatmul.f32.gmra.mxu0 %v1076
    %v1301 = vpop.f32.mrf.mxu0
    %v1302 = vadd.f32 %v927, %v1301
    %1303 = vmatmul.f32.gmra.mxu0 %v1079
    %v1304 = vpop.f32.mrf.mxu0
    %v1305 = vadd.f32 %v932, %v1304
    %1306 = vmatmul.f32.gmra.mxu0 %v1082
    %v1307 = vpop.f32.mrf.mxu0
    %v1308 = vadd.f32 %v937, %v1307
    %1309 = vmatmul.f32.gmra.mxu0 %v1085
    %v1310 = vpop.f32.mrf.mxu0
    %v1311 = vadd.f32 %v942, %v1310
    %1312 = vmatmul.f32.gmra.mxu0 %v1088
    %v1313 = vpop.f32.mrf.mxu0
    %v1314 = vadd.f32 %v947, %v1313
    %1315 = vmatmul.f32.gmra.mxu0 %v1091
    %v1316 = vpop.f32.mrf.mxu0
    %v1317 = vadd.f32 %v952, %v1316
    %1318 = vmatmul.f32.gmra.mxu0 %v1094
    %v1319 = vpop.f32.mrf.mxu0
    %v1320 = vadd.f32 %v957, %v1319
    %1321 = vmatmul.f32.gmra.mxu0 %v1097
    %v1322 = vpop.f32.mrf.mxu0
    %v1323 = vadd.f32 %v962, %v1322
    %1324 = vmatmul.f32.gmra.mxu0 %v1100
    %v1325 = vpop.f32.mrf.mxu0
    %v1326 = vadd.f32 %v967, %v1325
    %1327 = vmatmul.f32.gmra.mxu0 %v1103
    %v1328 = vpop.f32.mrf.mxu0
    %v1329 = vadd.f32 %v972, %v1328
    %1330 = vmatmul.f32.gmra.mxu0 %v1106
    %v1331 = vpop.f32.mrf.mxu0
    %v1332 = vadd.f32 %v977, %v1331
    %1333 = vmatmul.f32.gmra.mxu0 %v1109
    %v1334 = vpop.f32.mrf.mxu0
    %v1335 = vadd.f32 %v982, %v1334
    %1336 = vmatmul.f32.gmra.mxu0 %v1112
    %v1337 = vpop.f32.mrf.mxu0
    %v1338 = vadd.f32 %v987, %v1337
    %1339 = vmatmul.f32.gmra.mxu0 %v1115
    %v1340 = vpop.f32.mrf.mxu0
    %v1341 = vadd.f32 %v992, %v1340
    %1342 = vmatmul.f32.gmra.mxu0 %v1118
    %v1343 = vpop.f32.mrf.mxu0
    %v1344 = vadd.f32 %v997, %v1343
    %1345 = vmatmul.f32.gmra.mxu0 %v1121
    %v1346 = vpop.f32.mrf.mxu0
    %v1347 = vadd.f32 %v1002, %v1346
    %1348 = vmatmul.f32.gmra.mxu0 %v1124
    %v1349 = vpop.f32.mrf.mxu0
    %v1350 = vadd.f32 %v1007, %v1349
    %1351 = vmatmul.f32.gmra.mxu0 %v1127
    %v1352 = vpop.f32.mrf.mxu0
    %v1353 = vadd.f32 %v1012, %v1352
    %1354 = vmatmul.f32.gmra.mxu0 %v1130
    %v1355 = vpop.f32.mrf.mxu0
    %v1356 = vadd.f32 %v1017, %v1355
    %1357 = vmatmul.f32.gmra.mxu0 %v1133
    %v1358 = vpop.f32.mrf.mxu0
    %v1359 = vadd.f32 %v1022, %v1358
    %1360 = vmatmul.f32.gmra.mxu0 %v1136
    %v1361 = vpop.f32.mrf.mxu0
    %v1362 = vadd.f32 %v1027, %v1361
    %1363 = vmatmul.f32.gmra.mxu0 %v1139
    %v1364 = vpop.f32.mrf.mxu0
    %v1365 = vadd.f32 %v1032, %v1364
    %1366 = vmatmul.f32.gmra.mxu0 %v1142
    %v1367 = vpop.f32.mrf.mxu0
    %v1368 = vadd.f32 %v1037, %v1367
    %1369 = vmatmul.f32.gmra.mxu0 %v1145
    %v1370 = vpop.f32.mrf.mxu0
    %v1371 = vadd.f32 %v1042, %v1370
    %1372 = vmatmul.f32.gmra.mxu0 %v1148
    %v1373 = vpop.f32.mrf.mxu0
    %v1374 = vadd.f32 %v1047, %v1373
    %1375 = vmatmul.f32.gmra.mxu0 %v1151
    %v1376 = vpop.f32.mrf.mxu0
    %v1377 = vadd.f32 %v1052, %v1376
    %1378 = vmatmul.f32.gmra.mxu0 %v1154
    %v1379 = vpop.f32.mrf.mxu0
    %v1380 = vadd.f32 %v1057, %v1379
    %1381 = vdwg.mxu0
    %1382 = vmatpush.msra.mxu0 0.0
    %1383 = vmatpush.msra.mxu0 0.0
    %1384 = vmatpush.msra.mxu0 0.0
    %1385 = vmatpush.msra.mxu0 0.0
    %1386 = vmatpush.msra.mxu0 0.0
    %1387 = vmatpush.msra.mxu0 0.0
    %1388 = vmatpush.msra.mxu0 0.0
    %1389 = vmatpush.msra.mxu0 0.0
    %1390 = vmatpush.msra.mxu0 %v829
    %1391 = vmatpush.msra.mxu0 %v821
    %1392 = vmatpush.msra.mxu0 %v813
    %1393 = vmatpush.msra.mxu0 %v805
    %1394 = vmatpush.msra.mxu0 %v797
    %1395 = vmatpush.msra.mxu0 %v789
    %1396 = vmatpush.msra.mxu0 %v781
    %1397 = vmatpush.msra.mxu0 %v773
    %1398 = vmatmul.f32.gmra.mxu0 %v1061
    %v1399 = vpop.f32.mrf.mxu0
    %v1400 = vadd.f32 %v902, %v1399
    %1401 = vmatmul.f32.gmra.mxu0 %v1064
    %v1402 = vpop.f32.mrf.mxu0
    %v1403 = vadd.f32 %v907, %v1402
    %1404 = vmatmul.f32.gmra.mxu0 %v1067
    %v1405 = vpop.f32.mrf.mxu0
    %v1406 = vadd.f32 %v912, %v1405
    %1407 = vmatmul.f32.gmra.mxu0 %v1070
    %v1408 = vpop.f32.mrf.mxu0
    %v1409 = vadd.f32 %v917, %v1408
    %1410 = vmatmul.f32.gmra.mxu0 %v1073
    %v1411 = vpop.f32.mrf.mxu0
    %v1412 = vadd.f32 %v922, %v1411
    %1413 = vmatmul.f32.gmra.mxu0 %v1076
    %v1414 = vpop.f32.mrf.mxu0
    %v1415 = vadd.f32 %v927, %v1414
    %1416 = vmatmul.f32.gmra.mxu0 %v1079
    %v1417 = vpop.f32.mrf.mxu0
    %v1418 = vadd.f32 %v932, %v1417
    %1419 = vmatmul.f32.gmra.mxu0 %v1082
    %v1420 = vpop.f32.mrf.mxu0
    %v1421 = vadd.f32 %v937, %v1420
    %1422 = vmatmul.f32.gmra.mxu0 %v1085
    %v1423 = vpop.f32.mrf.mxu0
    %v1424 = vadd.f32 %v942, %v1423
    %1425 = vmatmul.f32.gmra.mxu0 %v1088
    %v1426 = vpop.f32.mrf.mxu0
    %v1427 = vadd.f32 %v947, %v1426
    %1428 = vmatmul.f32.gmra.mxu0 %v1091
    %v1429 = vpop.f32.mrf.mxu0
    %v1430 = vadd.f32 %v952, %v1429
    %1431 = vmatmul.f32.gmra.mxu0 %v1094
    %v1432 = vpop.f32.mrf.mxu0
    %v1433 = vadd.f32 %v957, %v1432
    %1434 = vmatmul.f32.gmra.mxu0 %v1097
    %v1435 = vpop.f32.mrf.mxu0
    %v1436 = vadd.f32 %v962, %v1435
    %1437 = vmatmul.f32.gmra.mxu0 %v1100
    %v1438 = vpop.f32.mrf.mxu0
    %v1439 = vadd.f32 %v967, %v1438
    %1440 = vmatmul.f32.gmra.mxu0 %v1103
    %v1441 = vpop.f32.mrf.mxu0
    %v1442 = vadd.f32 %v972, %v1441
    %1443 = vmatmul.f32.gmra.mxu0 %v1106
    %v1444 = vpop.f32.mrf.mxu0
    %v1445 = vadd.f32 %v977, %v1444
    %1446 = vmatmul.f32.gmra.mxu0 %v1109
    %v1447 = vpop.f32.mrf.mxu0
    %v1448 = vadd.f32 %v982, %v1447
    %1449 = vmatmul.f32.gmra.mxu0 %v1112
    %v1450 = vpop.f32.mrf.mxu0
    %v1451 = vadd.f32 %v987, %v1450
    %1452 = vmatmul.f32.gmra.mxu0 %v1115
    %v1453 = vpop.f32.mrf.mxu0
    %v1454 = vadd.f32 %v992, %v1453
    %1455 = vmatmul.f32.gmra.mxu0 %v1118
    %v1456 = vpop.f32.mrf.mxu0
    %v1457 = vadd.f32 %v997, %v1456
    %1458 = vmatmul.f32.gmra.mxu0 %v1121
    %v1459 = vpop.f32.mrf.mxu0
    %v1460 = vadd.f32 %v1002, %v1459
    %1461 = vmatmul.f32.gmra.mxu0 %v1124
    %v1462 = vpop.f32.mrf.mxu0
    %v1463 = vadd.f32 %v1007, %v1462
    %1464 = vmatmul.f32.gmra.mxu0 %v1127
    %v1465 = vpop.f32.mrf.mxu0
    %v1466 = vadd.f32 %v1012, %v1465
    %1467 = vmatmul.f32.gmra.mxu0 %v1130
    %v1468 = vpop.f32.mrf.mxu0
    %v1469 = vadd.f32 %v1017, %v1468
    %1470 = vmatmul.f32.gmra.mxu0 %v1133
    %v1471 = vpop.f32.mrf.mxu0
    %v1472 = vadd.f32 %v1022, %v1471
    %1473 = vmatmul.f32.gmra.mxu0 %v1136
    %v1474 = vpop.f32.mrf.mxu0
    %v1475 = vadd.f32 %v1027, %v1474
    %1476 = vmatmul.f32.gmra.mxu0 %v1139
    %v1477 = vpop.f32.mrf.mxu0
    %v1478 = vadd.f32 %v1032, %v1477
    %1479 = vmatmul.f32.gmra.mxu0 %v1142
    %v1480 = vpop.f32.mrf.mxu0
    %v1481 = vadd.f32 %v1037, %v1480
    %1482 = vmatmul.f32.gmra.mxu0 %v1145
    %v1483 = vpop.f32.mrf.mxu0
    %v1484 = vadd.f32 %v1042, %v1483
    %1485 = vmatmul.f32.gmra.mxu0 %v1148
    %v1486 = vpop.f32.mrf.mxu0
    %v1487 = vadd.f32 %v1047, %v1486
    %1488 = vmatmul.f32.gmra.mxu0 %v1151
    %v1489 = vpop.f32.mrf.mxu0
    %v1490 = vadd.f32 %v1052, %v1489
    %1491 = vmatmul.f32.gmra.mxu0 %v1154
    %v1492 = vpop.f32.mrf.mxu0
    %v1493 = vadd.f32 %v1057, %v1492
    %1494 = vdwg.mxu0
    %1495 = vmatpush.msra.mxu0 0.0
    %1496 = vmatpush.msra.mxu0 0.0
    %1497 = vmatpush.msra.mxu0 0.0
    %1498 = vmatpush.msra.mxu0 0.0
    %1499 = vmatpush.msra.mxu0 0.0
    %1500 = vmatpush.msra.mxu0 0.0
    %1501 = vmatpush.msra.mxu0 0.0
    %1502 = vmatpush.msra.mxu0 0.0
    %1503 = vmatpush.msra.mxu0 %v830
    %1504 = vmatpush.msra.mxu0 %v822
    %1505 = vmatpush.msra.mxu0 %v814
    %1506 = vmatpush.msra.mxu0 %v806
    %1507 = vmatpush.msra.mxu0 %v798
    %1508 = vmatpush.msra.mxu0 %v790
    %1509 = vmatpush.msra.mxu0 %v782
    %1510 = vmatpush.msra.mxu0 %v774
    %1511 = vmatmul.f32.gmra.mxu0 %v1061
    %v1512 = vpop.f32.mrf.mxu0
    %v1513 = vadd.f32 %v902, %v1512
    %1514 = vmatmul.f32.gmra.mxu0 %v1064
    %v1515 = vpop.f32.mrf.mxu0
    %v1516 = vadd.f32 %v907, %v1515
    %1517 = vmatmul.f32.gmra.mxu0 %v1067
    %v1518 = vpop.f32.mrf.mxu0
    %v1519 = vadd.f32 %v912, %v1518
    %1520 = vmatmul.f32.gmra.mxu0 %v1070
    %v1521 = vpop.f32.mrf.mxu0
    %v1522 = vadd.f32 %v917, %v1521
    %1523 = vmatmul.f32.gmra.mxu0 %v1073
    %v1524 = vpop.f32.mrf.mxu0
    %v1525 = vadd.f32 %v922, %v1524
    %1526 = vmatmul.f32.gmra.mxu0 %v1076
    %v1527 = vpop.f32.mrf.mxu0
    %v1528 = vadd.f32 %v927, %v1527
    %1529 = vmatmul.f32.gmra.mxu0 %v1079
    %v1530 = vpop.f32.mrf.mxu0
    %v1531 = vadd.f32 %v932, %v1530
    %1532 = vmatmul.f32.gmra.mxu0 %v1082
    %v1533 = vpop.f32.mrf.mxu0
    %v1534 = vadd.f32 %v937, %v1533
    %1535 = vmatmul.f32.gmra.mxu0 %v1085
    %v1536 = vpop.f32.mrf.mxu0
    %v1537 = vadd.f32 %v942, %v1536
    %1538 = vmatmul.f32.gmra.mxu0 %v1088
    %v1539 = vpop.f32.mrf.mxu0
    %v1540 = vadd.f32 %v947, %v1539
    %1541 = vmatmul.f32.gmra.mxu0 %v1091
    %v1542 = vpop.f32.mrf.mxu0
    %v1543 = vadd.f32 %v952, %v1542
    %1544 = vmatmul.f32.gmra.mxu0 %v1094
    %v1545 = vpop.f32.mrf.mxu0
    %v1546 = vadd.f32 %v957, %v1545
    %1547 = vmatmul.f32.gmra.mxu0 %v1097
    %v1548 = vpop.f32.mrf.mxu0
    %v1549 = vadd.f32 %v962, %v1548
    %1550 = vmatmul.f32.gmra.mxu0 %v1100
    %v1551 = vpop.f32.mrf.mxu0
    %v1552 = vadd.f32 %v967, %v1551
    %1553 = vmatmul.f32.gmra.mxu0 %v1103
    %v1554 = vpop.f32.mrf.mxu0
    %v1555 = vadd.f32 %v972, %v1554
    %1556 = vmatmul.f32.gmra.mxu0 %v1106
    %v1557 = vpop.f32.mrf.mxu0
    %v1558 = vadd.f32 %v977, %v1557
    %1559 = vmatmul.f32.gmra.mxu0 %v1109
    %v1560 = vpop.f32.mrf.mxu0
    %v1561 = vadd.f32 %v982, %v1560
    %1562 = vmatmul.f32.gmra.mxu0 %v1112
    %v1563 = vpop.f32.mrf.mxu0
    %v1564 = vadd.f32 %v987, %v1563
    %1565 = vmatmul.f32.gmra.mxu0 %v1115
    %v1566 = vpop.f32.mrf.mxu0
    %v1567 = vadd.f32 %v992, %v1566
    %1568 = vmatmul.f32.gmra.mxu0 %v1118
    %v1569 = vpop.f32.mrf.mxu0
    %v1570 = vadd.f32 %v997, %v1569
    %1571 = vmatmul.f32.gmra.mxu0 %v1121
    %v1572 = vpop.f32.mrf.mxu0
    %v1573 = vadd.f32 %v1002, %v1572
    %1574 = vmatmul.f32.gmra.mxu0 %v1124
    %v1575 = vpop.f32.mrf.mxu0
    %v1576 = vadd.f32 %v1007, %v1575
    %1577 = vmatmul.f32.gmra.mxu0 %v1127
    %v1578 = vpop.f32.mrf.mxu0
    %v1579 = vadd.f32 %v1012, %v1578
    %1580 = vmatmul.f32.gmra.mxu0 %v1130
    %v1581 = vpop.f32.mrf.mxu0
    %v1582 = vadd.f32 %v1017, %v1581
    %1583 = vmatmul.f32.gmra.mxu0 %v1133
    %v1584 = vpop.f32.mrf.mxu0
    %v1585 = vadd.f32 %v1022, %v1584
    %1586 = vmatmul.f32.gmra.mxu0 %v1136
    %v1587 = vpop.f32.mrf.mxu0
    %v1588 = vadd.f32 %v1027, %v1587
    %1589 = vmatmul.f32.gmra.mxu0 %v1139
    %v1590 = vpop.f32.mrf.mxu0
    %v1591 = vadd.f32 %v1032, %v1590
    %1592 = vmatmul.f32.gmra.mxu0 %v1142
    %v1593 = vpop.f32.mrf.mxu0
    %v1594 = vadd.f32 %v1037, %v1593
    %1595 = vmatmul.f32.gmra.mxu0 %v1145
    %v1596 = vpop.f32.mrf.mxu0
    %v1597 = vadd.f32 %v1042, %v1596
    %1598 = vmatmul.f32.gmra.mxu0 %v1148
    %v1599 = vpop.f32.mrf.mxu0
    %v1600 = vadd.f32 %v1047, %v1599
    %1601 = vmatmul.f32.gmra.mxu0 %v1151
    %v1602 = vpop.f32.mrf.mxu0
    %v1603 = vadd.f32 %v1052, %v1602
    %1604 = vmatmul.f32.gmra.mxu0 %v1154
    %v1605 = vpop.f32.mrf.mxu0
    %v1606 = vadd.f32 %v1057, %v1605
    %1607 = vdwg.mxu0
    %1608 = vmatpush.msra.mxu0 0.0
    %1609 = vmatpush.msra.mxu0 0.0
    %1610 = vmatpush.msra.mxu0 0.0
    %1611 = vmatpush.msra.mxu0 0.0
    %1612 = vmatpush.msra.mxu0 0.0
    %1613 = vmatpush.msra.mxu0 0.0
    %1614 = vmatpush.msra.mxu0 0.0
    %1615 = vmatpush.msra.mxu0 0.0
    %1616 = vmatpush.msra.mxu0 %v831
    %1617 = vmatpush.msra.mxu0 %v823
    %1618 = vmatpush.msra.mxu0 %v815
    %1619 = vmatpush.msra.mxu0 %v807
    %1620 = vmatpush.msra.mxu0 %v799
    %1621 = vmatpush.msra.mxu0 %v791
    %1622 = vmatpush.msra.mxu0 %v783
    %1623 = vmatpush.msra.mxu0 %v775
    %1624 = vmatmul.f32.gmra.mxu0 %v1061
    %v1625 = vpop.f32.mrf.mxu0
    %v1626 = vadd.f32 %v902, %v1625
    %1627 = vmatmul.f32.gmra.mxu0 %v1064
    %v1628 = vpop.f32.mrf.mxu0
    %v1629 = vadd.f32 %v907, %v1628
    %1630 = vmatmul.f32.gmra.mxu0 %v1067
    %v1631 = vpop.f32.mrf.mxu0
    %v1632 = vadd.f32 %v912, %v1631
    %1633 = vmatmul.f32.gmra.mxu0 %v1070
    %v1634 = vpop.f32.mrf.mxu0
    %v1635 = vadd.f32 %v917, %v1634
    %1636 = vmatmul.f32.gmra.mxu0 %v1073
    %v1637 = vpop.f32.mrf.mxu0
    %v1638 = vadd.f32 %v922, %v1637
    %1639 = vmatmul.f32.gmra.mxu0 %v1076
    %v1640 = vpop.f32.mrf.mxu0
    %v1641 = vadd.f32 %v927, %v1640
    %1642 = vmatmul.f32.gmra.mxu0 %v1079
    %v1643 = vpop.f32.mrf.mxu0
    %v1644 = vadd.f32 %v932, %v1643
    %1645 = vmatmul.f32.gmra.mxu0 %v1082
    %v1646 = vpop.f32.mrf.mxu0
    %v1647 = vadd.f32 %v937, %v1646
    %1648 = vmatmul.f32.gmra.mxu0 %v1085
    %v1649 = vpop.f32.mrf.mxu0
    %v1650 = vadd.f32 %v942, %v1649
    %1651 = vmatmul.f32.gmra.mxu0 %v1088
    %v1652 = vpop.f32.mrf.mxu0
    %v1653 = vadd.f32 %v947, %v1652
    %1654 = vmatmul.f32.gmra.mxu0 %v1091
    %v1655 = vpop.f32.mrf.mxu0
    %v1656 = vadd.f32 %v952, %v1655
    %1657 = vmatmul.f32.gmra.mxu0 %v1094
    %v1658 = vpop.f32.mrf.mxu0
    %v1659 = vadd.f32 %v957, %v1658
    %1660 = vmatmul.f32.gmra.mxu0 %v1097
    %v1661 = vpop.f32.mrf.mxu0
    %v1662 = vadd.f32 %v962, %v1661
    %1663 = vmatmul.f32.gmra.mxu0 %v1100
    %v1664 = vpop.f32.mrf.mxu0
    %v1665 = vadd.f32 %v967, %v1664
    %1666 = vmatmul.f32.gmra.mxu0 %v1103
    %v1667 = vpop.f32.mrf.mxu0
    %v1668 = vadd.f32 %v972, %v1667
    %1669 = vmatmul.f32.gmra.mxu0 %v1106
    %v1670 = vpop.f32.mrf.mxu0
    %v1671 = vadd.f32 %v977, %v1670
    %1672 = vmatmul.f32.gmra.mxu0 %v1109
    %v1673 = vpop.f32.mrf.mxu0
    %v1674 = vadd.f32 %v982, %v1673
    %1675 = vmatmul.f32.gmra.mxu0 %v1112
    %v1676 = vpop.f32.mrf.mxu0
    %v1677 = vadd.f32 %v987, %v1676
    %1678 = vmatmul.f32.gmra.mxu0 %v1115
    %v1679 = vpop.f32.mrf.mxu0
    %v1680 = vadd.f32 %v992, %v1679
    %1681 = vmatmul.f32.gmra.mxu0 %v1118
    %v1682 = vpop.f32.mrf.mxu0
    %v1683 = vadd.f32 %v997, %v1682
    %1684 = vmatmul.f32.gmra.mxu0 %v1121
    %v1685 = vpop.f32.mrf.mxu0
    %v1686 = vadd.f32 %v1002, %v1685
    %1687 = vmatmul.f32.gmra.mxu0 %v1124
    %v1688 = vpop.f32.mrf.mxu0
    %v1689 = vadd.f32 %v1007, %v1688
    %1690 = vmatmul.f32.gmra.mxu0 %v1127
    %v1691 = vpop.f32.mrf.mxu0
    %v1692 = vadd.f32 %v1012, %v1691
    %1693 = vmatmul.f32.gmra.mxu0 %v1130
    %v1694 = vpop.f32.mrf.mxu0
    %v1695 = vadd.f32 %v1017, %v1694
    %1696 = vmatmul.f32.gmra.mxu0 %v1133
    %v1697 = vpop.f32.mrf.mxu0
    %v1698 = vadd.f32 %v1022, %v1697
    %1699 = vmatmul.f32.gmra.mxu0 %v1136
    %v1700 = vpop.f32.mrf.mxu0
    %v1701 = vadd.f32 %v1027, %v1700
    %1702 = vmatmul.f32.gmra.mxu0 %v1139
    %v1703 = vpop.f32.mrf.mxu0
    %v1704 = vadd.f32 %v1032, %v1703
    %1705 = vmatmul.f32.gmra.mxu0 %v1142
    %v1706 = vpop.f32.mrf.mxu0
    %v1707 = vadd.f32 %v1037, %v1706
    %1708 = vmatmul.f32.gmra.mxu0 %v1145
    %v1709 = vpop.f32.mrf.mxu0
    %v1710 = vadd.f32 %v1042, %v1709
    %1711 = vmatmul.f32.gmra.mxu0 %v1148
    %v1712 = vpop.f32.mrf.mxu0
    %v1713 = vadd.f32 %v1047, %v1712
    %1714 = vmatmul.f32.gmra.mxu0 %v1151
    %v1715 = vpop.f32.mrf.mxu0
    %v1716 = vadd.f32 %v1052, %v1715
    %1717 = vmatmul.f32.gmra.mxu0 %v1154
    %v1718 = vpop.f32.mrf.mxu0
    %v1719 = vadd.f32 %v1057, %v1718
    %1720 = vdwg.mxu0
    %1721 = vmatpush.msra.mxu0 0.0
    %1722 = vmatpush.msra.mxu0 0.0
    %1723 = vmatpush.msra.mxu0 0.0
    %1724 = vmatpush.msra.mxu0 0.0
    %1725 = vmatpush.msra.mxu0 0.0
    %1726 = vmatpush.msra.mxu0 0.0
    %1727 = vmatpush.msra.mxu0 0.0
    %1728 = vmatpush.msra.mxu0 0.0
    %1729 = vmatpush.msra.mxu0 %v832
    %1730 = vmatpush.msra.mxu0 %v824
    %1731 = vmatpush.msra.mxu0 %v816
    %1732 = vmatpush.msra.mxu0 %v808
    %1733 = vmatpush.msra.mxu0 %v800
    %1734 = vmatpush.msra.mxu0 %v792
    %1735 = vmatpush.msra.mxu0 %v784
    %1736 = vmatpush.msra.mxu0 %v776
    %1737 = vmatmul.f32.gmra.mxu0 %v1061
    %v1738 = vpop.f32.mrf.mxu0
    %v1739 = vadd.f32 %v902, %v1738
    %1740 = vmatmul.f32.gmra.mxu0 %v1064
    %v1741 = vpop.f32.mrf.mxu0
    %v1742 = vadd.f32 %v907, %v1741
    %1743 = vmatmul.f32.gmra.mxu0 %v1067
    %v1744 = vpop.f32.mrf.mxu0
    %v1745 = vadd.f32 %v912, %v1744
    %1746 = vmatmul.f32.gmra.mxu0 %v1070
    %v1747 = vpop.f32.mrf.mxu0
    %v1748 = vadd.f32 %v917, %v1747
    %1749 = vmatmul.f32.gmra.mxu0 %v1073
    %v1750 = vpop.f32.mrf.mxu0
    %v1751 = vadd.f32 %v922, %v1750
    %1752 = vmatmul.f32.gmra.mxu0 %v1076
    %v1753 = vpop.f32.mrf.mxu0
    %v1754 = vadd.f32 %v927, %v1753
    %1755 = vmatmul.f32.gmra.mxu0 %v1079
    %v1756 = vpop.f32.mrf.mxu0
    %v1757 = vadd.f32 %v932, %v1756
    %1758 = vmatmul.f32.gmra.mxu0 %v1082
    %v1759 = vpop.f32.mrf.mxu0
    %v1760 = vadd.f32 %v937, %v1759
    %1761 = vmatmul.f32.gmra.mxu0 %v1085
    %v1762 = vpop.f32.mrf.mxu0
    %v1763 = vadd.f32 %v942, %v1762
    %1764 = vmatmul.f32.gmra.mxu0 %v1088
    %v1765 = vpop.f32.mrf.mxu0
    %v1766 = vadd.f32 %v947, %v1765
    %1767 = vmatmul.f32.gmra.mxu0 %v1091
    %v1768 = vpop.f32.mrf.mxu0
    %v1769 = vadd.f32 %v952, %v1768
    %1770 = vmatmul.f32.gmra.mxu0 %v1094
    %v1771 = vpop.f32.mrf.mxu0
    %v1772 = vadd.f32 %v957, %v1771
    %1773 = vmatmul.f32.gmra.mxu0 %v1097
    %v1774 = vpop.f32.mrf.mxu0
    %v1775 = vadd.f32 %v962, %v1774
    %1776 = vmatmul.f32.gmra.mxu0 %v1100
    %v1777 = vpop.f32.mrf.mxu0
    %v1778 = vadd.f32 %v967, %v1777
    %1779 = vmatmul.f32.gmra.mxu0 %v1103
    %v1780 = vpop.f32.mrf.mxu0
    %v1781 = vadd.f32 %v972, %v1780
    %1782 = vmatmul.f32.gmra.mxu0 %v1106
    %v1783 = vpop.f32.mrf.mxu0
    %v1784 = vadd.f32 %v977, %v1783
    %1785 = vmatmul.f32.gmra.mxu0 %v1109
    %v1786 = vpop.f32.mrf.mxu0
    %v1787 = vadd.f32 %v982, %v1786
    %1788 = vmatmul.f32.gmra.mxu0 %v1112
    %v1789 = vpop.f32.mrf.mxu0
    %v1790 = vadd.f32 %v987, %v1789
    %1791 = vmatmul.f32.gmra.mxu0 %v1115
    %v1792 = vpop.f32.mrf.mxu0
    %v1793 = vadd.f32 %v992, %v1792
    %1794 = vmatmul.f32.gmra.mxu0 %v1118
    %v1795 = vpop.f32.mrf.mxu0
    %v1796 = vadd.f32 %v997, %v1795
    %1797 = vmatmul.f32.gmra.mxu0 %v1121
    %v1798 = vpop.f32.mrf.mxu0
    %v1799 = vadd.f32 %v1002, %v1798
    %1800 = vmatmul.f32.gmra.mxu0 %v1124
    %v1801 = vpop.f32.mrf.mxu0
    %v1802 = vadd.f32 %v1007, %v1801
    %1803 = vmatmul.f32.gmra.mxu0 %v1127
    %v1804 = vpop.f32.mrf.mxu0
    %v1805 = vadd.f32 %v1012, %v1804
    %1806 = vmatmul.f32.gmra.mxu0 %v1130
    %v1807 = vpop.f32.mrf.mxu0
    %v1808 = vadd.f32 %v1017, %v1807
    %1809 = vmatmul.f32.gmra.mxu0 %v1133
    %v1810 = vpop.f32.mrf.mxu0
    %v1811 = vadd.f32 %v1022, %v1810
    %1812 = vmatmul.f32.gmra.mxu0 %v1136
    %v1813 = vpop.f32.mrf.mxu0
    %v1814 = vadd.f32 %v1027, %v1813
    %1815 = vmatmul.f32.gmra.mxu0 %v1139
    %v1816 = vpop.f32.mrf.mxu0
    %v1817 = vadd.f32 %v1032, %v1816
    %1818 = vmatmul.f32.gmra.mxu0 %v1142
    %v1819 = vpop.f32.mrf.mxu0
    %v1820 = vadd.f32 %v1037, %v1819
    %1821 = vmatmul.f32.gmra.mxu0 %v1145
    %v1822 = vpop.f32.mrf.mxu0
    %v1823 = vadd.f32 %v1042, %v1822
    %1824 = vmatmul.f32.gmra.mxu0 %v1148
    %v1825 = vpop.f32.mrf.mxu0
    %v1826 = vadd.f32 %v1047, %v1825
    %1827 = vmatmul.f32.gmra.mxu0 %v1151
    %v1828 = vpop.f32.mrf.mxu0
    %v1829 = vadd.f32 %v1052, %v1828
    %1830 = vmatmul.f32.gmra.mxu0 %v1154
    %v1831 = vpop.f32.mrf.mxu0
    %v1832 = vadd.f32 %v1057, %v1831
    %1833 = vdwg.mxu0
    %1834 = vmatpush.msra.mxu0 0.0
    %1835 = vmatpush.msra.mxu0 0.0
    %1836 = vmatpush.msra.mxu0 0.0
    %1837 = vmatpush.msra.mxu0 0.0
    %1838 = vmatpush.msra.mxu0 0.0
    %1839 = vmatpush.msra.mxu0 0.0
    %1840 = vmatpush.msra.mxu0 0.0
    %1841 = vmatpush.msra.mxu0 0.0
    %1842 = vmatpush.msra.mxu0 %v833
    %1843 = vmatpush.msra.mxu0 %v825
    %1844 = vmatpush.msra.mxu0 %v817
    %1845 = vmatpush.msra.mxu0 %v809
    %1846 = vmatpush.msra.mxu0 %v801
    %1847 = vmatpush.msra.mxu0 %v793
    %1848 = vmatpush.msra.mxu0 %v785
    %1849 = vmatpush.msra.mxu0 %v777
    %1850 = vmatmul.f32.gmra.mxu0 %v1061
    %v1851 = vpop.f32.mrf.mxu0
    %v1852 = vadd.f32 %v902, %v1851
    %1853 = vmatmul.f32.gmra.mxu0 %v1064
    %v1854 = vpop.f32.mrf.mxu0
    %v1855 = vadd.f32 %v907, %v1854
    %1856 = vmatmul.f32.gmra.mxu0 %v1067
    %v1857 = vpop.f32.mrf.mxu0
    %v1858 = vadd.f32 %v912, %v1857
    %1859 = vmatmul.f32.gmra.mxu0 %v1070
    %v1860 = vpop.f32.mrf.mxu0
    %v1861 = vadd.f32 %v917, %v1860
    %1862 = vmatmul.f32.gmra.mxu0 %v1073
    %v1863 = vpop.f32.mrf.mxu0
    %v1864 = vadd.f32 %v922, %v1863
    %1865 = vmatmul.f32.gmra.mxu0 %v1076
    %v1866 = vpop.f32.mrf.mxu0
    %v1867 = vadd.f32 %v927, %v1866
    %1868 = vmatmul.f32.gmra.mxu0 %v1079
    %v1869 = vpop.f32.mrf.mxu0
    %v1870 = vadd.f32 %v932, %v1869
    %1871 = vmatmul.f32.gmra.mxu0 %v1082
    %v1872 = vpop.f32.mrf.mxu0
    %v1873 = vadd.f32 %v937, %v1872
    %1874 = vmatmul.f32.gmra.mxu0 %v1085
    %v1875 = vpop.f32.mrf.mxu0
    %v1876 = vadd.f32 %v942, %v1875
    %1877 = vmatmul.f32.gmra.mxu0 %v1088
    %v1878 = vpop.f32.mrf.mxu0
    %v1879 = vadd.f32 %v947, %v1878
    %1880 = vmatmul.f32.gmra.mxu0 %v1091
    %v1881 = vpop.f32.mrf.mxu0
    %v1882 = vadd.f32 %v952, %v1881
    %1883 = vmatmul.f32.gmra.mxu0 %v1094
    %v1884 = vpop.f32.mrf.mxu0
    %v1885 = vadd.f32 %v957, %v1884
    %1886 = vmatmul.f32.gmra.mxu0 %v1097
    %v1887 = vpop.f32.mrf.mxu0
    %v1888 = vadd.f32 %v962, %v1887
    %1889 = vmatmul.f32.gmra.mxu0 %v1100
    %v1890 = vpop.f32.mrf.mxu0
    %v1891 = vadd.f32 %v967, %v1890
    %1892 = vmatmul.f32.gmra.mxu0 %v1103
    %v1893 = vpop.f32.mrf.mxu0
    %v1894 = vadd.f32 %v972, %v1893
    %1895 = vmatmul.f32.gmra.mxu0 %v1106
    %v1896 = vpop.f32.mrf.mxu0
    %v1897 = vadd.f32 %v977, %v1896
    %1898 = vmatmul.f32.gmra.mxu0 %v1109
    %v1899 = vpop.f32.mrf.mxu0
    %v1900 = vadd.f32 %v982, %v1899
    %1901 = vmatmul.f32.gmra.mxu0 %v1112
    %v1902 = vpop.f32.mrf.mxu0
    %v1903 = vadd.f32 %v987, %v1902
    %1904 = vmatmul.f32.gmra.mxu0 %v1115
    %v1905 = vpop.f32.mrf.mxu0
    %v1906 = vadd.f32 %v992, %v1905
    %1907 = vmatmul.f32.gmra.mxu0 %v1118
    %v1908 = vpop.f32.mrf.mxu0
    %v1909 = vadd.f32 %v997, %v1908
    %1910 = vmatmul.f32.gmra.mxu0 %v1121
    %v1911 = vpop.f32.mrf.mxu0
    %v1912 = vadd.f32 %v1002, %v1911
    %1913 = vmatmul.f32.gmra.mxu0 %v1124
    %v1914 = vpop.f32.mrf.mxu0
    %v1915 = vadd.f32 %v1007, %v1914
    %1916 = vmatmul.f32.gmra.mxu0 %v1127
    %v1917 = vpop.f32.mrf.mxu0
    %v1918 = vadd.f32 %v1012, %v1917
    %1919 = vmatmul.f32.gmra.mxu0 %v1130
    %v1920 = vpop.f32.mrf.mxu0
    %v1921 = vadd.f32 %v1017, %v1920
    %1922 = vmatmul.f32.gmra.mxu0 %v1133
    %v1923 = vpop.f32.mrf.mxu0
    %v1924 = vadd.f32 %v1022, %v1923
    %1925 = vmatmul.f32.gmra.mxu0 %v1136
    %v1926 = vpop.f32.mrf.mxu0
    %v1927 = vadd.f32 %v1027, %v1926
    %1928 = vmatmul.f32.gmra.mxu0 %v1139
    %v1929 = vpop.f32.mrf.mxu0
    %v1930 = vadd.f32 %v1032, %v1929
    %1931 = vmatmul.f32.gmra.mxu0 %v1142
    %v1932 = vpop.f32.mrf.mxu0
    %v1933 = vadd.f32 %v1037, %v1932
    %1934 = vmatmul.f32.gmra.mxu0 %v1145
    %v1935 = vpop.f32.mrf.mxu0
    %v1936 = vadd.f32 %v1042, %v1935
    %1937 = vmatmul.f32.gmra.mxu0 %v1148
    %v1938 = vpop.f32.mrf.mxu0
    %v1939 = vadd.f32 %v1047, %v1938
    %1940 = vmatmul.f32.gmra.mxu0 %v1151
    %v1941 = vpop.f32.mrf.mxu0
    %v1942 = vadd.f32 %v1052, %v1941
    %1943 = vmatmul.f32.gmra.mxu0 %v1154
    %v1944 = vpop.f32.mrf.mxu0
    %v1945 = vadd.f32 %v1057, %v1944
    %1946 = vdwg.mxu0
    %1947 = vmatpush.msra.mxu0 0.0
    %1948 = vmatpush.msra.mxu0 0.0
    %1949 = vmatpush.msra.mxu0 0.0
    %1950 = vmatpush.msra.mxu0 0.0
    %1951 = vmatpush.msra.mxu0 0.0
    %1952 = vmatpush.msra.mxu0 0.0
    %1953 = vmatpush.msra.mxu0 0.0
    %1954 = vmatpush.msra.mxu0 0.0
    %1955 = vmatpush.msra.mxu0 %v834
    %1956 = vmatpush.msra.mxu0 %v826
    %1957 = vmatpush.msra.mxu0 %v818
    %1958 = vmatpush.msra.mxu0 %v810
    %1959 = vmatpush.msra.mxu0 %v802
    %1960 = vmatpush.msra.mxu0 %v794
    %1961 = vmatpush.msra.mxu0 %v786
    %1962 = vmatpush.msra.mxu0 %v778
    %1963 = vmatmul.f32.gmra.mxu0 %v1061
    %v1964 = vpop.f32.mrf.mxu0
    %v1965 = vadd.f32 %v902, %v1964
    %1966 = vmatmul.f32.gmra.mxu0 %v1064
    %v1967 = vpop.f32.mrf.mxu0
    %v1968 = vadd.f32 %v907, %v1967
    %1969 = vmatmul.f32.gmra.mxu0 %v1067
    %v1970 = vpop.f32.mrf.mxu0
    %v1971 = vadd.f32 %v912, %v1970
    %1972 = vmatmul.f32.gmra.mxu0 %v1070
    %v1973 = vpop.f32.mrf.mxu0
    %v1974 = vadd.f32 %v917, %v1973
    %1975 = vmatmul.f32.gmra.mxu0 %v1073
    %v1976 = vpop.f32.mrf.mxu0
    %v1977 = vadd.f32 %v922, %v1976
    %1978 = vmatmul.f32.gmra.mxu0 %v1076
    %v1979 = vpop.f32.mrf.mxu0
    %v1980 = vadd.f32 %v927, %v1979
    %1981 = vmatmul.f32.gmra.mxu0 %v1079
    %v1982 = vpop.f32.mrf.mxu0
    %v1983 = vadd.f32 %v932, %v1982
    %1984 = vmatmul.f32.gmra.mxu0 %v1082
    %v1985 = vpop.f32.mrf.mxu0
    %v1986 = vadd.f32 %v937, %v1985
    %1987 = vmatmul.f32.gmra.mxu0 %v1085
    %v1988 = vpop.f32.mrf.mxu0
    %v1989 = vadd.f32 %v942, %v1988
    %1990 = vmatmul.f32.gmra.mxu0 %v1088
    %v1991 = vpop.f32.mrf.mxu0
    %v1992 = vadd.f32 %v947, %v1991
    %1993 = vmatmul.f32.gmra.mxu0 %v1091
    %v1994 = vpop.f32.mrf.mxu0
    %v1995 = vadd.f32 %v952, %v1994
    %1996 = vmatmul.f32.gmra.mxu0 %v1094
    %v1997 = vpop.f32.mrf.mxu0
    %v1998 = vadd.f32 %v957, %v1997
    %1999 = vmatmul.f32.gmra.mxu0 %v1097
    %v2000 = vpop.f32.mrf.mxu0
    %v2001 = vadd.f32 %v962, %v2000
    %2002 = vmatmul.f32.gmra.mxu0 %v1100
    %v2003 = vpop.f32.mrf.mxu0
    %v2004 = vadd.f32 %v967, %v2003
    %2005 = vmatmul.f32.gmra.mxu0 %v1103
    %v2006 = vpop.f32.mrf.mxu0
    %v2007 = vadd.f32 %v972, %v2006
    %2008 = vmatmul.f32.gmra.mxu0 %v1106
    %v2009 = vpop.f32.mrf.mxu0
    %v2010 = vadd.f32 %v977, %v2009
    %2011 = vmatmul.f32.gmra.mxu0 %v1109
    %v2012 = vpop.f32.mrf.mxu0
    %v2013 = vadd.f32 %v982, %v2012
    %2014 = vmatmul.f32.gmra.mxu0 %v1112
    %v2015 = vpop.f32.mrf.mxu0
    %v2016 = vadd.f32 %v987, %v2015
    %2017 = vmatmul.f32.gmra.mxu0 %v1115
    %v2018 = vpop.f32.mrf.mxu0
    %v2019 = vadd.f32 %v992, %v2018
    %2020 = vmatmul.f32.gmra.mxu0 %v1118
    %v2021 = vpop.f32.mrf.mxu0
    %v2022 = vadd.f32 %v997, %v2021
    %2023 = vmatmul.f32.gmra.mxu0 %v1121
    %v2024 = vpop.f32.mrf.mxu0
    %v2025 = vadd.f32 %v1002, %v2024
    %2026 = vmatmul.f32.gmra.mxu0 %v1124
    %v2027 = vpop.f32.mrf.mxu0
    %v2028 = vadd.f32 %v1007, %v2027
    %2029 = vmatmul.f32.gmra.mxu0 %v1127
    %v2030 = vpop.f32.mrf.mxu0
    %v2031 = vadd.f32 %v1012, %v2030
    %2032 = vmatmul.f32.gmra.mxu0 %v1130
    %v2033 = vpop.f32.mrf.mxu0
    %v2034 = vadd.f32 %v1017, %v2033
    %2035 = vmatmul.f32.gmra.mxu0 %v1133
    %v2036 = vpop.f32.mrf.mxu0
    %v2037 = vadd.f32 %v1022, %v2036
    %2038 = vmatmul.f32.gmra.mxu0 %v1136
    %v2039 = vpop.f32.mrf.mxu0
    %v2040 = vadd.f32 %v1027, %v2039
    %2041 = vmatmul.f32.gmra.mxu0 %v1139
    %v2042 = vpop.f32.mrf.mxu0
    %v2043 = vadd.f32 %v1032, %v2042
    %2044 = vmatmul.f32.gmra.mxu0 %v1142
    %v2045 = vpop.f32.mrf.mxu0
    %v2046 = vadd.f32 %v1037, %v2045
    %2047 = vmatmul.f32.gmra.mxu0 %v1145
    %v2048 = vpop.f32.mrf.mxu0
    %v2049 = vadd.f32 %v1042, %v2048
    %2050 = vmatmul.f32.gmra.mxu0 %v1148
    %v2051 = vpop.f32.mrf.mxu0
    %v2052 = vadd.f32 %v1047, %v2051
    %2053 = vmatmul.f32.gmra.mxu0 %v1151
    %v2054 = vpop.f32.mrf.mxu0
    %v2055 = vadd.f32 %v1052, %v2054
    %2056 = vmatmul.f32.gmra.mxu0 %v1154
    %v2057 = vpop.f32.mrf.mxu0
    %v2058 = vadd.f32 %v1057, %v2057
    %2059 = vdwg.mxu0
    %v2060 = vmax.f32 %v1174, %v1287
    %v2061 = vmax.f32 %v1177, %v1290
    %v2062 = vmax.f32 %v1180, %v1293
    %v2063 = vmax.f32 %v1183, %v1296
    %v2064 = vmax.f32 %v1186, %v1299
    %v2065 = vmax.f32 %v1189, %v1302
    %v2066 = vmax.f32 %v1192, %v1305
    %v2067 = vmax.f32 %v1195, %v1308
    %v2068 = vmax.f32 %v1198, %v1311
    %v2069 = vmax.f32 %v1201, %v1314
    %v2070 = vmax.f32 %v1204, %v1317
    %v2071 = vmax.f32 %v1207, %v1320
    %v2072 = vmax.f32 %v1210, %v1323
    %v2073 = vmax.f32 %v1213, %v1326
    %v2074 = vmax.f32 %v1216, %v1329
    %v2075 = vmax.f32 %v1219, %v1332
    %v2076 = vmax.f32 %v1222, %v1335
    %v2077 = vmax.f32 %v1225, %v1338
    %v2078 = vmax.f32 %v1228, %v1341
    %v2079 = vmax.f32 %v1231, %v1344
    %v2080 = vmax.f32 %v1234, %v1347
    %v2081 = vmax.f32 %v1237, %v1350
    %v2082 = vmax.f32 %v1240, %v1353
    %v2083 = vmax.f32 %v1243, %v1356
    %v2084 = vmax.f32 %v1246, %v1359
    %v2085 = vmax.f32 %v1249, %v1362
    %v2086 = vmax.f32 %v1252, %v1365
    %v2087 = vmax.f32 %v1255, %v1368
    %v2088 = vmax.f32 %v1258, %v1371
    %v2089 = vmax.f32 %v1261, %v1374
    %v2090 = vmax.f32 %v1264, %v1377
    %v2091 = vmax.f32 %v1267, %v1380
    %v2092 = vmax.f32 %v2060, %v1400
    %v2093 = vmax.f32 %v2061, %v1403
    %v2094 = vmax.f32 %v2062, %v1406
    %v2095 = vmax.f32 %v2063, %v1409
    %v2096 = vmax.f32 %v2064, %v1412
    %v2097 = vmax.f32 %v2065, %v1415
    %v2098 = vmax.f32 %v2066, %v1418
    %v2099 = vmax.f32 %v2067, %v1421
    %v2100 = vmax.f32 %v2068, %v1424
    %v2101 = vmax.f32 %v2069, %v1427
    %v2102 = vmax.f32 %v2070, %v1430
    %v2103 = vmax.f32 %v2071, %v1433
    %v2104 = vmax.f32 %v2072, %v1436
    %v2105 = vmax.f32 %v2073, %v1439
    %v2106 = vmax.f32 %v2074, %v1442
    %v2107 = vmax.f32 %v2075, %v1445
    %v2108 = vmax.f32 %v2076, %v1448
    %v2109 = vmax.f32 %v2077, %v1451
    %v2110 = vmax.f32 %v2078, %v1454
    %v2111 = vmax.f32 %v2079, %v1457
    %v2112 = vmax.f32 %v2080, %v1460
    %v2113 = vmax.f32 %v2081, %v1463
    %v2114 = vmax.f32 %v2082, %v1466
    %v2115 = vmax.f32 %v2083, %v1469
    %v2116 = vmax.f32 %v2084, %v1472
    %v2117 = vmax.f32 %v2085, %v1475
    %v2118 = vmax.f32 %v2086, %v1478
    %v2119 = vmax.f32 %v2087, %v1481
    %v2120 = vmax.f32 %v2088, %v1484
    %v2121 = vmax.f32 %v2089, %v1487
    %v2122 = vmax.f32 %v2090, %v1490
    %v2123 = vmax.f32 %v2091, %v1493
    %v2124 = vmax.f32 %v2092, %v1513
    %v2125 = vmax.f32 %v2093, %v1516
    %v2126 = vmax.f32 %v2094, %v1519
    %v2127 = vmax.f32 %v2095, %v1522
    %v2128 = vmax.f32 %v2096, %v1525
    %v2129 = vmax.f32 %v2097, %v1528
    %v2130 = vmax.f32 %v2098, %v1531
    %v2131 = vmax.f32 %v2099, %v1534
    %v2132 = vmax.f32 %v2100, %v1537
    %v2133 = vmax.f32 %v2101, %v1540
    %v2134 = vmax.f32 %v2102, %v1543
    %v2135 = vmax.f32 %v2103, %v1546
    %v2136 = vmax.f32 %v2104, %v1549
    %v2137 = vmax.f32 %v2105, %v1552
    %v2138 = vmax.f32 %v2106, %v1555
    %v2139 = vmax.f32 %v2107, %v1558
    %v2140 = vmax.f32 %v2108, %v1561
    %v2141 = vmax.f32 %v2109, %v1564
    %v2142 = vmax.f32 %v2110, %v1567
    %v2143 = vmax.f32 %v2111, %v1570
    %v2144 = vmax.f32 %v2112, %v1573
    %v2145 = vmax.f32 %v2113, %v1576
    %v2146 = vmax.f32 %v2114, %v1579
    %v2147 = vmax.f32 %v2115, %v1582
    %v2148 = vmax.f32 %v2116, %v1585
    %v2149 = vmax.f32 %v2117, %v1588
    %v2150 = vmax.f32 %v2118, %v1591
    %v2151 = vmax.f32 %v2119, %v1594
    %v2152 = vmax.f32 %v2120, %v1597
    %v2153 = vmax.f32 %v2121, %v1600
    %v2154 = vmax.f32 %v2122, %v1603
    %v2155 = vmax.f32 %v2123, %v1606
    %v2156 = vmax.f32 %v2124, %v1626
    %v2157 = vmax.f32 %v2125, %v1629
    %v2158 = vmax.f32 %v2126, %v1632
    %v2159 = vmax.f32 %v2127, %v1635
    %v2160 = vmax.f32 %v2128, %v1638
    %v2161 = vmax.f32 %v2129, %v1641
    %v2162 = vmax.f32 %v2130, %v1644
    %v2163 = vmax.f32 %v2131, %v1647
    %v2164 = vmax.f32 %v2132, %v1650
    %v2165 = vmax.f32 %v2133, %v1653
    %v2166 = vmax.f32 %v2134, %v1656
    %v2167 = vmax.f32 %v2135, %v1659
    %v2168 = vmax.f32 %v2136, %v1662
    %v2169 = vmax.f32 %v2137, %v1665
    %v2170 = vmax.f32 %v2138, %v1668
    %v2171 = vmax.f32 %v2139, %v1671
    %v2172 = vmax.f32 %v2140, %v1674
    %v2173 = vmax.f32 %v2141, %v1677
    %v2174 = vmax.f32 %v2142, %v1680
    %v2175 = vmax.f32 %v2143, %v1683
    %v2176 = vmax.f32 %v2144, %v1686
    %v2177 = vmax.f32 %v2145, %v1689
    %v2178 = vmax.f32 %v2146, %v1692
    %v2179 = vmax.f32 %v2147, %v1695
    %v2180 = vmax.f32 %v2148, %v1698
    %v2181 = vmax.f32 %v2149, %v1701
    %v2182 = vmax.f32 %v2150, %v1704
    %v2183 = vmax.f32 %v2151, %v1707
    %v2184 = vmax.f32 %v2152, %v1710
    %v2185 = vmax.f32 %v2153, %v1713
    %v2186 = vmax.f32 %v2154, %v1716
    %v2187 = vmax.f32 %v2155, %v1719
    %v2188 = vmax.f32 %v2156, %v1739
    %v2189 = vmax.f32 %v2157, %v1742
    %v2190 = vmax.f32 %v2158, %v1745
    %v2191 = vmax.f32 %v2159, %v1748
    %v2192 = vmax.f32 %v2160, %v1751
    %v2193 = vmax.f32 %v2161, %v1754
    %v2194 = vmax.f32 %v2162, %v1757
    %v2195 = vmax.f32 %v2163, %v1760
    %v2196 = vmax.f32 %v2164, %v1763
    %v2197 = vmax.f32 %v2165, %v1766
    %v2198 = vmax.f32 %v2166, %v1769
    %v2199 = vmax.f32 %v2167, %v1772
    %v2200 = vmax.f32 %v2168, %v1775
    %v2201 = vmax.f32 %v2169, %v1778
    %v2202 = vmax.f32 %v2170, %v1781
    %v2203 = vmax.f32 %v2171, %v1784
    %v2204 = vmax.f32 %v2172, %v1787
    %v2205 = vmax.f32 %v2173, %v1790
    %v2206 = vmax.f32 %v2174, %v1793
    %v2207 = vmax.f32 %v2175, %v1796
    %v2208 = vmax.f32 %v2176, %v1799
    %v2209 = vmax.f32 %v2177, %v1802
    %v2210 = vmax.f32 %v2178, %v1805
    %v2211 = vmax.f32 %v2179, %v1808
    %v2212 = vmax.f32 %v2180, %v1811
    %v2213 = vmax.f32 %v2181, %v1814
    %v2214 = vmax.f32 %v2182, %v1817
    %v2215 = vmax.f32 %v2183, %v1820
    %v2216 = vmax.f32 %v2184, %v1823
    %v2217 = vmax.f32 %v2185, %v1826
    %v2218 = vmax.f32 %v2186, %v1829
    %v2219 = vmax.f32 %v2187, %v1832
    %v2220 = vmax.f32 %v2188, %v1852
    %v2221 = vmax.f32 %v2189, %v1855
    %v2222 = vmax.f32 %v2190, %v1858
    %v2223 = vmax.f32 %v2191, %v1861
    %v2224 = vmax.f32 %v2192, %v1864
    %v2225 = vmax.f32 %v2193, %v1867
    %v2226 = vmax.f32 %v2194, %v1870
    %v2227 = vmax.f32 %v2195, %v1873
    %v2228 = vmax.f32 %v2196, %v1876
    %v2229 = vmax.f32 %v2197, %v1879
    %v2230 = vmax.f32 %v2198, %v1882
    %v2231 = vmax.f32 %v2199, %v1885
    %v2232 = vmax.f32 %v2200, %v1888
    %v2233 = vmax.f32 %v2201, %v1891
    %v2234 = vmax.f32 %v2202, %v1894
    %v2235 = vmax.f32 %v2203, %v1897
    %v2236 = vmax.f32 %v2204, %v1900
    %v2237 = vmax.f32 %v2205, %v1903
    %v2238 = vmax.f32 %v2206, %v1906
    %v2239 = vmax.f32 %v2207, %v1909
    %v2240 = vmax.f32 %v2208, %v1912
    %v2241 = vmax.f32 %v2209, %v1915
    %v2242 = vmax.f32 %v2210, %v1918
    %v2243 = vmax.f32 %v2211, %v1921
    %v2244 = vmax.f32 %v2212, %v1924
    %v2245 = vmax.f32 %v2213, %v1927
    %v2246 = vmax.f32 %v2214, %v1930
    %v2247 = vmax.f32 %v2215, %v1933
    %v2248 = vmax.f32 %v2216, %v1936
    %v2249 = vmax.f32 %v2217, %v1939
    %v2250 = vmax.f32 %v2218, %v1942
    %v2251 = vmax.f32 %v2219, %v1945
    %v2252 = vmax.f32 %v2220, %v1965
    %v2253 = vmax.f32 %v2221, %v1968
    %v2254 = vmax.f32 %v2222, %v1971
    %v2255 = vmax.f32 %v2223, %v1974
    %v2256 = vmax.f32 %v2224, %v1977
    %v2257 = vmax.f32 %v2225, %v1980
    %v2258 = vmax.f32 %v2226, %v1983
    %v2259 = vmax.f32 %v2227, %v1986
    %v2260 = vmax.f32 %v2228, %v1989
    %v2261 = vmax.f32 %v2229, %v1992
    %v2262 = vmax.f32 %v2230, %v1995
    %v2263 = vmax.f32 %v2231, %v1998
    %v2264 = vmax.f32 %v2232, %v2001
    %v2265 = vmax.f32 %v2233, %v2004
    %v2266 = vmax.f32 %v2234, %v2007
    %v2267 = vmax.f32 %v2235, %v2010
    %v2268 = vmax.f32 %v2236, %v2013
    %v2269 = vmax.f32 %v2237, %v2016
    %v2270 = vmax.f32 %v2238, %v2019
    %v2271 = vmax.f32 %v2239, %v2022
    %v2272 = vmax.f32 %v2240, %v2025
    %v2273 = vmax.f32 %v2241, %v2028
    %v2274 = vmax.f32 %v2242, %v2031
    %v2275 = vmax.f32 %v2243, %v2034
    %v2276 = vmax.f32 %v2244, %v2037
    %v2277 = vmax.f32 %v2245, %v2040
    %v2278 = vmax.f32 %v2246, %v2043
    %v2279 = vmax.f32 %v2247, %v2046
    %v2280 = vmax.f32 %v2248, %v2049
    %v2281 = vmax.f32 %v2249, %v2052
    %v2282 = vmax.f32 %v2250, %v2055
    %v2283 = vmax.f32 %v2251, %v2058
    %v2284 = vld [vmem:[%s4] sm:$0xff]
    %v2285 = vld [vmem:[%s4 + $0x8] sm:$0xff]
    %v2286 = vld [vmem:[%s4 + $0x10] sm:$0xff]
    %v2287 = vld [vmem:[%s4 + $0x18] sm:$0xff]
    %v2288 = vld [vmem:[%s4 + $0x20] sm:$0xff]
    %v2289 = vld [vmem:[%s4 + $0x28] sm:$0xff]
    %v2290 = vld [vmem:[%s4 + $0x30] sm:$0xff]
    %v2291 = vld [vmem:[%s4 + $0x38] sm:$0xff]
    %v2292 = vld [vmem:[%s4 + $0x40] sm:$0xff]
    %v2293 = vld [vmem:[%s4 + $0x48] sm:$0xff]
    %v2294 = vld [vmem:[%s4 + $0x50] sm:$0xff]
    %v2295 = vld [vmem:[%s4 + $0x58] sm:$0xff]
    %v2296 = vld [vmem:[%s4 + $0x60] sm:$0xff]
    %v2297 = vld [vmem:[%s4 + $0x68] sm:$0xff]
    %v2298 = vld [vmem:[%s4 + $0x70] sm:$0xff]
    %v2299 = vld [vmem:[%s4 + $0x78] sm:$0xff]
    %2300 = vmatpush.msra.mxu0 %v2299
    %2301 = vmatpush.msra.mxu0 %v2298
    %2302 = vmatpush.msra.mxu0 %v2297
    %2303 = vmatpush.msra.mxu0 %v2296
    %2304 = vmatpush.msra.mxu0 %v2295
    %2305 = vmatpush.msra.mxu0 %v2294
    %2306 = vmatpush.msra.mxu0 %v2293
    %2307 = vmatpush.msra.mxu0 %v2292
    %2308 = vmatpush.msra.mxu0 %v2291
    %2309 = vmatpush.msra.mxu0 %v2290
    %2310 = vmatpush.msra.mxu0 %v2289
    %2311 = vmatpush.msra.mxu0 %v2288
    %2312 = vmatpush.msra.mxu0 %v2287
    %2313 = vmatpush.msra.mxu0 %v2286
    %2314 = vmatpush.msra.mxu0 %v2285
    %2315 = vmatpush.msra.mxu0 %v2284
    %2316 = vmatmul.f32.gmra.mxu0 %v2252
    %v2317 = vpop.f32.mrf.mxu0
    %v2318 = vadd.f32 0.0, %v2317
    %2319 = vmatmul.f32.gmra.mxu0 %v2253
    %v2320 = vpop.f32.mrf.mxu0
    %v2321 = vadd.f32 0.0, %v2320
    %2322 = vmatmul.f32.gmra.mxu0 %v2254
    %v2323 = vpop.f32.mrf.mxu0
    %v2324 = vadd.f32 0.0, %v2323
    %2325 = vmatmul.f32.gmra.mxu0 %v2255
    %v2326 = vpop.f32.mrf.mxu0
    %v2327 = vadd.f32 0.0, %v2326
    %2328 = vmatmul.f32.gmra.mxu0 %v2256
    %v2329 = vpop.f32.mrf.mxu0
    %v2330 = vadd.f32 0.0, %v2329
    %2331 = vmatmul.f32.gmra.mxu0 %v2257
    %v2332 = vpop.f32.mrf.mxu0
    %v2333 = vadd.f32 0.0, %v2332
    %2334 = vmatmul.f32.gmra.mxu0 %v2258
    %v2335 = vpop.f32.mrf.mxu0
    %v2336 = vadd.f32 0.0, %v2335
    %2337 = vmatmul.f32.gmra.mxu0 %v2259
    %v2338 = vpop.f32.mrf.mxu0
    %v2339 = vadd.f32 0.0, %v2338
    %2340 = vmatmul.f32.gmra.mxu0 %v2260
    %v2341 = vpop.f32.mrf.mxu0
    %v2342 = vadd.f32 0.0, %v2341
    %2343 = vmatmul.f32.gmra.mxu0 %v2261
    %v2344 = vpop.f32.mrf.mxu0
    %v2345 = vadd.f32 0.0, %v2344
    %2346 = vmatmul.f32.gmra.mxu0 %v2262
    %v2347 = vpop.f32.mrf.mxu0
    %v2348 = vadd.f32 0.0, %v2347
    %2349 = vmatmul.f32.gmra.mxu0 %v2263
    %v2350 = vpop.f32.mrf.mxu0
    %v2351 = vadd.f32 0.0, %v2350
    %2352 = vmatmul.f32.gmra.mxu0 %v2264
    %v2353 = vpop.f32.mrf.mxu0
    %v2354 = vadd.f32 0.0, %v2353
    %2355 = vmatmul.f32.gmra.mxu0 %v2265
    %v2356 = vpop.f32.mrf.mxu0
    %v2357 = vadd.f32 0.0, %v2356
    %2358 = vmatmul.f32.gmra.mxu0 %v2266
    %v2359 = vpop.f32.mrf.mxu0
    %v2360 = vadd.f32 0.0, %v2359
    %2361 = vmatmul.f32.gmra.mxu0 %v2267
    %v2362 = vpop.f32.mrf.mxu0
    %v2363 = vadd.f32 0.0, %v2362
    %2364 = vmatmul.f32.gmra.mxu0 %v2268
    %v2365 = vpop.f32.mrf.mxu0
    %v2366 = vadd.f32 0.0, %v2365
    %2367 = vmatmul.f32.gmra.mxu0 %v2269
    %v2368 = vpop.f32.mrf.mxu0
    %v2369 = vadd.f32 0.0, %v2368
    %2370 = vmatmul.f32.gmra.mxu0 %v2270
    %v2371 = vpop.f32.mrf.mxu0
    %v2372 = vadd.f32 0.0, %v2371
    %2373 = vmatmul.f32.gmra.mxu0 %v2271
    %v2374 = vpop.f32.mrf.mxu0
    %v2375 = vadd.f32 0.0, %v2374
    %2376 = vmatmul.f32.gmra.mxu0 %v2272
    %v2377 = vpop.f32.mrf.mxu0
    %v2378 = vadd.f32 0.0, %v2377
    %2379 = vmatmul.f32.gmra.mxu0 %v2273
    %v2380 = vpop.f32.mrf.mxu0
    %v2381 = vadd.f32 0.0, %v2380
    %2382 = vmatmul.f32.gmra.mxu0 %v2274
    %v2383 = vpop.f32.mrf.mxu0
    %v2384 = vadd.f32 0.0, %v2383
    %2385 = vmatmul.f32.gmra.mxu0 %v2275
    %v2386 = vpop.f32.mrf.mxu0
    %v2387 = vadd.f32 0.0, %v2386
    %2388 = vmatmul.f32.gmra.mxu0 %v2276
    %v2389 = vpop.f32.mrf.mxu0
    %v2390 = vadd.f32 0.0, %v2389
    %2391 = vmatmul.f32.gmra.mxu0 %v2277
    %v2392 = vpop.f32.mrf.mxu0
    %v2393 = vadd.f32 0.0, %v2392
    %2394 = vmatmul.f32.gmra.mxu0 %v2278
    %v2395 = vpop.f32.mrf.mxu0
    %v2396 = vadd.f32 0.0, %v2395
    %2397 = vmatmul.f32.gmra.mxu0 %v2279
    %v2398 = vpop.f32.mrf.mxu0
    %v2399 = vadd.f32 0.0, %v2398
    %2400 = vmatmul.f32.gmra.mxu0 %v2280
    %v2401 = vpop.f32.mrf.mxu0
    %v2402 = vadd.f32 0.0, %v2401
    %2403 = vmatmul.f32.gmra.mxu0 %v2281
    %v2404 = vpop.f32.mrf.mxu0
    %v2405 = vadd.f32 0.0, %v2404
    %2406 = vmatmul.f32.gmra.mxu0 %v2282
    %v2407 = vpop.f32.mrf.mxu0
    %v2408 = vadd.f32 0.0, %v2407
    %2409 = vmatmul.f32.gmra.mxu0 %v2283
    %v2410 = vpop.f32.mrf.mxu0
    %v2411 = vadd.f32 0.0, %v2410
    %2412 = vdwg.mxu0
    %v2413 = vld [vmem:[%s10] sm:$0xff]
    %v2414 = vld [vmem:[%s10 + $0x8] sm:$0xff]
    %v2415 = vld [vmem:[%s10 + $0x10] sm:$0xff]
    %v2416 = vld [vmem:[%s10 + $0x18] sm:$0xff]
    %v2417 = vld [vmem:[%s10 + $0x20] sm:$0xff]
    %v2418 = vld [vmem:[%s10 + $0x28] sm:$0xff]
    %v2419 = vld [vmem:[%s10 + $0x30] sm:$0xff]
    %v2420 = vld [vmem:[%s10 + $0x38] sm:$0xff]
    %v2421 = vld [vmem:[%s10 + $0x40] sm:$0xff]
    %v2422 = vld [vmem:[%s10 + $0x48] sm:$0xff]
    %v2423 = vld [vmem:[%s10 + $0x50] sm:$0xff]
    %v2424 = vld [vmem:[%s10 + $0x58] sm:$0xff]
    %v2425 = vld [vmem:[%s10 + $0x60] sm:$0xff]
    %v2426 = vld [vmem:[%s10 + $0x68] sm:$0xff]
    %v2427 = vld [vmem:[%s10 + $0x70] sm:$0xff]
    %v2428 = vld [vmem:[%s10 + $0x78] sm:$0xff]
    %v2429 = vld [vmem:[%s11] sm:$0xff]
    %v2430 = vld [vmem:[%s11 + $0x8] sm:$0xff]
    %v2431 = vld [vmem:[%s11 + $0x10] sm:$0xff]
    %v2432 = vld [vmem:[%s11 + $0x18] sm:$0xff]
    %v2433 = vld [vmem:[%s11 + $0x20] sm:$0xff]
    %v2434 = vld [vmem:[%s11 + $0x28] sm:$0xff]
    %v2435 = vld [vmem:[%s11 + $0x30] sm:$0xff]
    %v2436 = vld [vmem:[%s11 + $0x38] sm:$0xff]
    %2438 = vset.pattern.permute.xlu0 0
    %2439 = vperm.xlu0 %2438, %v2429
    %v2440 = vpop.permute.xlu0 %2439
    %2443 = vset.pattern.permute.xlu0 0
    %2444 = vperm.xlu0 %2443, %v2430
    %v2445 = vpop.permute.xlu0 %2444
    %2448 = vset.pattern.permute.xlu0 0
    %2449 = vperm.xlu0 %2448, %v2431
    %v2450 = vpop.permute.xlu0 %2449
    %2453 = vset.pattern.permute.xlu0 0
    %2454 = vperm.xlu0 %2453, %v2432
    %v2455 = vpop.permute.xlu0 %2454
    %2458 = vset.pattern.permute.xlu0 0
    %2459 = vperm.xlu0 %2458, %v2433
    %v2460 = vpop.permute.xlu0 %2459
    %2463 = vset.pattern.permute.xlu0 0
    %2464 = vperm.xlu0 %2463, %v2434
    %v2465 = vpop.permute.xlu0 %2464
    %2468 = vset.pattern.permute.xlu0 0
    %2469 = vperm.xlu0 %2468, %v2435
    %v2470 = vpop.permute.xlu0 %2469
    %2473 = vset.pattern.permute.xlu0 0
    %2474 = vperm.xlu0 %2473, %v2436
    %v2475 = vpop.permute.xlu0 %2474
    %2477 = vmatpush.msra.mxu0 %v2363
    %2478 = vmatpush.msra.mxu0 %v2360
    %2479 = vmatpush.msra.mxu0 %v2357
    %2480 = vmatpush.msra.mxu0 %v2354
    %2481 = vmatpush.msra.mxu0 %v2351
    %2482 = vmatpush.msra.mxu0 %v2348
    %2483 = vmatpush.msra.mxu0 %v2345
    %2484 = vmatpush.msra.mxu0 %v2342
    %2485 = vmatpush.msra.mxu0 %v2339
    %2486 = vmatpush.msra.mxu0 %v2336
    %2487 = vmatpush.msra.mxu0 %v2333
    %2488 = vmatpush.msra.mxu0 %v2330
    %2489 = vmatpush.msra.mxu0 %v2327
    %2490 = vmatpush.msra.mxu0 %v2324
    %2491 = vmatpush.msra.mxu0 %v2321
    %2492 = vmatpush.msra.mxu0 %v2318
    %2493 = vmatmul.f32.gmra.mxu0 %v2413
    %v2494 = vpop.f32.mrf.mxu0
    %v2495 = vadd.f32 %v2440, %v2494
    %2496 = vmatmul.f32.gmra.mxu0 %v2415
    %v2497 = vpop.f32.mrf.mxu0
    %v2498 = vadd.f32 %v2445, %v2497
    %2499 = vmatmul.f32.gmra.mxu0 %v2417
    %v2500 = vpop.f32.mrf.mxu0
    %v2501 = vadd.f32 %v2450, %v2500
    %2502 = vmatmul.f32.gmra.mxu0 %v2419
    %v2503 = vpop.f32.mrf.mxu0
    %v2504 = vadd.f32 %v2455, %v2503
    %2505 = vmatmul.f32.gmra.mxu0 %v2421
    %v2506 = vpop.f32.mrf.mxu0
    %v2507 = vadd.f32 %v2460, %v2506
    %2508 = vmatmul.f32.gmra.mxu0 %v2423
    %v2509 = vpop.f32.mrf.mxu0
    %v2510 = vadd.f32 %v2465, %v2509
    %2511 = vmatmul.f32.gmra.mxu0 %v2425
    %v2512 = vpop.f32.mrf.mxu0
    %v2513 = vadd.f32 %v2470, %v2512
    %2514 = vmatmul.f32.gmra.mxu0 %v2427
    %v2515 = vpop.f32.mrf.mxu0
    %v2516 = vadd.f32 %v2475, %v2515
    %2517 = vdwg.mxu0
    %2518 = vmatpush.msra.mxu0 %v2411
    %2519 = vmatpush.msra.mxu0 %v2408
    %2520 = vmatpush.msra.mxu0 %v2405
    %2521 = vmatpush.msra.mxu0 %v2402
    %2522 = vmatpush.msra.mxu0 %v2399
    %2523 = vmatpush.msra.mxu0 %v2396
    %2524 = vmatpush.msra.mxu0 %v2393
    %2525 = vmatpush.msra.mxu0 %v2390
    %2526 = vmatpush.msra.mxu0 %v2387
    %2527 = vmatpush.msra.mxu0 %v2384
    %2528 = vmatpush.msra.mxu0 %v2381
    %2529 = vmatpush.msra.mxu0 %v2378
    %2530 = vmatpush.msra.mxu0 %v2375
    %2531 = vmatpush.msra.mxu0 %v2372
    %2532 = vmatpush.msra.mxu0 %v2369
    %2533 = vmatpush.msra.mxu0 %v2366
    %2534 = vmatmul.f32.gmra.mxu0 %v2414
    %v2535 = vpop.f32.mrf.mxu0
    %v2536 = vadd.f32 %v2495, %v2535
    %2537 = vmatmul.f32.gmra.mxu0 %v2416
    %v2538 = vpop.f32.mrf.mxu0
    %v2539 = vadd.f32 %v2498, %v2538
    %2540 = vmatmul.f32.gmra.mxu0 %v2418
    %v2541 = vpop.f32.mrf.mxu0
    %v2542 = vadd.f32 %v2501, %v2541
    %2543 = vmatmul.f32.gmra.mxu0 %v2420
    %v2544 = vpop.f32.mrf.mxu0
    %v2545 = vadd.f32 %v2504, %v2544
    %2546 = vmatmul.f32.gmra.mxu0 %v2422
    %v2547 = vpop.f32.mrf.mxu0
    %v2548 = vadd.f32 %v2507, %v2547
    %2549 = vmatmul.f32.gmra.mxu0 %v2424
    %v2550 = vpop.f32.mrf.mxu0
    %v2551 = vadd.f32 %v2510, %v2550
    %2552 = vmatmul.f32.gmra.mxu0 %v2426
    %v2553 = vpop.f32.mrf.mxu0
    %v2554 = vadd.f32 %v2513, %v2553
    %2555 = vmatmul.f32.gmra.mxu0 %v2428
    %v2556 = vpop.f32.mrf.mxu0
    %v2557 = vadd.f32 %v2516, %v2556
    %2558 = vdwg.mxu0
    %vm2559 = vcmp.gt.f32.partialorder %v2536, 0.0
    %vm2560 = vcmp.gt.f32.partialorder %v2539, 0.0
    %vm2561 = vcmp.gt.f32.partialorder %v2542, 0.0
    %vm2562 = vcmp.gt.f32.partialorder %v2545, 0.0
    %vm2563 = vcmp.gt.f32.partialorder %v2548, 0.0
    %vm2564 = vcmp.gt.f32.partialorder %v2551, 0.0
    %vm2565 = vcmp.gt.f32.partialorder %v2554, 0.0
    %vm2566 = vcmp.gt.f32.partialorder %v2557, 0.0
    %v2567 = vmin.f32 %v2536, 0.0
    %v2568 = vmin.f32 %v2539, 0.0
    %v2569 = vmin.f32 %v2542, 0.0
    %v2570 = vmin.f32 %v2545, 0.0
    %v2571 = vmin.f32 %v2548, 0.0
    %v2572 = vmin.f32 %v2551, 0.0
    %v2573 = vmin.f32 %v2554, 0.0
    %v2574 = vmin.f32 %v2557, 0.0
    %v2575 = vmul.f32 %v2567, 1.442695
    %v2576 = vpow.pop %v2575
    %v2577 = vmul.f32 %v2568, 1.442695
    %v2578 = vpow.pop %v2577
    %v2579 = vmul.f32 %v2569, 1.442695
    %v2580 = vpow.pop %v2579
    %v2581 = vmul.f32 %v2570, 1.442695
    %v2582 = vpow.pop %v2581
    %v2583 = vmul.f32 %v2571, 1.442695
    %v2584 = vpow.pop %v2583
    %v2585 = vmul.f32 %v2572, 1.442695
    %v2586 = vpow.pop %v2585
    %v2587 = vmul.f32 %v2573, 1.442695
    %v2588 = vpow.pop %v2587
    %v2589 = vmul.f32 %v2574, 1.442695
    %v2590 = vpow.pop %v2589
    %v2591 = vsub.f32 %v2576, 1.0
    %v2592 = vsub.f32 %v2578, 1.0
    %v2593 = vsub.f32 %v2580, 1.0
    %v2594 = vsub.f32 %v2582, 1.0
    %v2595 = vsub.f32 %v2584, 1.0
    %v2596 = vsub.f32 %v2586, 1.0
    %v2597 = vsub.f32 %v2588, 1.0
    %v2598 = vsub.f32 %v2590, 1.0
    %v2599 = vsel %vm2559, %v2536, %v2591
    %v2600 = vsel %vm2560, %v2539, %v2592
    %v2601 = vsel %vm2561, %v2542, %v2593
    %v2602 = vsel %vm2562, %v2545, %v2594
    %v2603 = vsel %vm2563, %v2548, %v2595
    %v2604 = vsel %vm2564, %v2551, %v2596
    %v2605 = vsel %vm2565, %v2554, %v2597
    %v2606 = vsel %vm2566, %v2557, %v2598
    %v2607 = vld [vmem:[%s12] sm:$0xf]
    %v2608 = vld [vmem:[%s13] sm:$0xf]
    %2610 = vset.pattern.permute.xlu0 0
    %2611 = vperm.xlu0 %2610, %v2608
    %v2612 = vpop.permute.xlu0 %2611
    %v2615 = vsel %vm1059, %v2607, 0
    %2617 = vmatpush.msra.mxu0 0.0
    %2618 = vmatpush.msra.mxu0 0.0
    %2619 = vmatpush.msra.mxu0 0.0
    %2620 = vmatpush.msra.mxu0 0.0
    %2621 = vmatpush.msra.mxu0 0.0
    %2622 = vmatpush.msra.mxu0 0.0
    %2623 = vmatpush.msra.mxu0 0.0
    %2624 = vmatpush.msra.mxu0 0.0
    %2625 = vmatpush.msra.mxu0 %v2606
    %2626 = vmatpush.msra.mxu0 %v2605
    %2627 = vmatpush.msra.mxu0 %v2604
    %2628 = vmatpush.msra.mxu0 %v2603
    %2629 = vmatpush.msra.mxu0 %v2602
    %2630 = vmatpush.msra.mxu0 %v2601
    %2631 = vmatpush.msra.mxu0 %v2600
    %2632 = vmatpush.msra.mxu0 %v2599
    %2633 = vmatmul.f32.gmra.mxu0 %v2615
    %v2634 = vpop.f32.mrf.mxu0
    %v2635 = vadd.f32 %v2612, %v2634
    %2636 = vdwg.mxu0
    %v2637 = vsub.f32 0.0, %v2635
    %v2638 = vmul.f32 %v2637, 1.442695
    %v2639 = vpow.pop %v2638
    %v2640 = vadd.f32 %v2639, 1.0
    %v2641 = vrcp.pop %v2640
    %v2642 = vmul.f32 %v2640, %v2641
    %v2643 = vsub.f32 1.0, %v2642
    %v2644 = vmul.f32 %v2641, %v2643
    %v2645 = vadd.f32 %v2641, %v2644
    %vm2646 = vweird.f32 %v2640
    %vm2647 = vweird.f32 %v2641
    %vm2648 = vmor %vm2646, %vm2647
    %v2649 = vsel %vm2648, %v2641, %v2645
    %v2650 = vand.u32 2147483647, %v2640
    %vm2651 = vcmp.eq.f32.partialorder %v2650, 8.507059e+37
    %v2652 = vand.u32 %v2640, 2147483648
    %v2653 = vor.u32 1.1754944e-38, %v2652
    %v2654 = vsel %vm2651, %v2653, %v2649
    %v2655 = vmul.f32 1.0, %v2654
    %v2656 = vmul.f32 %v133, %v133
    %v2657 = vmul.f32 %v134, %v134
    %v2658 = vadd.f32 %v2656, %v2657
    %v2659 = vmul.f32 %v2658, -0.2
    %v2660 = vmul.f32 %v2659, 1.442695
    %v2661 = vpow.pop %v2660
    %v2662 = vmul.f32 %v2661, %v113
    %v2663 = vand.u32 2147483647, %v101
    %v2664 = vand.u32 2147483647, %v109
    %v2665 = vmul.f32 %v89, %v89
    %v2666 = vmul.f32 %v2665, %v105
    %v2667 = vand.u32 2147483647, %v2666
    %v2669 = vperm.slane %v89, 0
    %v2670 = vperm.slane %v89, 1
    %v2671 = vperm.slane %v89, 2
    %v2672 = vperm.slane %v89, 3
    %v2673 = vperm.slane %v89, 4
    %v2674 = vperm.slane %v89, 5
    %v2675 = vperm.slane %v89, 6
    %v2676 = vperm.slane %v89, 7
    %v2686 = vperm.slane %v2663, 0
    %v2687 = vperm.slane %v2663, 1
    %v2688 = vperm.slane %v2663, 2
    %v2689 = vperm.slane %v2663, 3
    %v2690 = vperm.slane %v2663, 4
    %v2691 = vperm.slane %v2663, 5
    %v2692 = vperm.slane %v2663, 6
    %v2693 = vperm.slane %v2663, 7
    %v2703 = vperm.slane %v2664, 0
    %v2704 = vperm.slane %v2664, 1
    %v2705 = vperm.slane %v2664, 2
    %v2706 = vperm.slane %v2664, 3
    %v2707 = vperm.slane %v2664, 4
    %v2708 = vperm.slane %v2664, 5
    %v2709 = vperm.slane %v2664, 6
    %v2710 = vperm.slane %v2664, 7
    %v2720 = vperm.slane %v2667, 0
    %v2721 = vperm.slane %v2667, 1
    %v2722 = vperm.slane %v2667, 2
    %v2723 = vperm.slane %v2667, 3
    %v2724 = vperm.slane %v2667, 4
    %v2725 = vperm.slane %v2667, 5
    %v2726 = vperm.slane %v2667, 6
    %v2727 = vperm.slane %v2667, 7
    %v2737 = vperm.slane %v2662, 0
    %v2738 = vperm.slane %v2662, 1
    %v2739 = vperm.slane %v2662, 2
    %v2740 = vperm.slane %v2662, 3
    %v2741 = vperm.slane %v2662, 4
    %v2742 = vperm.slane %v2662, 5
    %v2743 = vperm.slane %v2662, 6
    %v2744 = vperm.slane %v2662, 7
    %v2753 = vsel %vm260, %v2669, %v2686
    %v2754 = vsel %vm260, %v2670, %v2687
    %v2755 = vsel %vm260, %v2671, %v2688
    %v2756 = vsel %vm260, %v2672, %v2689
    %v2757 = vsel %vm260, %v2673, %v2690
    %v2758 = vsel %vm260, %v2674, %v2691
    %v2759 = vsel %vm260, %v2675, %v2692
    %v2760 = vsel %vm260, %v2676, %v2693
    %v2761 = vsel %vm269, %v2753, %v2703
    %v2762 = vsel %vm269, %v2754, %v2704
    %v2763 = vsel %vm269, %v2755, %v2705
    %v2764 = vsel %vm269, %v2756, %v2706
    %v2765 = vsel %vm269, %v2757, %v2707
    %v2766 = vsel %vm269, %v2758, %v2708
    %v2767 = vsel %vm269, %v2759, %v2709
    %v2768 = vsel %vm269, %v2760, %v2710
    %v2769 = vsel %vm278, %v2761, %v2720
    %v2770 = vsel %vm278, %v2762, %v2721
    %v2771 = vsel %vm278, %v2763, %v2722
    %v2772 = vsel %vm278, %v2764, %v2723
    %v2773 = vsel %vm278, %v2765, %v2724
    %v2774 = vsel %vm278, %v2766, %v2725
    %v2775 = vsel %vm278, %v2767, %v2726
    %v2776 = vsel %vm278, %v2768, %v2727
    %v2777 = vsel %vm287, %v2769, %v2737
    %v2778 = vsel %vm287, %v2770, %v2738
    %v2779 = vsel %vm287, %v2771, %v2739
    %v2780 = vsel %vm287, %v2772, %v2740
    %v2781 = vsel %vm287, %v2773, %v2741
    %v2782 = vsel %vm287, %v2774, %v2742
    %v2783 = vsel %vm287, %v2775, %v2743
    %v2784 = vsel %vm287, %v2776, %v2744
    %v2785 = vld [vmem:[%s3] sm:$0xff]
    %v2786 = vld [vmem:[%s3 + $0x8] sm:$0xff]
    %v2787 = vld [vmem:[%s3 + $0x10] sm:$0xff]
    %v2788 = vld [vmem:[%s3 + $0x18] sm:$0xff]
    %v2789 = vld [vmem:[%s3 + $0x20] sm:$0xff]
    %v2790 = vld [vmem:[%s3 + $0x28] sm:$0xff]
    %v2791 = vld [vmem:[%s3 + $0x30] sm:$0xff]
    %v2792 = vld [vmem:[%s3 + $0x38] sm:$0xff]
    %v2793 = vld [vmem:[%s3 + $0x40] sm:$0xff]
    %v2794 = vld [vmem:[%s3 + $0x48] sm:$0xff]
    %v2795 = vld [vmem:[%s3 + $0x50] sm:$0xff]
    %v2796 = vld [vmem:[%s3 + $0x58] sm:$0xff]
    %v2797 = vld [vmem:[%s3 + $0x60] sm:$0xff]
    %v2798 = vld [vmem:[%s3 + $0x68] sm:$0xff]
    %v2799 = vld [vmem:[%s3 + $0x70] sm:$0xff]
    %v2800 = vld [vmem:[%s3 + $0x78] sm:$0xff]
    %v2801 = vld [vmem:[%s3 + $0x80] sm:$0xff]
    %v2802 = vld [vmem:[%s3 + $0x88] sm:$0xff]
    %v2803 = vld [vmem:[%s3 + $0x90] sm:$0xff]
    %v2804 = vld [vmem:[%s3 + $0x98] sm:$0xff]
    %v2805 = vld [vmem:[%s3 + $0xa0] sm:$0xff]
    %v2806 = vld [vmem:[%s3 + $0xa8] sm:$0xff]
    %v2807 = vld [vmem:[%s3 + $0xb0] sm:$0xff]
    %v2808 = vld [vmem:[%s3 + $0xb8] sm:$0xff]
    %v2809 = vld [vmem:[%s3 + $0xc0] sm:$0xff]
    %v2810 = vld [vmem:[%s3 + $0xc8] sm:$0xff]
    %v2811 = vld [vmem:[%s3 + $0xd0] sm:$0xff]
    %v2812 = vld [vmem:[%s3 + $0xd8] sm:$0xff]
    %v2813 = vld [vmem:[%s3 + $0xe0] sm:$0xff]
    %v2814 = vld [vmem:[%s3 + $0xe8] sm:$0xff]
    %v2815 = vld [vmem:[%s3 + $0xf0] sm:$0xff]
    %v2816 = vld [vmem:[%s3 + $0xf8] sm:$0xff]
    %v2817 = vld [vmem:[%s3 + $0x100] sm:$0xff]
    %v2818 = vld [vmem:[%s3 + $0x108] sm:$0xff]
    %v2819 = vld [vmem:[%s3 + $0x110] sm:$0xff]
    %v2820 = vld [vmem:[%s3 + $0x118] sm:$0xff]
    %v2821 = vld [vmem:[%s3 + $0x120] sm:$0xff]
    %v2822 = vld [vmem:[%s3 + $0x128] sm:$0xff]
    %v2823 = vld [vmem:[%s3 + $0x130] sm:$0xff]
    %v2824 = vld [vmem:[%s3 + $0x138] sm:$0xff]
    %v2825 = vld [vmem:[%s3 + $0x140] sm:$0xff]
    %v2826 = vld [vmem:[%s3 + $0x148] sm:$0xff]
    %v2827 = vld [vmem:[%s3 + $0x150] sm:$0xff]
    %v2828 = vld [vmem:[%s3 + $0x158] sm:$0xff]
    %v2829 = vld [vmem:[%s3 + $0x160] sm:$0xff]
    %v2830 = vld [vmem:[%s3 + $0x168] sm:$0xff]
    %v2831 = vld [vmem:[%s3 + $0x170] sm:$0xff]
    %v2832 = vld [vmem:[%s3 + $0x178] sm:$0xff]
    %v2833 = vld [vmem:[%s3 + $0x180] sm:$0xff]
    %v2834 = vld [vmem:[%s3 + $0x188] sm:$0xff]
    %v2835 = vld [vmem:[%s3 + $0x190] sm:$0xff]
    %v2836 = vld [vmem:[%s3 + $0x198] sm:$0xff]
    %v2837 = vld [vmem:[%s3 + $0x1a0] sm:$0xff]
    %v2838 = vld [vmem:[%s3 + $0x1a8] sm:$0xff]
    %v2839 = vld [vmem:[%s3 + $0x1b0] sm:$0xff]
    %v2840 = vld [vmem:[%s3 + $0x1b8] sm:$0xff]
    %v2841 = vld [vmem:[%s3 + $0x1c0] sm:$0xff]
    %v2842 = vld [vmem:[%s3 + $0x1c8] sm:$0xff]
    %v2843 = vld [vmem:[%s3 + $0x1d0] sm:$0xff]
    %v2844 = vld [vmem:[%s3 + $0x1d8] sm:$0xff]
    %v2845 = vld [vmem:[%s3 + $0x1e0] sm:$0xff]
    %v2846 = vld [vmem:[%s3 + $0x1e8] sm:$0xff]
    %v2847 = vld [vmem:[%s3 + $0x1f0] sm:$0xff]
    %v2848 = vld [vmem:[%s3 + $0x1f8] sm:$0xff]
    %v2849 = vld [vmem:[%s3 + $0x200] sm:$0xff]
    %v2850 = vld [vmem:[%s3 + $0x208] sm:$0xff]
    %v2851 = vld [vmem:[%s3 + $0x210] sm:$0xff]
    %v2852 = vld [vmem:[%s3 + $0x218] sm:$0xff]
    %v2853 = vld [vmem:[%s3 + $0x220] sm:$0xff]
    %v2854 = vld [vmem:[%s3 + $0x228] sm:$0xff]
    %v2855 = vld [vmem:[%s3 + $0x230] sm:$0xff]
    %v2856 = vld [vmem:[%s3 + $0x238] sm:$0xff]
    %v2857 = vld [vmem:[%s3 + $0x240] sm:$0xff]
    %v2858 = vld [vmem:[%s3 + $0x248] sm:$0xff]
    %v2859 = vld [vmem:[%s3 + $0x250] sm:$0xff]
    %v2860 = vld [vmem:[%s3 + $0x258] sm:$0xff]
    %v2861 = vld [vmem:[%s3 + $0x260] sm:$0xff]
    %v2862 = vld [vmem:[%s3 + $0x268] sm:$0xff]
    %v2863 = vld [vmem:[%s3 + $0x270] sm:$0xff]
    %v2864 = vld [vmem:[%s3 + $0x278] sm:$0xff]
    %v2865 = vld [vmem:[%s3 + $0x280] sm:$0xff]
    %v2866 = vld [vmem:[%s3 + $0x288] sm:$0xff]
    %v2867 = vld [vmem:[%s3 + $0x290] sm:$0xff]
    %v2868 = vld [vmem:[%s3 + $0x298] sm:$0xff]
    %v2869 = vld [vmem:[%s3 + $0x2a0] sm:$0xff]
    %v2870 = vld [vmem:[%s3 + $0x2a8] sm:$0xff]
    %v2871 = vld [vmem:[%s3 + $0x2b0] sm:$0xff]
    %v2872 = vld [vmem:[%s3 + $0x2b8] sm:$0xff]
    %v2873 = vld [vmem:[%s3 + $0x2c0] sm:$0xff]
    %v2874 = vld [vmem:[%s3 + $0x2c8] sm:$0xff]
    %v2875 = vld [vmem:[%s3 + $0x2d0] sm:$0xff]
    %v2876 = vld [vmem:[%s3 + $0x2d8] sm:$0xff]
    %v2877 = vld [vmem:[%s3 + $0x2e0] sm:$0xff]
    %v2878 = vld [vmem:[%s3 + $0x2e8] sm:$0xff]
    %v2879 = vld [vmem:[%s3 + $0x2f0] sm:$0xff]
    %v2880 = vld [vmem:[%s3 + $0x2f8] sm:$0xff]
    %v2881 = vld [vmem:[%s3 + $0x300] sm:$0xff]
    %v2882 = vld [vmem:[%s3 + $0x308] sm:$0xff]
    %v2883 = vld [vmem:[%s3 + $0x310] sm:$0xff]
    %v2884 = vld [vmem:[%s3 + $0x318] sm:$0xff]
    %v2885 = vld [vmem:[%s3 + $0x320] sm:$0xff]
    %v2886 = vld [vmem:[%s3 + $0x328] sm:$0xff]
    %v2887 = vld [vmem:[%s3 + $0x330] sm:$0xff]
    %v2888 = vld [vmem:[%s3 + $0x338] sm:$0xff]
    %v2889 = vld [vmem:[%s3 + $0x340] sm:$0xff]
    %v2890 = vld [vmem:[%s3 + $0x348] sm:$0xff]
    %v2891 = vld [vmem:[%s3 + $0x350] sm:$0xff]
    %v2892 = vld [vmem:[%s3 + $0x358] sm:$0xff]
    %v2893 = vld [vmem:[%s3 + $0x360] sm:$0xff]
    %v2894 = vld [vmem:[%s3 + $0x368] sm:$0xff]
    %v2895 = vld [vmem:[%s3 + $0x370] sm:$0xff]
    %v2896 = vld [vmem:[%s3 + $0x378] sm:$0xff]
    %v2897 = vld [vmem:[%s3 + $0x380] sm:$0xff]
    %v2898 = vld [vmem:[%s3 + $0x388] sm:$0xff]
    %v2899 = vld [vmem:[%s3 + $0x390] sm:$0xff]
    %v2900 = vld [vmem:[%s3 + $0x398] sm:$0xff]
    %v2901 = vld [vmem:[%s3 + $0x3a0] sm:$0xff]
    %v2902 = vld [vmem:[%s3 + $0x3a8] sm:$0xff]
    %v2903 = vld [vmem:[%s3 + $0x3b0] sm:$0xff]
    %v2904 = vld [vmem:[%s3 + $0x3b8] sm:$0xff]
    %v2905 = vld [vmem:[%s3 + $0x3c0] sm:$0xff]
    %v2906 = vld [vmem:[%s3 + $0x3c8] sm:$0xff]
    %v2907 = vld [vmem:[%s3 + $0x3d0] sm:$0xff]
    %v2908 = vld [vmem:[%s3 + $0x3d8] sm:$0xff]
    %v2909 = vld [vmem:[%s3 + $0x3e0] sm:$0xff]
    %v2910 = vld [vmem:[%s3 + $0x3e8] sm:$0xff]
    %v2911 = vld [vmem:[%s3 + $0x3f0] sm:$0xff]
    %v2912 = vld [vmem:[%s3 + $0x3f8] sm:$0xff]
    %2913 = vmatpush.msra.mxu0 %v2800
    %2914 = vmatpush.msra.mxu0 %v2799
    %2915 = vmatpush.msra.mxu0 %v2798
    %2916 = vmatpush.msra.mxu0 %v2797
    %2917 = vmatpush.msra.mxu0 %v2796
    %2918 = vmatpush.msra.mxu0 %v2795
    %2919 = vmatpush.msra.mxu0 %v2794
    %2920 = vmatpush.msra.mxu0 %v2793
    %2921 = vmatpush.msra.mxu0 %v2792
    %2922 = vmatpush.msra.mxu0 %v2791
    %2923 = vmatpush.msra.mxu0 %v2790
    %2924 = vmatpush.msra.mxu0 %v2789
    %2925 = vmatpush.msra.mxu0 %v2788
    %2926 = vmatpush.msra.mxu0 %v2787
    %2927 = vmatpush.msra.mxu0 %v2786
    %2928 = vmatpush.msra.mxu0 %v2785
    %2929 = vmatmul.f32.gmra.mxu0 %v2777
    %v2930 = vpop.f32.mrf.mxu0
    %v2931 = vadd.f32 0.0, %v2930
    %2932 = vdwg.mxu0
    %2933 = vmatpush.msra.mxu0 %v2816
    %2934 = vmatpush.msra.mxu0 %v2815
    %2935 = vmatpush.msra.mxu0 %v2814
    %2936 = vmatpush.msra.mxu0 %v2813
    %2937 = vmatpush.msra.mxu0 %v2812
    %2938 = vmatpush.msra.mxu0 %v2811
    %2939 = vmatpush.msra.mxu0 %v2810
    %2940 = vmatpush.msra.mxu0 %v2809
    %2941 = vmatpush.msra.mxu0 %v2808
    %2942 = vmatpush.msra.mxu0 %v2807
    %2943 = vmatpush.msra.mxu0 %v2806
    %2944 = vmatpush.msra.mxu0 %v2805
    %2945 = vmatpush.msra.mxu0 %v2804
    %2946 = vmatpush.msra.mxu0 %v2803
    %2947 = vmatpush.msra.mxu0 %v2802
    %2948 = vmatpush.msra.mxu0 %v2801
    %2949 = vmatmul.f32.gmra.mxu0 %v2778
    %v2950 = vpop.f32.mrf.mxu0
    %v2951 = vadd.f32 %v2931, %v2950
    %2952 = vdwg.mxu0
    %2953 = vmatpush.msra.mxu0 %v2832
    %2954 = vmatpush.msra.mxu0 %v2831
    %2955 = vmatpush.msra.mxu0 %v2830
    %2956 = vmatpush.msra.mxu0 %v2829
    %2957 = vmatpush.msra.mxu0 %v2828
    %2958 = vmatpush.msra.mxu0 %v2827
    %2959 = vmatpush.msra.mxu0 %v2826
    %2960 = vmatpush.msra.mxu0 %v2825
    %2961 = vmatpush.msra.mxu0 %v2824
    %2962 = vmatpush.msra.mxu0 %v2823
    %2963 = vmatpush.msra.mxu0 %v2822
    %2964 = vmatpush.msra.mxu0 %v2821
    %2965 = vmatpush.msra.mxu0 %v2820
    %2966 = vmatpush.msra.mxu0 %v2819
    %2967 = vmatpush.msra.mxu0 %v2818
    %2968 = vmatpush.msra.mxu0 %v2817
    %2969 = vmatmul.f32.gmra.mxu0 %v2779
    %v2970 = vpop.f32.mrf.mxu0
    %v2971 = vadd.f32 %v2951, %v2970
    %2972 = vdwg.mxu0
    %2973 = vmatpush.msra.mxu0 %v2848
    %2974 = vmatpush.msra.mxu0 %v2847
    %2975 = vmatpush.msra.mxu0 %v2846
    %2976 = vmatpush.msra.mxu0 %v2845
    %2977 = vmatpush.msra.mxu0 %v2844
    %2978 = vmatpush.msra.mxu0 %v2843
    %2979 = vmatpush.msra.mxu0 %v2842
    %2980 = vmatpush.msra.mxu0 %v2841
    %2981 = vmatpush.msra.mxu0 %v2840
    %2982 = vmatpush.msra.mxu0 %v2839
    %2983 = vmatpush.msra.mxu0 %v2838
    %2984 = vmatpush.msra.mxu0 %v2837
    %2985 = vmatpush.msra.mxu0 %v2836
    %2986 = vmatpush.msra.mxu0 %v2835
    %2987 = vmatpush.msra.mxu0 %v2834
    %2988 = vmatpush.msra.mxu0 %v2833
    %2989 = vmatmul.f32.gmra.mxu0 %v2780
    %v2990 = vpop.f32.mrf.mxu0
    %v2991 = vadd.f32 %v2971, %v2990
    %2992 = vdwg.mxu0
    %2993 = vmatpush.msra.mxu0 %v2864
    %2994 = vmatpush.msra.mxu0 %v2863
    %2995 = vmatpush.msra.mxu0 %v2862
    %2996 = vmatpush.msra.mxu0 %v2861
    %2997 = vmatpush.msra.mxu0 %v2860
    %2998 = vmatpush.msra.mxu0 %v2859
    %2999 = vmatpush.msra.mxu0 %v2858
    %3000 = vmatpush.msra.mxu0 %v2857
    %3001 = vmatpush.msra.mxu0 %v2856
    %3002 = vmatpush.msra.mxu0 %v2855
    %3003 = vmatpush.msra.mxu0 %v2854
    %3004 = vmatpush.msra.mxu0 %v2853
    %3005 = vmatpush.msra.mxu0 %v2852
    %3006 = vmatpush.msra.mxu0 %v2851
    %3007 = vmatpush.msra.mxu0 %v2850
    %3008 = vmatpush.msra.mxu0 %v2849
    %3009 = vmatmul.f32.gmra.mxu0 %v2781
    %v3010 = vpop.f32.mrf.mxu0
    %v3011 = vadd.f32 %v2991, %v3010
    %3012 = vdwg.mxu0
    %3013 = vmatpush.msra.mxu0 %v2880
    %3014 = vmatpush.msra.mxu0 %v2879
    %3015 = vmatpush.msra.mxu0 %v2878
    %3016 = vmatpush.msra.mxu0 %v2877
    %3017 = vmatpush.msra.mxu0 %v2876
    %3018 = vmatpush.msra.mxu0 %v2875
    %3019 = vmatpush.msra.mxu0 %v2874
    %3020 = vmatpush.msra.mxu0 %v2873
    %3021 = vmatpush.msra.mxu0 %v2872
    %3022 = vmatpush.msra.mxu0 %v2871
    %3023 = vmatpush.msra.mxu0 %v2870
    %3024 = vmatpush.msra.mxu0 %v2869
    %3025 = vmatpush.msra.mxu0 %v2868
    %3026 = vmatpush.msra.mxu0 %v2867
    %3027 = vmatpush.msra.mxu0 %v2866
    %3028 = vmatpush.msra.mxu0 %v2865
    %3029 = vmatmul.f32.gmra.mxu0 %v2782
    %v3030 = vpop.f32.mrf.mxu0
    %v3031 = vadd.f32 %v3011, %v3030
    %3032 = vdwg.mxu0
    %3033 = vmatpush.msra.mxu0 %v2896
    %3034 = vmatpush.msra.mxu0 %v2895
    %3035 = vmatpush.msra.mxu0 %v2894
    %3036 = vmatpush.msra.mxu0 %v2893
    %3037 = vmatpush.msra.mxu0 %v2892
    %3038 = vmatpush.msra.mxu0 %v2891
    %3039 = vmatpush.msra.mxu0 %v2890
    %3040 = vmatpush.msra.mxu0 %v2889
    %3041 = vmatpush.msra.mxu0 %v2888
    %3042 = vmatpush.msra.mxu0 %v2887
    %3043 = vmatpush.msra.mxu0 %v2886
    %3044 = vmatpush.msra.mxu0 %v2885
    %3045 = vmatpush.msra.mxu0 %v2884
    %3046 = vmatpush.msra.mxu0 %v2883
    %3047 = vmatpush.msra.mxu0 %v2882
    %3048 = vmatpush.msra.mxu0 %v2881
    %3049 = vmatmul.f32.gmra.mxu0 %v2783
    %v3050 = vpop.f32.mrf.mxu0
    %v3051 = vadd.f32 %v3031, %v3050
    %3052 = vdwg.mxu0
    %3053 = vmatpush.msra.mxu0 %v2912
    %3054 = vmatpush.msra.mxu0 %v2911
    %3055 = vmatpush.msra.mxu0 %v2910
    %3056 = vmatpush.msra.mxu0 %v2909
    %3057 = vmatpush.msra.mxu0 %v2908
    %3058 = vmatpush.msra.mxu0 %v2907
    %3059 = vmatpush.msra.mxu0 %v2906
    %3060 = vmatpush.msra.mxu0 %v2905
    %3061 = vmatpush.msra.mxu0 %v2904
    %3062 = vmatpush.msra.mxu0 %v2903
    %3063 = vmatpush.msra.mxu0 %v2902
    %3064 = vmatpush.msra.mxu0 %v2901
    %3065 = vmatpush.msra.mxu0 %v2900
    %3066 = vmatpush.msra.mxu0 %v2899
    %3067 = vmatpush.msra.mxu0 %v2898
    %3068 = vmatpush.msra.mxu0 %v2897
    %3069 = vmatmul.f32.gmra.mxu0 %v2784
    %v3070 = vpop.f32.mrf.mxu0
    %v3071 = vadd.f32 %v3051, %v3070
    %3072 = vdwg.mxu0
    %v3073 = vmax.f32 %v3071, 0.0
    %v3074 = vmin.f32 %v3073, 15.0
    %v3075 = vsub.f32 0.0, %v3074
    %v3076 = vrcp.pop 15.0
    %v3077 = vmul.f32 15.0, %v3076
    %v3078 = vsub.f32 1.0, %v3077
    %v3079 = vmul.f32 %v3076, %v3078
    %v3080 = vadd.f32 %v3076, %v3079
    %vm3081 = vweird.f32 %v3076
    %v3082 = vsel %vm3081, %v3076, %v3080
    %v3083 = vmul.f32 %v3075, %v3082
    %v3084 = vmin.f32 %v3073, 4.0
    %v3085 = vrcp.pop 4.0
    %v3086 = vmul.f32 4.0, %v3085
    %v3087 = vsub.f32 1.0, %v3086
    %v3088 = vmul.f32 %v3085, %v3087
    %v3089 = vadd.f32 %v3085, %v3088
    %vm3090 = vweird.f32 %v3085
    %v3091 = vsel %vm3090, %v3085, %v3089
    %v3092 = vmul.f32 %v3084, %v3091
    %v3093 = vmin.f32 %v3073, 6.0
    %v3094 = vrcp.pop 6.0
    %v3095 = vmul.f32 6.0, %v3094
    %v3096 = vsub.f32 1.0, %v3095
    %v3097 = vmul.f32 %v3094, %v3096
    %v3098 = vadd.f32 %v3094, %v3097
    %vm3099 = vweird.f32 %v3094
    %v3100 = vsel %vm3099, %v3094, %v3098
    %v3101 = vmul.f32 %v3093, %v3100
    %v3102 = vmin.f32 %v3073, 5.0
    %v3103 = vrcp.pop 5.0
    %v3104 = vmul.f32 5.0, %v3103
    %v3105 = vsub.f32 1.0, %v3104
    %v3106 = vmul.f32 %v3103, %v3105
    %v3107 = vadd.f32 %v3103, %v3106
    %vm3108 = vweird.f32 %v3103
    %v3109 = vsel %vm3108, %v3103, %v3107
    %v3110 = vmul.f32 %v3102, %v3109
    %v3111 = vmul.f32 %v3071, 128.0
    %v3112 = vld [vmem:[%s5] sm:$0xff]
    %v3113 = vmul.f32 %v3083, %v3112
    %v3114 = vmul.f32 %v3092, %v3112
    %v3116 = vrot.slane %v3114, 1
    %v3118 = vadd.f32 %v3113, %v3116
    %v3119 = vmul.f32 %v3101, %v3112
    %v3121 = vrot.slane %v3119, 2
    %v3123 = vadd.f32 %v3118, %v3121
    %v3124 = vmul.f32 %v3110, %v3112
    %v3126 = vrot.slane %v3124, 3
    %v3128 = vadd.f32 %v3123, %v3126
    %v3130 = vrot.slane %v3112, 4
    %v3132 = vmul.f32 %v2655, %v3130
    %vm3133 = vcmask 44032
    %v3134 = vsel %vm3133, %v3132, 0.0
    %v3135 = vrot.slane %v3134, 4
    %v3136 = vadd.f32 %v3134, %v3135
    %v3137 = vrot.slane %v3136, 2
    %v3138 = vadd.f32 %v3136, %v3137
    %v3139 = vrot.slane %v3138, 1
    %v3140 = vadd.f32 %v3138, %v3139
    %v3141 = vadd.f32 %v3128, %v3140
    %v3142 = vsub.f32 0.0, %v3141
    %v3143 = vmul.f32 %v3111, 10.0
    %v3145 = vrot.slane %v3143, 4
    %v3147 = vsub.f32 %v3142, %v3145
    %vm3148 = vcmask 40960
    %3149 = vst.msk [vmem:[#allocation2] sm:$0x1] %vm3148, %v3147
    // Predicated region
    $region58: #{tpu_custom_call.1} parent=1 // pred_check
      _
    $region59: #{tpu_custom_call.1} parent=1 // pred_check_branch
      %3151 = sbr.rel (0) target = $region61
    $region60: #{tpu_custom_call.1} parent=1 // pred_region
      %3153 = vsyncadd [#allocation3], 0
      %s3155 = sshll.u32 [#allocation2], 4
      %s3156 = int_to_ptr.vmem [resolvable:$true] %s3155
      %s3157 = sshll.u32 %s14, 4
      %s3158 = int_to_ptr.hbm [resolvable:$true] %s3157
      %3160 = dma.vmem_to_hbm [thread:$0]  %s3156, 16, %s3158, [#allocation3]
    $region61: #{tpu_custom_call.1} parent=1 // pred_fallthru
      _
    // Predicated region
    $region62: #{tpu_custom_call.1} parent=1 // pred_check
      _
    $region63: #{tpu_custom_call.1} parent=1 // pred_check_branch
      %3162 = sbr.rel (0) target = $region65
    $region64: #{tpu_custom_call.1} parent=1 // pred_region
      %3164 = dma.done [#allocation3], 16
    $region65: #{tpu_custom_call.1} parent=1 // pred_fallthru
      _
    %3165 = vsyncpa [#allocation3], 1

</llo_original>
